<compile_context>
chip_gen: v7x
topology: tpu7x:2x2x1
jax: 0.10.0
libtpu: 0.0.40
codegen_flags: <defaults>
</compile_context>

<pallas_src>
import functools

import jax
import jax.numpy as jnp
from jax.experimental import pallas as pl
from jax.experimental.pallas import tpu as pltpu


LN_EPS = 1e-12
_VMEM_LIMIT = 32 * 1024 * 1024  # explicit scoped-VMEM budget (safe on v5e/v6e/v7x)


def _cparams(dims):
    return pltpu.CompilerParams(dimension_semantics=dims,
                                vmem_limit_bytes=_VMEM_LIMIT)


def _tile(dim, pref, align):
    """Largest legal block size <= pref for an axis of length `dim`.

    Returns the full dim when it already fits (always legal), otherwise the
    largest `align`-multiple divisor of `dim` that is <= pref.
    """
    if dim <= pref:
        return dim
    t = (pref // align) * align
    while t >= align:
        if dim % t == 0:
            return t
        t -= align
    return dim


# --------------------------- generic tiled dense ---------------------------

def _dense_kernel(x_ref, w_ref, b_ref, o_ref, acc_ref, *, activation, trans_w):
    @pl.when(pl.program_id(2) == 0)
    def _():
        acc_ref[...] = jnp.zeros_like(acc_ref)

    x = x_ref[...].astype(jnp.bfloat16)
    w = w_ref[...]  # already bf16
    if trans_w:
        # contract x[tm,tk] with w[tn,tk] over the last dim of both (no .T copy)
        acc_ref[...] += jax.lax.dot_general(
            x, w, (((1,), (1,)), ((), ())), preferred_element_type=jnp.float32)
    else:
        acc_ref[...] += jnp.dot(x, w, preferred_element_type=jnp.float32)

    @pl.when(pl.program_id(2) == pl.num_programs(2) - 1)
    def _():
        y = acc_ref[...] + b_ref[...]
        if activation == "gelu":
            y = jax.nn.gelu(y, approximate=True)
        o_ref[...] = y.astype(o_ref.dtype)


def dense(x, w, b2d, activation=None, trans_w=False, tm=256, tn=256, tk=512):
    """y = act(x @ w + b)      (trans_w=True: y = act(x @ w.T + b), w is [N,K])."""
    M, K = x.shape
    N = w.shape[0] if trans_w else w.shape[1]
    tm = _tile(M, tm, 8)
    tn = _tile(N, tn, 128)
    tk = _tile(K, tk, 128)
    grid = (M // tm, N // tn, K // tk)
    if trans_w:
        w_spec = pl.BlockSpec((tn, tk), lambda i, j, k: (j, k))
    else:
        w_spec = pl.BlockSpec((tk, tn), lambda i, j, k: (k, j))
    kernel = functools.partial(_dense_kernel, activation=activation, trans_w=trans_w)
    return pl.pallas_call(
        kernel,
        out_shape=jax.ShapeDtypeStruct((M, N), jnp.float32),
        grid=grid,
        in_specs=[pl.BlockSpec((tm, tk), lambda i, j, k: (i, k)),
                  w_spec,
                  pl.BlockSpec((1, tn), lambda i, j, k: (0, j))],
        out_specs=pl.BlockSpec((tm, tn), lambda i, j, k: (i, j)),
        scratch_shapes=[pltpu.VMEM((tm, tn), jnp.float32)],
        compiler_params=_cparams(("parallel", "parallel", "arbitrary")),
    )(x, w, b2d)


# ------------------------------ layer norm ---------------------------------

def _ln_kernel(x_ref, g_ref, b_ref, o_ref, *, eps):
    x = x_ref[...]
    mu = jnp.mean(x, axis=-1, keepdims=True)
    var = jnp.mean(jnp.square(x - mu), axis=-1, keepdims=True)
    inv = jax.lax.rsqrt(var + eps)
    o_ref[...] = (x - mu) * inv * g_ref[...] + b_ref[...]


def layernorm(x, gamma2d, beta2d, eps=LN_EPS):
    M, H = x.shape
    tm = _tile(M, 512, 8)
    return pl.pallas_call(
        functools.partial(_ln_kernel, eps=eps),
        out_shape=jax.ShapeDtypeStruct((M, H), jnp.float32),
        grid=(M // tm,),
        in_specs=[pl.BlockSpec((tm, H), lambda i: (i, 0)),
                  pl.BlockSpec((1, H), lambda i: (0, 0)),
                  pl.BlockSpec((1, H), lambda i: (0, 0))],
        out_specs=pl.BlockSpec((tm, H), lambda i: (i, 0)),
        compiler_params=_cparams(("parallel",)),
    )(x, gamma2d, beta2d)


# -------------------- fused QKV projection (head split) --------------------

def _qkv_kernel(x_ref, w_ref, b_ref, o_ref):
    x = x_ref[0].astype(jnp.bfloat16)                       # (S, H)
    y = jnp.dot(x, w_ref[0, 0], preferred_element_type=jnp.float32)  # (S, dH)
    o_ref[0, 0, 0] = y + b_ref[0, 0]


def qkv_projection(x_bsh, w_qkv, b_qkv):
    """x:[B,S,H] f32, w_qkv:[3,nH,H,dH] bf16, b_qkv:[3,nH,1,dH] -> [3,B,nH,S,dH]."""
    B, S, H = x_bsh.shape
    _, nH, _, dH = w_qkv.shape
    return pl.pallas_call(
        _qkv_kernel,
        out_shape=jax.ShapeDtypeStruct((3, B, nH, S, dH), jnp.float32),
        grid=(B, 3, nH),
        in_specs=[pl.BlockSpec((1, S, H), lambda b, t, h: (b, 0, 0)),
                  pl.BlockSpec((1, 1, H, dH), lambda b, t, h: (t, h, 0, 0)),
                  pl.BlockSpec((1, 1, 1, dH), lambda b, t, h: (t, h, 0, 0))],
        out_specs=pl.BlockSpec((1, 1, 1, S, dH), lambda b, t, h: (t, b, h, 0, 0)),
        compiler_params=_cparams(("parallel", "parallel", "parallel")),
    )(x_bsh, w_qkv, b_qkv)


# -------------------- flash attention (online softmax) ---------------------

def _flash_kernel(q_ref, k_ref, v_ref, m_ref, o_ref, m_scr, l_scr, acc_scr, *, scale):
    ki = pl.program_id(3)

    @pl.when(ki == 0)
    def _():
        m_scr[...] = jnp.full_like(m_scr, -1e30)
        l_scr[...] = jnp.zeros_like(l_scr)
        acc_scr[...] = jnp.zeros_like(acc_scr)

    q = q_ref[0, 0, 0].astype(jnp.bfloat16)                  # (tq, dH)
    k = k_ref[0, 0, 0].astype(jnp.bfloat16)                  # (tk, dH)
    v = v_ref[0, 0, 0].astype(jnp.bfloat16)                  # (tk, dH)

    s = jax.lax.dot_general(q, k, (((1,), (1,)), ((), ())),
                            preferred_element_type=jnp.float32) * scale
    s = s + m_ref[0]                                         # additive mask (1, tk)

    m_prev = m_scr[...]
    m_new = jnp.maximum(m_prev, jnp.max(s, axis=-1, keepdims=True))
    alpha = jnp.exp(m_prev - m_new)
    p = jnp.exp(s - m_new)
    l_scr[...] = alpha * l_scr[...] + jnp.sum(p, axis=-1, keepdims=True)
    acc_scr[...] = alpha * acc_scr[...] + jnp.dot(
        p.astype(jnp.bfloat16), v, preferred_element_type=jnp.float32)
    m_scr[...] = m_new

    @pl.when(ki == pl.num_programs(3) - 1)
    def _():
        o_ref[0, 0] = acc_scr[...] * pl.reciprocal(l_scr[...], approx=True)


def flash_attention(qkv, mask_b1s, scale):
    """qkv:[3,B,nH,S,dH], mask:[B,1,S] -> ctx:[B,nH,S,dH]."""
    _, B, nH, S, dH = qkv.shape
    tq = _tile(S, 256, 8)
    tk = _tile(S, 512, 128)
    grid = (B, nH, S // tq, S // tk)
    q_spec = pl.BlockSpec((1, 1, 1, tq, dH), lambda b, h, qi, ki: (0, b, h, qi, 0))
    k_spec = pl.BlockSpec((1, 1, 1, tk, dH), lambda b, h, qi, ki: (1, b, h, ki, 0))
    v_spec = pl.BlockSpec((1, 1, 1, tk, dH), lambda b, h, qi, ki: (2, b, h, ki, 0))
    m_spec = pl.BlockSpec((1, 1, tk), lambda b, h, qi, ki: (b, 0, ki))
    return pl.pallas_call(
        functools.partial(_flash_kernel, scale=scale),
        out_shape=jax.ShapeDtypeStruct((B, nH, S, dH), jnp.float32),
        grid=grid,
        in_specs=[q_spec, k_spec, v_spec, m_spec],
        out_specs=pl.BlockSpec((1, 1, tq, dH), lambda b, h, qi, ki: (b, h, qi, 0)),
        scratch_shapes=[pltpu.VMEM((tq, 1), jnp.float32),
                        pltpu.VMEM((tq, 1), jnp.float32),
                        pltpu.VMEM((tq, dH), jnp.float32)],
        compiler_params=_cparams(("parallel", "parallel", "parallel", "arbitrary")),
    )(qkv, qkv, qkv, mask_b1s)


# ---------- attention output projection + residual + LayerNorm -------------

def _attn_out_ln_kernel(ctx_ref, wo_ref, bo_ref, res_ref, g_ref, bt_ref,
                        o_ref, acc_ref, *, eps):
    h = pl.program_id(1)

    @pl.when(h == 0)
    def _():
        acc_ref[...] = jnp.zeros_like(acc_ref)

    # head reduction: sum_h ctx[b,h] @ wo[h]  ==  merge_heads(ctx) @ wo
    acc_ref[...] += jnp.dot(ctx_ref[0, 0].astype(jnp.bfloat16), wo_ref[0],
                            preferred_element_type=jnp.float32)

    @pl.when(h == pl.num_programs(1) - 1)
    def _():
        y = acc_ref[...] + bo_ref[...] + res_ref[0]
        mu = jnp.mean(y, axis=-1, keepdims=True)
        var = jnp.mean(jnp.square(y - mu), axis=-1, keepdims=True)
        inv = jax.lax.rsqrt(var + eps)
        o_ref[0] = (y - mu) * inv * g_ref[...] + bt_ref[...]


def attn_output_layernorm(ctx, wo_h, bo2d, residual_bsh, gamma2d, beta2d, eps=LN_EPS):
    B, nH, S, dH = ctx.shape
    H = wo_h.shape[-1]
    return pl.pallas_call(
        functools.partial(_attn_out_ln_kernel, eps=eps),
        out_shape=jax.ShapeDtypeStruct((B, S, H), jnp.float32),
        grid=(B, nH),
        in_specs=[pl.BlockSpec((1, 1, S, dH), lambda b, h: (b, h, 0, 0)),
                  pl.BlockSpec((1, dH, H), lambda b, h: (h, 0, 0)),
                  pl.BlockSpec((1, H), lambda b, h: (0, 0)),
                  pl.BlockSpec((1, S, H), lambda b, h: (b, 0, 0)),
                  pl.BlockSpec((1, H), lambda b, h: (0, 0)),
                  pl.BlockSpec((1, H), lambda b, h: (0, 0))],
        out_specs=pl.BlockSpec((1, S, H), lambda b, h: (b, 0, 0)),
        scratch_shapes=[pltpu.VMEM((S, H), jnp.float32)],
        compiler_params=_cparams(("parallel", "arbitrary")),
    )(ctx, wo_h, bo2d, residual_bsh, gamma2d, beta2d)


# --------------------- fused FFN + residual + LayerNorm ---------------------

def _ffn_ln_kernel(x_ref, w1_ref, b1_ref, w2_ref, b2_ref, g_ref, bt_ref, o_ref, *, eps):
    x = x_ref[...]
    h = jnp.dot(x.astype(jnp.bfloat16), w1_ref[...],
                preferred_element_type=jnp.float32) + b1_ref[...]
    h = jax.nn.gelu(h, approximate=True)
    y = jnp.dot(h.astype(jnp.bfloat16), w2_ref[...],
                preferred_element_type=jnp.float32) + b2_ref[...]
    y = y + x                                             # residual
    mu = jnp.mean(y, axis=-1, keepdims=True)
    var = jnp.mean(jnp.square(y - mu), axis=-1, keepdims=True)
    inv = jax.lax.rsqrt(var + eps)
    o_ref[...] = (y - mu) * inv * g_ref[...] + bt_ref[...]


def ffn_layernorm(x, w1, b1_2d, w2, b2_2d, gamma2d, beta2d, eps=LN_EPS):
    M, H = x.shape
    I = w1.shape[1]
    tm = _tile(M, 256, 8)
    return pl.pallas_call(
        functools.partial(_ffn_ln_kernel, eps=eps),
        out_shape=jax.ShapeDtypeStruct((M, H), jnp.float32),
        grid=(M // tm,),
        in_specs=[pl.BlockSpec((tm, H), lambda i: (i, 0)),
                  pl.BlockSpec((H, I), lambda i: (0, 0)),
                  pl.BlockSpec((1, I), lambda i: (0, 0)),
                  pl.BlockSpec((I, H), lambda i: (0, 0)),
                  pl.BlockSpec((1, H), lambda i: (0, 0)),
                  pl.BlockSpec((1, H), lambda i: (0, 0)),
                  pl.BlockSpec((1, H), lambda i: (0, 0))],
        out_specs=pl.BlockSpec((tm, H), lambda i: (i, 0)),
        compiler_params=_cparams(("parallel",)),
    )(x, w1, b1_2d, w2, b2_2d, gamma2d, beta2d)


# ---------------------------- tiled MLM loss --------------------------------

def _mlm_loss_kernel(logits_ref, labels_ref, loss_ref, s_loss, s_cnt):
    i = pl.program_id(0)

    @pl.when(i == 0)
    def _():
        s_loss[...] = jnp.zeros_like(s_loss)
        s_cnt[...] = jnp.zeros_like(s_cnt)

    logits = logits_ref[...]                              # [tm, V]
    labels = labels_ref[...]                              # [tm, 1]
    m = jnp.max(logits, axis=-1, keepdims=True)
    lse = jnp.log(jnp.sum(jnp.exp(logits - m), axis=-1, keepdims=True)) + m
    iota = jax.lax.broadcasted_iota(jnp.int32, logits.shape, 1)
    picked = jnp.sum(jnp.where(iota == labels, logits, 0.0), axis=-1, keepdims=True)
    valid = (labels >= 0).astype(jnp.float32)             # ignore_index = -100
    s_loss[...] += jnp.sum((lse - picked) * valid)
    s_cnt[...] += jnp.sum(valid)

    @pl.when(i == pl.num_programs(0) - 1)
    def _():
        loss_ref[...] = s_loss[...] / jnp.maximum(s_cnt[...], 1.0)


def mlm_loss(logits, labels):
    M, V = logits.shape
    tm = _tile(M, 128, 8)
    out = pl.pallas_call(
        _mlm_loss_kernel,
        out_shape=jax.ShapeDtypeStruct((1, 1), jnp.float32),
        grid=(M // tm,),
        in_specs=[pl.BlockSpec((tm, V), lambda i: (i, 0)),
                  pl.BlockSpec((tm, 1), lambda i: (i, 0))],
        out_specs=pl.BlockSpec((1, 1), lambda i: (0, 0)),
        scratch_shapes=[pltpu.VMEM((1, 1), jnp.float32),
                        pltpu.VMEM((1, 1), jnp.float32)],
        compiler_params=_cparams(("arbitrary",)),
    )(logits, labels.reshape(M, 1).astype(jnp.int32))
    return out[0, 0]


# ------------------------- synthetic BERT-MLM model ------------------------

def init_params(key, cfg):
    ks = iter(jax.random.split(key, 16 + cfg["layers"] * 20))

    def nrm(*shape):
        return jax.random.normal(next(ks), shape, jnp.float32) * 0.02

    H, I, V = cfg["hidden"], cfg["inter"], cfg["vocab"]
    p = {
        "word_emb": nrm(V, H),
        "pos_emb": nrm(cfg["max_pos"], H),
        "type_emb": nrm(2, H),
        "emb_ln_g": jnp.ones((H,), jnp.float32),
        "emb_ln_b": jnp.zeros((H,), jnp.float32),
        "layers": [],
        "mlm_dense_w": nrm(H, H),
        "mlm_dense_b": jnp.zeros((H,), jnp.float32),
        "mlm_ln_g": jnp.ones((H,), jnp.float32),
        "mlm_ln_b": jnp.zeros((H,), jnp.float32),
        "mlm_bias": jnp.zeros((V,), jnp.float32),
    }
    for _ in range(cfg["layers"]):
        p["layers"].append({
            "wq": nrm(H, H), "bq": jnp.zeros((H,), jnp.float32),
            "wk": nrm(H, H), "bk": jnp.zeros((H,), jnp.float32),
            "wv": nrm(H, H), "bv": jnp.zeros((H,), jnp.float32),
            "wo": nrm(H, H), "bo": jnp.zeros((H,), jnp.float32),
            "ln1_g": jnp.ones((H,), jnp.float32), "ln1_b": jnp.zeros((H,), jnp.float32),
            "w1": nrm(H, I), "b1": jnp.zeros((I,), jnp.float32),
            "w2": nrm(I, H), "b2": jnp.zeros((H,), jnp.float32),
            "ln2_g": jnp.ones((H,), jnp.float32), "ln2_b": jnp.zeros((H,), jnp.float32),
        })
    return p


def prepare_params(p, cfg):
    """One-time layout prep: bf16 matmul weights, head-split QKV/O weights, 2-D biases."""
    H, I, nH = cfg["hidden"], cfg["inter"], cfg["heads"]
    dH = H // nH

    def head_w(w):          # [H, H] -> [nH, H, dH]   (column blocks per head)
        return w.reshape(H, nH, dH).transpose(1, 0, 2)

    def head_b(b):          # [H] -> [nH, 1, dH]
        return b.reshape(nH, 1, dH)

    out = {
        "word_emb": p["word_emb"],                              # f32 gather table
        "word_emb_bf16": p["word_emb"].astype(jnp.bfloat16),    # tied decoder (no .T)
        "pos_emb": p["pos_emb"],
        "type_emb": p["type_emb"],
        "emb_ln_g": p["emb_ln_g"].reshape(1, H),
        "emb_ln_b": p["emb_ln_b"].reshape(1, H),
        "mlm_dense_w": p["mlm_dense_w"].astype(jnp.bfloat16),
        "mlm_dense_b": p["mlm_dense_b"].reshape(1, H),
        "mlm_ln_g": p["mlm_ln_g"].reshape(1, H),
        "mlm_ln_b": p["mlm_ln_b"].reshape(1, H),
        "mlm_bias": p["mlm_bias"].reshape(1, -1),
        "layers": [],
    }
    for lyr in p["layers"]:
        out["layers"].append({
            "w_qkv": jnp.stack([head_w(lyr["wq"]), head_w(lyr["wk"]),
                                head_w(lyr["wv"])], axis=0).astype(jnp.bfloat16),
            "b_qkv": jnp.stack([head_b(lyr["bq"]), head_b(lyr["bk"]),
                                head_b(lyr["bv"])], axis=0),
            "wo_h": lyr["wo"].reshape(nH, dH, H).astype(jnp.bfloat16),
            "bo": lyr["bo"].reshape(1, H),
            "ln1_g": lyr["ln1_g"].reshape(1, H), "ln1_b": lyr["ln1_b"].reshape(1, H),
            "w1": lyr["w1"].astype(jnp.bfloat16), "b1": lyr["b1"].reshape(1, I),
            "w2": lyr["w2"].astype(jnp.bfloat16), "b2": lyr["b2"].reshape(1, H),
            "ln2_g": lyr["ln2_g"].reshape(1, H), "ln2_b": lyr["ln2_b"].reshape(1, H),
        })
    return out


def bert_mlm_forward(params, cfg, input_ids, attention_mask, labels):
    B, S = input_ids.shape
    H, nH, V = cfg["hidden"], cfg["heads"], cfg["vocab"]
    dH = H // nH
    M = B * S
    scale = 1.0 / (dH ** 0.5)

    # ---- embeddings (table gathers are plain-JAX glue) ----
    x = jnp.take(params["word_emb"], input_ids, axis=0)          # [B,S,H]
    x = x + params["pos_emb"][:S][None, :, :]
    x = x + params["type_emb"][0][None, None, :]
    x = layernorm(x.reshape(M, H), params["emb_ln_g"], params["emb_ln_b"])

    # ---- additive mask, one row per batch (heads share it via index_map) ----
    ext_mask = ((1.0 - attention_mask.astype(jnp.float32)) * -1e4).reshape(B, 1, S)

    # ---- transformer encoder layers ----
    for lyr in params["layers"]:
        x_bsh = x.reshape(B, S, H)
        qkv = qkv_projection(x_bsh, lyr["w_qkv"], lyr["b_qkv"])   # [3,B,nH,S,dH]
        ctx = flash_attention(qkv, ext_mask, scale)               # [B,nH,S,dH]
        x_bsh = attn_output_layernorm(ctx, lyr["wo_h"], lyr["bo"], x_bsh,
                                      lyr["ln1_g"], lyr["ln1_b"])
        x = ffn_layernorm(x_bsh.reshape(M, H), lyr["w1"], lyr["b1"],
                          lyr["w2"], lyr["b2"], lyr["ln2_g"], lyr["ln2_b"])

    # ---- MLM head (decoder weight tied to word embeddings, no transpose copy) ----
    h = dense(x, params["mlm_dense_w"], params["mlm_dense_b"], activation="gelu")
    h = layernorm(h, params["mlm_ln_g"], params["mlm_ln_b"])
    logits = dense(h, params["word_emb_bf16"], params["mlm_bias"], trans_w=True)  # [M,V]

    loss = mlm_loss(logits, labels.reshape(M))
    logits = logits.reshape(B, S, V)
    # matches: return (output[0], output[1][:, 0, :]) == (loss, logits[:, 0, :])
    return loss, logits[:, 0, :]


# ----------------------------------- main -----------------------------------

if __name__ == "__main__":
    cfg = dict(vocab=128, hidden=32, heads=4, layers=6, inter=64, max_pos=16)
    B, S = 2, 8

    key = jax.random.PRNGKey(0)
    kp, kid, klab = jax.random.split(key, 3)
    params = prepare_params(init_params(kp, cfg), cfg)

    input_ids = jax.random.randint(kid, (B, S), 0, cfg["vocab"], dtype=jnp.int32)
    attention_mask = jnp.ones((B, S), jnp.int32).at[1, 6:].set(0)   # padding in batch 1
    labels = jax.random.randint(klab, (B, S), 0, cfg["vocab"], dtype=jnp.int32)
    labels = labels.at[:, ::2].set(-100)                            # ignored positions

    fwd = jax.jit(functools.partial(bert_mlm_forward, params, cfg))
    loss, cls_logits = fwd(input_ids, attention_mask, labels)
    jax.block_until_ready((loss, cls_logits))

    assert loss.shape == ()
    assert cls_logits.shape == (B, cfg["vocab"])
    assert bool(jnp.isfinite(loss))
    print("KERNEL_OK")
</pallas_src>

<mosaic_0001>
module attributes {stable_mosaic.version = 11 : i64} {
  func.func @_ln_kernel(%arg0: i32, %arg1: memref<16x32xf32, #tpu.memory_space<vmem>>, %arg2: memref<1x32xf32, #tpu.memory_space<vmem>>, %arg3: memref<1x32xf32, #tpu.memory_space<vmem>>, %arg4: memref<16x32xf32, #tpu.memory_space<vmem>>) attributes {dimension_semantics = [#tpu.dimension_semantics<parallel>], iteration_bounds = array<i64: 1>, scalar_prefetch = 0 : i64, scratch_operands = 0 : i64, tpu.core_type = #tpu.core_type<tc>, window_params = [{transform_indices = @transform_0, window_bounds = array<i64: 16, 32>}, {pipeline_mode = #tpu.pipeline_mode<synchronous>, transform_indices = @transform_1, window_bounds = array<i64: 1, 32>}, {pipeline_mode = #tpu.pipeline_mode<synchronous>, transform_indices = @transform_2, window_bounds = array<i64: 1, 32>}, {transform_indices = @transform_3, window_bounds = array<i64: 16, 32>}]} {
    %c0 = arith.constant 0 : index
    %c0_0 = arith.constant 0 : index
    %0 = vector.load %arg1[%c0, %c0_0] : memref<16x32xf32, #tpu.memory_space<vmem>>, vector<16x32xf32>
    %cst = arith.constant dense<0.000000e+00> : vector<16xf32>
    %1 = vector.multi_reduction <add>, %0, %cst [1] : vector<16x32xf32> to vector<16xf32>
    %2 = vector.shape_cast %1 : vector<16xf32> to vector<16x1xf32>
    %cst_1 = arith.constant 3.200000e+01 : f32
    %3 = vector.broadcast %cst_1 : f32 to vector<16x1xf32>
    %4 = arith.divf %2, %3 : vector<16x1xf32>
    %5 = vector.broadcast %4 : vector<16x1xf32> to vector<16x32xf32>
    %6 = arith.subf %0, %5 : vector<16x32xf32>
    %7 = arith.mulf %6, %6 : vector<16x32xf32>
    %cst_2 = arith.constant dense<0.000000e+00> : vector<16xf32>
    %8 = vector.multi_reduction <add>, %7, %cst_2 [1] : vector<16x32xf32> to vector<16xf32>
    %9 = vector.shape_cast %8 : vector<16xf32> to vector<16x1xf32>
    %cst_3 = arith.constant 3.200000e+01 : f32
    %10 = vector.broadcast %cst_3 : f32 to vector<16x1xf32>
    %11 = arith.divf %9, %10 : vector<16x1xf32>
    %cst_4 = arith.constant 9.99999996E-13 : f32
    %12 = vector.broadcast %cst_4 : f32 to vector<16x1xf32>
    %13 = arith.addf %11, %12 : vector<16x1xf32>
    %14 = math.rsqrt %13 : vector<16x1xf32>
    %15 = vector.broadcast %4 : vector<16x1xf32> to vector<16x32xf32>
    %16 = arith.subf %0, %15 : vector<16x32xf32>
    %17 = vector.broadcast %14 : vector<16x1xf32> to vector<16x32xf32>
    %18 = arith.mulf %16, %17 : vector<16x32xf32>
    %c0_5 = arith.constant 0 : index
    %c0_6 = arith.constant 0 : index
    %19 = vector.load %arg2[%c0_5, %c0_6] : memref<1x32xf32, #tpu.memory_space<vmem>>, vector<1x32xf32>
    %20 = vector.broadcast %19 : vector<1x32xf32> to vector<16x32xf32>
    %21 = arith.mulf %18, %20 : vector<16x32xf32>
    %c0_7 = arith.constant 0 : index
    %c0_8 = arith.constant 0 : index
    %22 = vector.load %arg3[%c0_7, %c0_8] : memref<1x32xf32, #tpu.memory_space<vmem>>, vector<1x32xf32>
    %23 = vector.broadcast %22 : vector<1x32xf32> to vector<16x32xf32>
    %24 = arith.addf %21, %23 : vector<16x32xf32>
    %c0_9 = arith.constant 0 : index
    %c0_10 = arith.constant 0 : index
    %25 = vector.load %arg4[%c0_9, %c0_10] : memref<16x32xf32, #tpu.memory_space<vmem>>, vector<16x32xf32>
    tpu.vector_store %arg4[%c0_9, %c0_10], %24 {strides = array<i32>} : memref<16x32xf32, #tpu.memory_space<vmem>>, vector<16x32xf32>,
    return
  }
  func.func @transform_0(%arg0: i32) -> (i32, i32) {
    %c0_i32 = arith.constant 0 : i32
    %c0_i32_0 = arith.constant 0 : i32
    return %arg0, %c0_i32 : i32, i32
  }
  func.func @transform_1(%arg0: i32) -> (i32, i32) {
    %c0_i32 = arith.constant 0 : i32
    %c0_i32_0 = arith.constant 0 : i32
    %c0_i32_1 = arith.constant 0 : i32
    return %c0_i32, %c0_i32_0 : i32, i32
  }
  func.func @transform_2(%arg0: i32) -> (i32, i32) {
    %c0_i32 = arith.constant 0 : i32
    %c0_i32_0 = arith.constant 0 : i32
    %c0_i32_1 = arith.constant 0 : i32
    return %c0_i32, %c0_i32_0 : i32, i32
  }
  func.func @transform_3(%arg0: i32) -> (i32, i32) {
    %c0_i32 = arith.constant 0 : i32
    %c0_i32_0 = arith.constant 0 : i32
    return %arg0, %c0_i32 : i32, i32
  }
}

module attributes {stable_mosaic.version = 11 : i64} {
  func.func @_qkv_kernel(%arg0: i32, %arg1: i32, %arg2: i32, %arg3: memref<1x8x32xf32, #tpu.memory_space<vmem>>, %arg4: memref<1x1x32x8xbf16, #tpu.memory_space<vmem>>, %arg5: memref<1x1x1x8xf32, #tpu.memory_space<vmem>>, %arg6: memref<1x1x1x8x8xf32, #tpu.memory_space<vmem>>) attributes {dimension_semantics = [#tpu.dimension_semantics<parallel>, #tpu.dimension_semantics<parallel>, #tpu.dimension_semantics<parallel>], iteration_bounds = array<i64: 2, 3, 4>, scalar_prefetch = 0 : i64, scratch_operands = 0 : i64, tpu.core_type = #tpu.core_type<tc>, window_params = [{transform_indices = @transform_0, window_bounds = array<i64: 1, 8, 32>}, {transform_indices = @transform_1, window_bounds = array<i64: 1, 1, 32, 8>}, {transform_indices = @transform_2, window_bounds = array<i64: 1, 1, 1, 8>}, {transform_indices = @transform_3, window_bounds = array<i64: 1, 1, 1, 8, 8>}]} {
    %c0 = arith.constant 0 : index
    %c0_0 = arith.constant 0 : index
    %c0_1 = arith.constant 0 : index
    %0 = vector.load %arg3[%c0, %c0_0, %c0_1] : memref<1x8x32xf32, #tpu.memory_space<vmem>>, vector<1x8x32xf32>
    %1 = vector.shape_cast %0 : vector<1x8x32xf32> to vector<8x32xf32>
    %2 = arith.truncf %1 : vector<8x32xf32> to vector<8x32xbf16>
    %c0_2 = arith.constant 0 : index
    %c0_3 = arith.constant 0 : index
    %c0_4 = arith.constant 0 : index
    %c0_5 = arith.constant 0 : index
    %3 = vector.load %arg4[%c0_2, %c0_3, %c0_4, %c0_5] : memref<1x1x32x8xbf16, #tpu.memory_space<vmem>>, vector<1x1x32x8xbf16>
    %4 = vector.shape_cast %3 : vector<1x1x32x8xbf16> to vector<32x8xbf16>
    %cst = arith.constant dense<0.000000e+00> : vector<8x8xf32>
    %5 = tpu.matmul %2, %4, %cst {dimension_numbers = #tpu.dot_dimension_numbers<[1], [0], [0], [1], [0, 0, 1, 1], [], []>} : vector<8x32xbf16>, vector<32x8xbf16>, vector<8x8xf32> -> vector<8x8xf32>
    %c0_6 = arith.constant 0 : index
    %c0_7 = arith.constant 0 : index
    %c0_8 = arith.constant 0 : index
    %c0_9 = arith.constant 0 : index
    %6 = vector.load %arg5[%c0_6, %c0_7, %c0_8, %c0_9] : memref<1x1x1x8xf32, #tpu.memory_space<vmem>>, vector<1x1x1x8xf32>
    %7 = vector.shape_cast %6 : vector<1x1x1x8xf32> to vector<1x8xf32>
    %8 = vector.broadcast %7 : vector<1x8xf32> to vector<8x8xf32>
    %9 = arith.addf %5, %8 : vector<8x8xf32>
    %c0_10 = arith.constant 0 : index
    %c0_11 = arith.constant 0 : index
    %c0_12 = arith.constant 0 : index
    %c0_13 = arith.constant 0 : index
    %c0_14 = arith.constant 0 : index
    %10 = vector.load %arg6[%c0_10, %c0_11, %c0_12, %c0_13, %c0_14] : memref<1x1x1x8x8xf32, #tpu.memory_space<vmem>>, vector<1x1x1x8x8xf32>
    %11 = vector.shape_cast %10 : vector<1x1x1x8x8xf32> to vector<8x8xf32>
    %12 = vector.shape_cast %9 : vector<8x8xf32> to vector<1x1x1x8x8xf32>
    tpu.vector_store %arg6[%c0_10, %c0_11, %c0_12, %c0_13, %c0_14], %12 {strides = array<i32>} : memref<1x1x1x8x8xf32, #tpu.memory_space<vmem>>, vector<1x1x1x8x8xf32>,
    return
  }
  func.func @transform_0(%arg0: i32, %arg1: i32, %arg2: i32) -> (i32, i32, i32) {
    %c0_i32 = arith.constant 0 : i32
    %c0_i32_0 = arith.constant 0 : i32
    %c0_i32_1 = arith.constant 0 : i32
    return %arg0, %c0_i32, %c0_i32_0 : i32, i32, i32
  }
  func.func @transform_1(%arg0: i32, %arg1: i32, %arg2: i32) -> (i32, i32, i32, i32) {
    %c0_i32 = arith.constant 0 : i32
    %c0_i32_0 = arith.constant 0 : i32
    %c0_i32_1 = arith.constant 0 : i32
    return %arg1, %arg2, %c0_i32, %c0_i32_0 : i32, i32, i32, i32
  }
  func.func @transform_2(%arg0: i32, %arg1: i32, %arg2: i32) -> (i32, i32, i32, i32) {
    %c0_i32 = arith.constant 0 : i32
    %c0_i32_0 = arith.constant 0 : i32
    %c0_i32_1 = arith.constant 0 : i32
    return %arg1, %arg2, %c0_i32, %c0_i32_0 : i32, i32, i32, i32
  }
  func.func @transform_3(%arg0: i32, %arg1: i32, %arg2: i32) -> (i32, i32, i32, i32, i32) {
    %c0_i32 = arith.constant 0 : i32
    %c0_i32_0 = arith.constant 0 : i32
    %c0_i32_1 = arith.constant 0 : i32
    return %arg1, %arg0, %arg2, %c0_i32, %c0_i32_0 : i32, i32, i32, i32, i32
  }
}

module attributes {stable_mosaic.version = 11 : i64} {
  func.func @_flash_kernel(%arg0: i32, %arg1: i32, %arg2: i32, %arg3: i32, %arg4: memref<1x1x1x8x8xf32, #tpu.memory_space<vmem>>, %arg5: memref<1x1x1x8x8xf32, #tpu.memory_space<vmem>>, %arg6: memref<1x1x1x8x8xf32, #tpu.memory_space<vmem>>, %arg7: memref<1x1x8xf32, #tpu.memory_space<vmem>>, %arg8: memref<1x1x8x8xf32, #tpu.memory_space<vmem>>, %arg9: memref<8x1xf32, #tpu.memory_space<vmem>>, %arg10: memref<8x1xf32, #tpu.memory_space<vmem>>, %arg11: memref<8x8xf32, #tpu.memory_space<vmem>>) attributes {dimension_semantics = [#tpu.dimension_semantics<parallel>, #tpu.dimension_semantics<parallel>, #tpu.dimension_semantics<parallel>, #tpu.dimension_semantics<arbitrary>], iteration_bounds = array<i64: 2, 4, 1, 1>, scalar_prefetch = 0 : i64, scratch_operands = 3 : i64, tpu.core_type = #tpu.core_type<tc>, window_params = [{transform_indices = @transform_0, window_bounds = array<i64: 1, 1, 1, 8, 8>}, {transform_indices = @transform_1, window_bounds = array<i64: 1, 1, 1, 8, 8>}, {transform_indices = @transform_2, window_bounds = array<i64: 1, 1, 1, 8, 8>}, {transform_indices = @transform_3, window_bounds = array<i64: 1, 1, 8>}, {transform_indices = @transform_4, window_bounds = array<i64: 1, 1, 8, 8>}]} {
    %c0_i32 = arith.constant 0 : i32
    %0 = arith.cmpi eq, %arg3, %c0_i32 : i32
    %1 = arith.extui %0 : i1 to i32
    %c0_i32_0 = arith.constant 0 : i32
    %2 = arith.cmpi ne, %1, %c0_i32_0 : i32
    scf.if %2 {
      %cst_36 = arith.constant -1.000000e+30 : f32
      %45 = vector.broadcast %cst_36 : f32 to vector<8x1xf32>
      %c0_37 = arith.constant 0 : index
      %c0_38 = arith.constant 0 : index
      %46 = vector.load %arg9[%c0_37, %c0_38] : memref<8x1xf32, #tpu.memory_space<vmem>>, vector<8x1xf32>
      tpu.vector_store %arg9[%c0_37, %c0_38], %45 {strides = array<i32>} : memref<8x1xf32, #tpu.memory_space<vmem>>, vector<8x1xf32>,
      %cst_39 = arith.constant 0.000000e+00 : f32
      %47 = vector.broadcast %cst_39 : f32 to vector<8x1xf32>
      %c0_40 = arith.constant 0 : index
      %c0_41 = arith.constant 0 : index
      %48 = vector.load %arg10[%c0_40, %c0_41] : memref<8x1xf32, #tpu.memory_space<vmem>>, vector<8x1xf32>
      tpu.vector_store %arg10[%c0_40, %c0_41], %47 {strides = array<i32>} : memref<8x1xf32, #tpu.memory_space<vmem>>, vector<8x1xf32>,
      %cst_42 = arith.constant 0.000000e+00 : f32
      %49 = vector.broadcast %cst_42 : f32 to vector<8x8xf32>
      %c0_43 = arith.constant 0 : index
      %c0_44 = arith.constant 0 : index
      %50 = vector.load %arg11[%c0_43, %c0_44] : memref<8x8xf32, #tpu.memory_space<vmem>>, vector<8x8xf32>
      tpu.vector_store %arg11[%c0_43, %c0_44], %49 {strides = array<i32>} : memref<8x8xf32, #tpu.memory_space<vmem>>, vector<8x8xf32>,
    } else {
    }
    %c0 = arith.constant 0 : index
    %c0_1 = arith.constant 0 : index
    %c0_2 = arith.constant 0 : index
    %c0_3 = arith.constant 0 : index
    %c0_4 = arith.constant 0 : index
    %3 = vector.load %arg4[%c0, %c0_1, %c0_2, %c0_3, %c0_4] : memref<1x1x1x8x8xf32, #tpu.memory_space<vmem>>, vector<1x1x1x8x8xf32>
    %4 = vector.shape_cast %3 : vector<1x1x1x8x8xf32> to vector<8x8xf32>
    %5 = arith.truncf %4 : vector<8x8xf32> to vector<8x8xbf16>
    %c0_5 = arith.constant 0 : index
    %c0_6 = arith.constant 0 : index
    %c0_7 = arith.constant 0 : index
    %c0_8 = arith.constant 0 : index
    %c0_9 = arith.constant 0 : index
    %6 = vector.load %arg5[%c0_5, %c0_6, %c0_7, %c0_8, %c0_9] : memref<1x1x1x8x8xf32, #tpu.memory_space<vmem>>, vector<1x1x1x8x8xf32>
    %7 = vector.shape_cast %6 : vector<1x1x1x8x8xf32> to vector<8x8xf32>
    %8 = arith.truncf %7 : vector<8x8xf32> to vector<8x8xbf16>
    %c0_10 = arith.constant 0 : index
    %c0_11 = arith.constant 0 : index
    %c0_12 = arith.constant 0 : index
    %c0_13 = arith.constant 0 : index
    %c0_14 = arith.constant 0 : index
    %9 = vector.load %arg6[%c0_10, %c0_11, %c0_12, %c0_13, %c0_14] : memref<1x1x1x8x8xf32, #tpu.memory_space<vmem>>, vector<1x1x1x8x8xf32>
    %10 = vector.shape_cast %9 : vector<1x1x1x8x8xf32> to vector<8x8xf32>
    %11 = arith.truncf %10 : vector<8x8xf32> to vector<8x8xbf16>
    %cst = arith.constant dense<0.000000e+00> : vector<8x8xf32>
    %12 = tpu.matmul %5, %8, %cst {dimension_numbers = #tpu.dot_dimension_numbers<[1], [1], [0], [0], [0, 0, 1, 0], [], []>} : vector<8x8xbf16>, vector<8x8xbf16>, vector<8x8xf32> -> vector<8x8xf32>
    %cst_15 = arith.constant 0.353553385 : f32
    %13 = vector.broadcast %cst_15 : f32 to vector<8x8xf32>
    %14 = arith.mulf %12, %13 : vector<8x8xf32>
    %c0_16 = arith.constant 0 : index
    %c0_17 = arith.constant 0 : index
    %c0_18 = arith.constant 0 : index
    %15 = vector.load %arg7[%c0_16, %c0_17, %c0_18] : memref<1x1x8xf32, #tpu.memory_space<vmem>>, vector<1x1x8xf32>
    %16 = vector.shape_cast %15 : vector<1x1x8xf32> to vector<1x8xf32>
    %17 = vector.broadcast %16 : vector<1x8xf32> to vector<8x8xf32>
    %18 = arith.addf %14, %17 : vector<8x8xf32>
    %c0_19 = arith.constant 0 : index
    %c0_20 = arith.constant 0 : index
    %19 = vector.load %arg9[%c0_19, %c0_20] : memref<8x1xf32, #tpu.memory_space<vmem>>, vector<8x1xf32>
    %cst_21 = arith.constant dense<0xFF800000> : vector<8xf32>
    %20 = vector.multi_reduction <maximumf>, %18, %cst_21 [1] : vector<8x8xf32> to vector<8xf32>
    %21 = vector.shape_cast %20 : vector<8xf32> to vector<8x1xf32>
    %22 = arith.maximumf %19, %21 : vector<8x1xf32>
    %23 = arith.subf %19, %22 : vector<8x1xf32>
    %24 = math.exp %23 : vector<8x1xf32>
    %25 = vector.broadcast %22 : vector<8x1xf32> to vector<8x8xf32>
    %26 = arith.subf %18, %25 : vector<8x8xf32>
    %27 = math.exp %26 : vector<8x8xf32>
    %c0_22 = arith.constant 0 : index
    %c0_23 = arith.constant 0 : index
    %28 = vector.load %arg10[%c0_22, %c0_23] : memref<8x1xf32, #tpu.memory_space<vmem>>, vector<8x1xf32>
    %29 = arith.mulf %24, %28 : vector<8x1xf32>
    %cst_24 = arith.constant dense<0.000000e+00> : vector<8xf32>
    %30 = vector.multi_reduction <add>, %27, %cst_24 [1] : vector<8x8xf32> to vector<8xf32>
    %31 = vector.shape_cast %30 : vector<8xf32> to vector<8x1xf32>
    %32 = arith.addf %29, %31 : vector<8x1xf32>
    %c0_25 = arith.constant 0 : index
    %c0_26 = arith.constant 0 : index
    %33 = vector.load %arg10[%c0_25, %c0_26] : memref<8x1xf32, #tpu.memory_space<vmem>>, vector<8x1xf32>
    tpu.vector_store %arg10[%c0_25, %c0_26], %32 {strides = array<i32>} : memref<8x1xf32, #tpu.memory_space<vmem>>, vector<8x1xf32>,
    %c0_27 = arith.constant 0 : index
    %c0_28 = arith.constant 0 : index
    %34 = vector.load %arg11[%c0_27, %c0_28] : memref<8x8xf32, #tpu.memory_space<vmem>>, vector<8x8xf32>
    %35 = vector.broadcast %24 : vector<8x1xf32> to vector<8x8xf32>
    %36 = arith.mulf %35, %34 : vector<8x8xf32>
    %37 = arith.truncf %27 : vector<8x8xf32> to vector<8x8xbf16>
    %cst_29 = arith.constant dense<0.000000e+00> : vector<8x8xf32>
    %38 = tpu.matmul %37, %11, %cst_29 {dimension_numbers = #tpu.dot_dimension_numbers<[1], [0], [0], [1], [0, 0, 1, 1], [], []>} : vector<8x8xbf16>, vector<8x8xbf16>, vector<8x8xf32> -> vector<8x8xf32>
    %39 = arith.addf %36, %38 : vector<8x8xf32>
    %c0_30 = arith.constant 0 : index
    %c0_31 = arith.constant 0 : index
    %40 = vector.load %arg11[%c0_30, %c0_31] : memref<8x8xf32, #tpu.memory_space<vmem>>, vector<8x8xf32>
    tpu.vector_store %arg11[%c0_30, %c0_31], %39 {strides = array<i32>} : memref<8x8xf32, #tpu.memory_space<vmem>>, vector<8x8xf32>,
    %c0_32 = arith.constant 0 : index
    %c0_33 = arith.constant 0 : index
    %41 = vector.load %arg9[%c0_32, %c0_33] : memref<8x1xf32, #tpu.memory_space<vmem>>, vector<8x1xf32>
    tpu.vector_store %arg9[%c0_32, %c0_33], %22 {strides = array<i32>} : memref<8x1xf32, #tpu.memory_space<vmem>>, vector<8x1xf32>,
    %c0_i32_34 = arith.constant 0 : i32
    %42 = arith.cmpi eq, %arg3, %c0_i32_34 : i32
    %43 = arith.extui %42 : i1 to i32
    %c0_i32_35 = arith.constant 0 : i32
    %44 = arith.cmpi ne, %43, %c0_i32_35 : i32
    scf.if %44 {
      %c0_36 = arith.constant 0 : index
      %c0_37 = arith.constant 0 : index
      %45 = vector.load %arg11[%c0_36, %c0_37] : memref<8x8xf32, #tpu.memory_space<vmem>>, vector<8x8xf32>
      %c0_38 = arith.constant 0 : index
      %c0_39 = arith.constant 0 : index
      %46 = vector.load %arg10[%c0_38, %c0_39] : memref<8x1xf32, #tpu.memory_space<vmem>>, vector<8x1xf32>
      %47 = tpu.reciprocal %46 {approx = true} : vector<8x1xf32> -> vector<8x1xf32>
      %48 = vector.broadcast %47 : vector<8x1xf32> to vector<8x8xf32>
      %49 = arith.mulf %45, %48 : vector<8x8xf32>
      %c0_40 = arith.constant 0 : index
      %c0_41 = arith.constant 0 : index
      %c0_42 = arith.constant 0 : index
      %c0_43 = arith.constant 0 : index
      %50 = vector.load %arg8[%c0_40, %c0_41, %c0_42, %c0_43] : memref<1x1x8x8xf32, #tpu.memory_space<vmem>>, vector<1x1x8x8xf32>
      %51 = vector.shape_cast %50 : vector<1x1x8x8xf32> to vector<8x8xf32>
      %52 = vector.shape_cast %49 : vector<8x8xf32> to vector<1x1x8x8xf32>
      tpu.vector_store %arg8[%c0_40, %c0_41, %c0_42, %c0_43], %52 {strides = array<i32>} : memref<1x1x8x8xf32, #tpu.memory_space<vmem>>, vector<1x1x8x8xf32>,
    } else {
    }
    return
  }
  func.func @transform_0(%arg0: i32, %arg1: i32, %arg2: i32, %arg3: i32) -> (i32, i32, i32, i32, i32) {
    %c0_i32 = arith.constant 0 : i32
    %c0_i32_0 = arith.constant 0 : i32
    %c0_i32_1 = arith.constant 0 : i32
    return %c0_i32, %arg0, %arg1, %arg2, %c0_i32_0 : i32, i32, i32, i32, i32
  }
  func.func @transform_1(%arg0: i32, %arg1: i32, %arg2: i32, %arg3: i32) -> (i32, i32, i32, i32, i32) {
    %c1_i32 = arith.constant 1 : i32
    %c0_i32 = arith.constant 0 : i32
    %c0_i32_0 = arith.constant 0 : i32
    return %c1_i32, %arg0, %arg1, %arg3, %c0_i32 : i32, i32, i32, i32, i32
  }
  func.func @transform_2(%arg0: i32, %arg1: i32, %arg2: i32, %arg3: i32) -> (i32, i32, i32, i32, i32) {
    %c2_i32 = arith.constant 2 : i32
    %c0_i32 = arith.constant 0 : i32
    %c0_i32_0 = arith.constant 0 : i32
    return %c2_i32, %arg0, %arg1, %arg3, %c0_i32 : i32, i32, i32, i32, i32
  }
  func.func @transform_3(%arg0: i32, %arg1: i32, %arg2: i32, %arg3: i32) -> (i32, i32, i32) {
    %c0_i32 = arith.constant 0 : i32
    %c0_i32_0 = arith.constant 0 : i32
    return %arg0, %c0_i32, %arg3 : i32, i32, i32
  }
  func.func @transform_4(%arg0: i32, %arg1: i32, %arg2: i32, %arg3: i32) -> (i32, i32, i32, i32) {
    %c0_i32 = arith.constant 0 : i32
    %c0_i32_0 = arith.constant 0 : i32
    return %arg0, %arg1, %arg2, %c0_i32 : i32, i32, i32, i32
  }
}

module attributes {stable_mosaic.version = 11 : i64} {
  func.func @_attn_out_ln_kernel(%arg0: i32, %arg1: i32, %arg2: memref<1x1x8x8xf32, #tpu.memory_space<vmem>>, %arg3: memref<1x8x32xbf16, #tpu.memory_space<vmem>>, %arg4: memref<1x32xf32, #tpu.memory_space<vmem>>, %arg5: memref<1x8x32xf32, #tpu.memory_space<vmem>>, %arg6: memref<1x32xf32, #tpu.memory_space<vmem>>, %arg7: memref<1x32xf32, #tpu.memory_space<vmem>>, %arg8: memref<1x8x32xf32, #tpu.memory_space<vmem>>, %arg9: memref<8x32xf32, #tpu.memory_space<vmem>>) attributes {dimension_semantics = [#tpu.dimension_semantics<parallel>, #tpu.dimension_semantics<arbitrary>], iteration_bounds = array<i64: 2, 4>, scalar_prefetch = 0 : i64, scratch_operands = 1 : i64, tpu.core_type = #tpu.core_type<tc>, window_params = [{transform_indices = @transform_0, window_bounds = array<i64: 1, 1, 8, 8>}, {transform_indices = @transform_1, window_bounds = array<i64: 1, 8, 32>}, {pipeline_mode = #tpu.pipeline_mode<synchronous>, transform_indices = @transform_2, window_bounds = array<i64: 1, 32>}, {transform_indices = @transform_3, window_bounds = array<i64: 1, 8, 32>}, {pipeline_mode = #tpu.pipeline_mode<synchronous>, transform_indices = @transform_4, window_bounds = array<i64: 1, 32>}, {pipeline_mode = #tpu.pipeline_mode<synchronous>, transform_indices = @transform_5, window_bounds = array<i64: 1, 32>}, {transform_indices = @transform_6, window_bounds = array<i64: 1, 8, 32>}]} {
    %c0_i32 = arith.constant 0 : i32
    %0 = arith.cmpi eq, %arg1, %c0_i32 : i32
    %1 = arith.extui %0 : i1 to i32
    %c0_i32_0 = arith.constant 0 : i32
    %2 = arith.cmpi ne, %1, %c0_i32_0 : i32
    scf.if %2 {
      %cst_12 = arith.constant 0.000000e+00 : f32
      %15 = vector.broadcast %cst_12 : f32 to vector<8x32xf32>
      %c0_13 = arith.constant 0 : index
      %c0_14 = arith.constant 0 : index
      %16 = vector.load %arg9[%c0_13, %c0_14] : memref<8x32xf32, #tpu.memory_space<vmem>>, vector<8x32xf32>
      tpu.vector_store %arg9[%c0_13, %c0_14], %15 {strides = array<i32>} : memref<8x32xf32, #tpu.memory_space<vmem>>, vector<8x32xf32>,
    } else {
    }
    %c0 = arith.constant 0 : index
    %c0_1 = arith.constant 0 : index
    %3 = vector.load %arg9[%c0, %c0_1] : memref<8x32xf32, #tpu.memory_space<vmem>>, vector<8x32xf32>
    %c0_2 = arith.constant 0 : index
    %c0_3 = arith.constant 0 : index
    %c0_4 = arith.constant 0 : index
    %c0_5 = arith.constant 0 : index
    %4 = vector.load %arg2[%c0_2, %c0_3, %c0_4, %c0_5] : memref<1x1x8x8xf32, #tpu.memory_space<vmem>>, vector<1x1x8x8xf32>
    %5 = vector.shape_cast %4 : vector<1x1x8x8xf32> to vector<8x8xf32>
    %6 = arith.truncf %5 : vector<8x8xf32> to vector<8x8xbf16>
    %c0_6 = arith.constant 0 : index
    %c0_7 = arith.constant 0 : index
    %c0_8 = arith.constant 0 : index
    %7 = vector.load %arg3[%c0_6, %c0_7, %c0_8] : memref<1x8x32xbf16, #tpu.memory_space<vmem>>, vector<1x8x32xbf16>
    %8 = vector.shape_cast %7 : vector<1x8x32xbf16> to vector<8x32xbf16>
    %cst = arith.constant dense<0.000000e+00> : vector<8x32xf32>
    %9 = tpu.matmul %6, %8, %cst {dimension_numbers = #tpu.dot_dimension_numbers<[1], [0], [0], [1], [0, 0, 1, 1], [], []>} : vector<8x8xbf16>, vector<8x32xbf16>, vector<8x32xf32> -> vector<8x32xf32>
    %10 = arith.addf %3, %9 : vector<8x32xf32>
    %c0_9 = arith.constant 0 : index
    %c0_10 = arith.constant 0 : index
    %11 = vector.load %arg9[%c0_9, %c0_10] : memref<8x32xf32, #tpu.memory_space<vmem>>, vector<8x32xf32>
    tpu.vector_store %arg9[%c0_9, %c0_10], %10 {strides = array<i32>} : memref<8x32xf32, #tpu.memory_space<vmem>>, vector<8x32xf32>,
    %c3_i32 = arith.constant 3 : i32
    %12 = arith.cmpi eq, %arg1, %c3_i32 : i32
    %13 = arith.extui %12 : i1 to i32
    %c0_i32_11 = arith.constant 0 : i32
    %14 = arith.cmpi ne, %13, %c0_i32_11 : i32
    scf.if %14 {
      %c0_12 = arith.constant 0 : index
      %c0_13 = arith.constant 0 : index
      %15 = vector.load %arg9[%c0_12, %c0_13] : memref<8x32xf32, #tpu.memory_space<vmem>>, vector<8x32xf32>
      %c0_14 = arith.constant 0 : index
      %c0_15 = arith.constant 0 : index
      %16 = vector.load %arg4[%c0_14, %c0_15] : memref<1x32xf32, #tpu.memory_space<vmem>>, vector<1x32xf32>
      %17 = vector.broadcast %16 : vector<1x32xf32> to vector<8x32xf32>
      %18 = arith.addf %15, %17 : vector<8x32xf32>
      %c0_16 = arith.constant 0 : index
      %c0_17 = arith.constant 0 : index
      %c0_18 = arith.constant 0 : index
      %19 = vector.load %arg5[%c0_16, %c0_17, %c0_18] : memref<1x8x32xf32, #tpu.memory_space<vmem>>, vector<1x8x32xf32>
      %20 = vector.shape_cast %19 : vector<1x8x32xf32> to vector<8x32xf32>
      %21 = arith.addf %18, %20 : vector<8x32xf32>
      %cst_19 = arith.constant dense<0.000000e+00> : vector<8xf32>
      %22 = vector.multi_reduction <add>, %21, %cst_19 [1] : vector<8x32xf32> to vector<8xf32>
      %23 = vector.shape_cast %22 : vector<8xf32> to vector<8x1xf32>
      %cst_20 = arith.constant 3.200000e+01 : f32
      %24 = vector.broadcast %cst_20 : f32 to vector<8x1xf32>
      %25 = arith.divf %23, %24 : vector<8x1xf32>
      %26 = vector.broadcast %25 : vector<8x1xf32> to vector<8x32xf32>
      %27 = arith.subf %21, %26 : vector<8x32xf32>
      %28 = arith.mulf %27, %27 : vector<8x32xf32>
      %cst_21 = arith.constant dense<0.000000e+00> : vector<8xf32>
      %29 = vector.multi_reduction <add>, %28, %cst_21 [1] : vector<8x32xf32> to vector<8xf32>
      %30 = vector.shape_cast %29 : vector<8xf32> to vector<8x1xf32>
      %cst_22 = arith.constant 3.200000e+01 : f32
      %31 = vector.broadcast %cst_22 : f32 to vector<8x1xf32>
      %32 = arith.divf %30, %31 : vector<8x1xf32>
      %cst_23 = arith.constant 9.99999996E-13 : f32
      %33 = vector.broadcast %cst_23 : f32 to vector<8x1xf32>
      %34 = arith.addf %32, %33 : vector<8x1xf32>
      %35 = math.rsqrt %34 : vector<8x1xf32>
      %36 = vector.broadcast %25 : vector<8x1xf32> to vector<8x32xf32>
      %37 = arith.subf %21, %36 : vector<8x32xf32>
      %38 = vector.broadcast %35 : vector<8x1xf32> to vector<8x32xf32>
      %39 = arith.mulf %37, %38 : vector<8x32xf32>
      %c0_24 = arith.constant 0 : index
      %c0_25 = arith.constant 0 : index
      %40 = vector.load %arg6[%c0_24, %c0_25] : memref<1x32xf32, #tpu.memory_space<vmem>>, vector<1x32xf32>
      %41 = vector.broadcast %40 : vector<1x32xf32> to vector<8x32xf32>
      %42 = arith.mulf %39, %41 : vector<8x32xf32>
      %c0_26 = arith.constant 0 : index
      %c0_27 = arith.constant 0 : index
      %43 = vector.load %arg7[%c0_26, %c0_27] : memref<1x32xf32, #tpu.memory_space<vmem>>, vector<1x32xf32>
      %44 = vector.broadcast %43 : vector<1x32xf32> to vector<8x32xf32>
      %45 = arith.addf %42, %44 : vector<8x32xf32>
      %c0_28 = arith.constant 0 : index
      %c0_29 = arith.constant 0 : index
      %c0_30 = arith.constant 0 : index
      %46 = vector.load %arg8[%c0_28, %c0_29, %c0_30] : memref<1x8x32xf32, #tpu.memory_space<vmem>>, vector<1x8x32xf32>
      %47 = vector.shape_cast %46 : vector<1x8x32xf32> to vector<8x32xf32>
      %48 = vector.shape_cast %45 : vector<8x32xf32> to vector<1x8x32xf32>
      tpu.vector_store %arg8[%c0_28, %c0_29, %c0_30], %48 {strides = array<i32>} : memref<1x8x32xf32, #tpu.memory_space<vmem>>, vector<1x8x32xf32>,
    } else {
    }
    return
  }
  func.func @transform_0(%arg0: i32, %arg1: i32) -> (i32, i32, i32, i32) {
    %c0_i32 = arith.constant 0 : i32
    %c0_i32_0 = arith.constant 0 : i32
    %c0_i32_1 = arith.constant 0 : i32
    return %arg0, %arg1, %c0_i32, %c0_i32_0 : i32, i32, i32, i32
  }
  func.func @transform_1(%arg0: i32, %arg1: i32) -> (i32, i32, i32) {
    %c0_i32 = arith.constant 0 : i32
    %c0_i32_0 = arith.constant 0 : i32
    %c0_i32_1 = arith.constant 0 : i32
    return %arg1, %c0_i32, %c0_i32_0 : i32, i32, i32
  }
  func.func @transform_2(%arg0: i32, %arg1: i32) -> (i32, i32) {
    %c0_i32 = arith.constant 0 : i32
    %c0_i32_0 = arith.constant 0 : i32
    %c0_i32_1 = arith.constant 0 : i32
    return %c0_i32, %c0_i32_0 : i32, i32
  }
  func.func @transform_3(%arg0: i32, %arg1: i32) -> (i32, i32, i32) {
    %c0_i32 = arith.constant 0 : i32
    %c0_i32_0 = arith.constant 0 : i32
    %c0_i32_1 = arith.constant 0 : i32
    return %arg0, %c0_i32, %c0_i32_0 : i32, i32, i32
  }
  func.func @transform_4(%arg0: i32, %arg1: i32) -> (i32, i32) {
    %c0_i32 = arith.constant 0 : i32
    %c0_i32_0 = arith.constant 0 : i32
    %c0_i32_1 = arith.constant 0 : i32
    return %c0_i32, %c0_i32_0 : i32, i32
  }
  func.func @transform_5(%arg0: i32, %arg1: i32) -> (i32, i32) {
    %c0_i32 = arith.constant 0 : i32
    %c0_i32_0 = arith.constant 0 : i32
    %c0_i32_1 = arith.constant 0 : i32
    return %c0_i32, %c0_i32_0 : i32, i32
  }
  func.func @transform_6(%arg0: i32, %arg1: i32) -> (i32, i32, i32) {
    %c0_i32 = arith.constant 0 : i32
    %c0_i32_0 = arith.constant 0 : i32
    %c0_i32_1 = arith.constant 0 : i32
    return %arg0, %c0_i32, %c0_i32_0 : i32, i32, i32
  }
}

module attributes {stable_mosaic.version = 11 : i64} {
  func.func @_ffn_ln_kernel(%arg0: i32, %arg1: memref<16x32xf32, #tpu.memory_space<vmem>>, %arg2: memref<32x64xbf16, #tpu.memory_space<vmem>>, %arg3: memref<1x64xf32, #tpu.memory_space<vmem>>, %arg4: memref<64x32xbf16, #tpu.memory_space<vmem>>, %arg5: memref<1x32xf32, #tpu.memory_space<vmem>>, %arg6: memref<1x32xf32, #tpu.memory_space<vmem>>, %arg7: memref<1x32xf32, #tpu.memory_space<vmem>>, %arg8: memref<16x32xf32, #tpu.memory_space<vmem>>) attributes {dimension_semantics = [#tpu.dimension_semantics<parallel>], iteration_bounds = array<i64: 1>, scalar_prefetch = 0 : i64, scratch_operands = 0 : i64, tpu.core_type = #tpu.core_type<tc>, window_params = [{transform_indices = @transform_0, window_bounds = array<i64: 16, 32>}, {pipeline_mode = #tpu.pipeline_mode<synchronous>, transform_indices = @transform_1, window_bounds = array<i64: 32, 64>}, {pipeline_mode = #tpu.pipeline_mode<synchronous>, transform_indices = @transform_2, window_bounds = array<i64: 1, 64>}, {pipeline_mode = #tpu.pipeline_mode<synchronous>, transform_indices = @transform_3, window_bounds = array<i64: 64, 32>}, {pipeline_mode = #tpu.pipeline_mode<synchronous>, transform_indices = @transform_4, window_bounds = array<i64: 1, 32>}, {pipeline_mode = #tpu.pipeline_mode<synchronous>, transform_indices = @transform_5, window_bounds = array<i64: 1, 32>}, {pipeline_mode = #tpu.pipeline_mode<synchronous>, transform_indices = @transform_6, window_bounds = array<i64: 1, 32>}, {transform_indices = @transform_7, window_bounds = array<i64: 16, 32>}]} {
    %c0 = arith.constant 0 : index
    %c0_0 = arith.constant 0 : index
    %0 = vector.load %arg1[%c0, %c0_0] : memref<16x32xf32, #tpu.memory_space<vmem>>, vector<16x32xf32>
    %1 = arith.truncf %0 : vector<16x32xf32> to vector<16x32xbf16>
    %c0_1 = arith.constant 0 : index
    %c0_2 = arith.constant 0 : index
    %2 = vector.load %arg2[%c0_1, %c0_2] : memref<32x64xbf16, #tpu.memory_space<vmem>>, vector<32x64xbf16>
    %cst = arith.constant dense<0.000000e+00> : vector<16x64xf32>
    %3 = tpu.matmul %1, %2, %cst {dimension_numbers = #tpu.dot_dimension_numbers<[1], [0], [0], [1], [0, 0, 1, 1], [], []>} : vector<16x32xbf16>, vector<32x64xbf16>, vector<16x64xf32> -> vector<16x64xf32>
    %c0_3 = arith.constant 0 : index
    %c0_4 = arith.constant 0 : index
    %4 = vector.load %arg3[%c0_3, %c0_4] : memref<1x64xf32, #tpu.memory_space<vmem>>, vector<1x64xf32>
    %5 = vector.broadcast %4 : vector<1x64xf32> to vector<16x64xf32>
    %6 = arith.addf %3, %5 : vector<16x64xf32>
    %7 = arith.mulf %6, %6 : vector<16x64xf32>
    %8 = arith.mulf %6, %7 : vector<16x64xf32>
    %cst_5 = arith.constant 4.471500e-02 : f32
    %9 = vector.broadcast %cst_5 : f32 to vector<16x64xf32>
    %10 = arith.mulf %9, %8 : vector<16x64xf32>
    %11 = arith.addf %6, %10 : vector<16x64xf32>
    %cst_6 = arith.constant 0.797884583 : f32
    %12 = vector.broadcast %cst_6 : f32 to vector<16x64xf32>
    %13 = arith.mulf %12, %11 : vector<16x64xf32>
    %14 = math.tanh %13 : vector<16x64xf32>
    %cst_7 = arith.constant 1.000000e+00 : f32
    %15 = vector.broadcast %cst_7 : f32 to vector<16x64xf32>
    %16 = arith.addf %15, %14 : vector<16x64xf32>
    %cst_8 = arith.constant 5.000000e-01 : f32
    %17 = vector.broadcast %cst_8 : f32 to vector<16x64xf32>
    %18 = arith.mulf %17, %16 : vector<16x64xf32>
    %19 = arith.mulf %6, %18 : vector<16x64xf32>
    %20 = arith.truncf %19 : vector<16x64xf32> to vector<16x64xbf16>
    %c0_9 = arith.constant 0 : index
    %c0_10 = arith.constant 0 : index
    %21 = vector.load %arg4[%c0_9, %c0_10] : memref<64x32xbf16, #tpu.memory_space<vmem>>, vector<64x32xbf16>
    %cst_11 = arith.constant dense<0.000000e+00> : vector<16x32xf32>
    %22 = tpu.matmul %20, %21, %cst_11 {dimension_numbers = #tpu.dot_dimension_numbers<[1], [0], [0], [1], [0, 0, 1, 1], [], []>} : vector<16x64xbf16>, vector<64x32xbf16>, vector<16x32xf32> -> vector<16x32xf32>
    %c0_12 = arith.constant 0 : index
    %c0_13 = arith.constant 0 : index
    %23 = vector.load %arg5[%c0_12, %c0_13] : memref<1x32xf32, #tpu.memory_space<vmem>>, vector<1x32xf32>
    %24 = vector.broadcast %23 : vector<1x32xf32> to vector<16x32xf32>
    %25 = arith.addf %22, %24 : vector<16x32xf32>
    %26 = arith.addf %25, %0 : vector<16x32xf32>
    %cst_14 = arith.constant dense<0.000000e+00> : vector<16xf32>
    %27 = vector.multi_reduction <add>, %26, %cst_14 [1] : vector<16x32xf32> to vector<16xf32>
    %28 = vector.shape_cast %27 : vector<16xf32> to vector<16x1xf32>
    %cst_15 = arith.constant 3.200000e+01 : f32
    %29 = vector.broadcast %cst_15 : f32 to vector<16x1xf32>
    %30 = arith.divf %28, %29 : vector<16x1xf32>
    %31 = vector.broadcast %30 : vector<16x1xf32> to vector<16x32xf32>
    %32 = arith.subf %26, %31 : vector<16x32xf32>
    %33 = arith.mulf %32, %32 : vector<16x32xf32>
    %cst_16 = arith.constant dense<0.000000e+00> : vector<16xf32>
    %34 = vector.multi_reduction <add>, %33, %cst_16 [1] : vector<16x32xf32> to vector<16xf32>
    %35 = vector.shape_cast %34 : vector<16xf32> to vector<16x1xf32>
    %cst_17 = arith.constant 3.200000e+01 : f32
    %36 = vector.broadcast %cst_17 : f32 to vector<16x1xf32>
    %37 = arith.divf %35, %36 : vector<16x1xf32>
    %cst_18 = arith.constant 9.99999996E-13 : f32
    %38 = vector.broadcast %cst_18 : f32 to vector<16x1xf32>
    %39 = arith.addf %37, %38 : vector<16x1xf32>
    %40 = math.rsqrt %39 : vector<16x1xf32>
    %41 = vector.broadcast %30 : vector<16x1xf32> to vector<16x32xf32>
    %42 = arith.subf %26, %41 : vector<16x32xf32>
    %43 = vector.broadcast %40 : vector<16x1xf32> to vector<16x32xf32>
    %44 = arith.mulf %42, %43 : vector<16x32xf32>
    %c0_19 = arith.constant 0 : index
    %c0_20 = arith.constant 0 : index
    %45 = vector.load %arg6[%c0_19, %c0_20] : memref<1x32xf32, #tpu.memory_space<vmem>>, vector<1x32xf32>
    %46 = vector.broadcast %45 : vector<1x32xf32> to vector<16x32xf32>
    %47 = arith.mulf %44, %46 : vector<16x32xf32>
    %c0_21 = arith.constant 0 : index
    %c0_22 = arith.constant 0 : index
    %48 = vector.load %arg7[%c0_21, %c0_22] : memref<1x32xf32, #tpu.memory_space<vmem>>, vector<1x32xf32>
    %49 = vector.broadcast %48 : vector<1x32xf32> to vector<16x32xf32>
    %50 = arith.addf %47, %49 : vector<16x32xf32>
    %c0_23 = arith.constant 0 : index
    %c0_24 = arith.constant 0 : index
    %51 = vector.load %arg8[%c0_23, %c0_24] : memref<16x32xf32, #tpu.memory_space<vmem>>, vector<16x32xf32>
    tpu.vector_store %arg8[%c0_23, %c0_24], %50 {strides = array<i32>} : memref<16x32xf32, #tpu.memory_space<vmem>>, vector<16x32xf32>,
    return
  }
  func.func @transform_0(%arg0: i32) -> (i32, i32) {
    %c0_i32 = arith.constant 0 : i32
    %c0_i32_0 = arith.constant 0 : i32
    return %arg0, %c0_i32 : i32, i32
  }
  func.func @transform_1(%arg0: i32) -> (i32, i32) {
    %c0_i32 = arith.constant 0 : i32
    %c0_i32_0 = arith.constant 0 : i32
    %c0_i32_1 = arith.constant 0 : i32
    return %c0_i32, %c0_i32_0 : i32, i32
  }
  func.func @transform_2(%arg0: i32) -> (i32, i32) {
    %c0_i32 = arith.constant 0 : i32
    %c0_i32_0 = arith.constant 0 : i32
    %c0_i32_1 = arith.constant 0 : i32
    return %c0_i32, %c0_i32_0 : i32, i32
  }
  func.func @transform_3(%arg0: i32) -> (i32, i32) {
    %c0_i32 = arith.constant 0 : i32
    %c0_i32_0 = arith.constant 0 : i32
    %c0_i32_1 = arith.constant 0 : i32
    return %c0_i32, %c0_i32_0 : i32, i32
  }
  func.func @transform_4(%arg0: i32) -> (i32, i32) {
    %c0_i32 = arith.constant 0 : i32
    %c0_i32_0 = arith.constant 0 : i32
    %c0_i32_1 = arith.constant 0 : i32
    return %c0_i32, %c0_i32_0 : i32, i32
  }
  func.func @transform_5(%arg0: i32) -> (i32, i32) {
    %c0_i32 = arith.constant 0 : i32
    %c0_i32_0 = arith.constant 0 : i32
    %c0_i32_1 = arith.constant 0 : i32
    return %c0_i32, %c0_i32_0 : i32, i32
  }
  func.func @transform_6(%arg0: i32) -> (i32, i32) {
    %c0_i32 = arith.constant 0 : i32
    %c0_i32_0 = arith.constant 0 : i32
    %c0_i32_1 = arith.constant 0 : i32
    return %c0_i32, %c0_i32_0 : i32, i32
  }
  func.func @transform_7(%arg0: i32) -> (i32, i32) {
    %c0_i32 = arith.constant 0 : i32
    %c0_i32_0 = arith.constant 0 : i32
    return %arg0, %c0_i32 : i32, i32
  }
}

module attributes {stable_mosaic.version = 11 : i64} {
  func.func @_dense_kernel(%arg0: i32, %arg1: i32, %arg2: i32, %arg3: memref<16x32xf32, #tpu.memory_space<vmem>>, %arg4: memref<32x32xbf16, #tpu.memory_space<vmem>>, %arg5: memref<1x32xf32, #tpu.memory_space<vmem>>, %arg6: memref<16x32xf32, #tpu.memory_space<vmem>>, %arg7: memref<16x32xf32, #tpu.memory_space<vmem>>) attributes {dimension_semantics = [#tpu.dimension_semantics<parallel>, #tpu.dimension_semantics<parallel>, #tpu.dimension_semantics<arbitrary>], iteration_bounds = array<i64: 1, 1, 1>, scalar_prefetch = 0 : i64, scratch_operands = 1 : i64, tpu.core_type = #tpu.core_type<tc>, window_params = [{transform_indices = @transform_0, window_bounds = array<i64: 16, 32>}, {transform_indices = @transform_1, window_bounds = array<i64: 32, 32>}, {transform_indices = @transform_2, window_bounds = array<i64: 1, 32>}, {transform_indices = @transform_3, window_bounds = array<i64: 16, 32>}]} {
    %c0_i32 = arith.constant 0 : i32
    %0 = arith.cmpi eq, %arg2, %c0_i32 : i32
    %1 = arith.extui %0 : i1 to i32
    %c0_i32_0 = arith.constant 0 : i32
    %2 = arith.cmpi ne, %1, %c0_i32_0 : i32
    scf.if %2 {
      %cst_10 = arith.constant 0.000000e+00 : f32
      %13 = vector.broadcast %cst_10 : f32 to vector<16x32xf32>
      %c0_11 = arith.constant 0 : index
      %c0_12 = arith.constant 0 : index
      %14 = vector.load %arg7[%c0_11, %c0_12] : memref<16x32xf32, #tpu.memory_space<vmem>>, vector<16x32xf32>
      tpu.vector_store %arg7[%c0_11, %c0_12], %13 {strides = array<i32>} : memref<16x32xf32, #tpu.memory_space<vmem>>, vector<16x32xf32>,
    } else {
    }
    %c0 = arith.constant 0 : index
    %c0_1 = arith.constant 0 : index
    %3 = vector.load %arg3[%c0, %c0_1] : memref<16x32xf32, #tpu.memory_space<vmem>>, vector<16x32xf32>
    %4 = arith.truncf %3 : vector<16x32xf32> to vector<16x32xbf16>
    %c0_2 = arith.constant 0 : index
    %c0_3 = arith.constant 0 : index
    %5 = vector.load %arg4[%c0_2, %c0_3] : memref<32x32xbf16, #tpu.memory_space<vmem>>, vector<32x32xbf16>
    %c0_4 = arith.constant 0 : index
    %c0_5 = arith.constant 0 : index
    %6 = vector.load %arg7[%c0_4, %c0_5] : memref<16x32xf32, #tpu.memory_space<vmem>>, vector<16x32xf32>
    %cst = arith.constant dense<0.000000e+00> : vector<16x32xf32>
    %7 = tpu.matmul %4, %5, %cst {dimension_numbers = #tpu.dot_dimension_numbers<[1], [0], [0], [1], [0, 0, 1, 1], [], []>} : vector<16x32xbf16>, vector<32x32xbf16>, vector<16x32xf32> -> vector<16x32xf32>
    %8 = arith.addf %6, %7 : vector<16x32xf32>
    %c0_6 = arith.constant 0 : index
    %c0_7 = arith.constant 0 : index
    %9 = vector.load %arg7[%c0_6, %c0_7] : memref<16x32xf32, #tpu.memory_space<vmem>>, vector<16x32xf32>
    tpu.vector_store %arg7[%c0_6, %c0_7], %8 {strides = array<i32>} : memref<16x32xf32, #tpu.memory_space<vmem>>, vector<16x32xf32>,
    %c0_i32_8 = arith.constant 0 : i32
    %10 = arith.cmpi eq, %arg2, %c0_i32_8 : i32
    %11 = arith.extui %10 : i1 to i32
    %c0_i32_9 = arith.constant 0 : i32
    %12 = arith.cmpi ne, %11, %c0_i32_9 : i32
    scf.if %12 {
      %c0_10 = arith.constant 0 : index
      %c0_11 = arith.constant 0 : index
      %13 = vector.load %arg7[%c0_10, %c0_11] : memref<16x32xf32, #tpu.memory_space<vmem>>, vector<16x32xf32>
      %c0_12 = arith.constant 0 : index
      %c0_13 = arith.constant 0 : index
      %14 = vector.load %arg5[%c0_12, %c0_13] : memref<1x32xf32, #tpu.memory_space<vmem>>, vector<1x32xf32>
      %15 = vector.broadcast %14 : vector<1x32xf32> to vector<16x32xf32>
      %16 = arith.addf %13, %15 : vector<16x32xf32>
      %17 = arith.mulf %16, %16 : vector<16x32xf32>
      %18 = arith.mulf %16, %17 : vector<16x32xf32>
      %cst_14 = arith.constant 4.471500e-02 : f32
      %19 = vector.broadcast %cst_14 : f32 to vector<16x32xf32>
      %20 = arith.mulf %19, %18 : vector<16x32xf32>
      %21 = arith.addf %16, %20 : vector<16x32xf32>
      %cst_15 = arith.constant 0.797884583 : f32
      %22 = vector.broadcast %cst_15 : f32 to vector<16x32xf32>
      %23 = arith.mulf %22, %21 : vector<16x32xf32>
      %24 = math.tanh %23 : vector<16x32xf32>
      %cst_16 = arith.constant 1.000000e+00 : f32
      %25 = vector.broadcast %cst_16 : f32 to vector<16x32xf32>
      %26 = arith.addf %25, %24 : vector<16x32xf32>
      %cst_17 = arith.constant 5.000000e-01 : f32
      %27 = vector.broadcast %cst_17 : f32 to vector<16x32xf32>
      %28 = arith.mulf %27, %26 : vector<16x32xf32>
      %29 = arith.mulf %16, %28 : vector<16x32xf32>
      %c0_18 = arith.constant 0 : index
      %c0_19 = arith.constant 0 : index
      %30 = vector.load %arg6[%c0_18, %c0_19] : memref<16x32xf32, #tpu.memory_space<vmem>>, vector<16x32xf32>
      tpu.vector_store %arg6[%c0_18, %c0_19], %29 {strides = array<i32>} : memref<16x32xf32, #tpu.memory_space<vmem>>, vector<16x32xf32>,
    } else {
    }
    return
  }
  func.func @transform_0(%arg0: i32, %arg1: i32, %arg2: i32) -> (i32, i32) {
    %c0_i32 = arith.constant 0 : i32
    return %arg0, %arg2 : i32, i32
  }
  func.func @transform_1(%arg0: i32, %arg1: i32, %arg2: i32) -> (i32, i32) {
    %c0_i32 = arith.constant 0 : i32
    return %arg2, %arg1 : i32, i32
  }
  func.func @transform_2(%arg0: i32, %arg1: i32, %arg2: i32) -> (i32, i32) {
    %c0_i32 = arith.constant 0 : i32
    %c0_i32_0 = arith.constant 0 : i32
    return %c0_i32, %arg1 : i32, i32
  }
  func.func @transform_3(%arg0: i32, %arg1: i32, %arg2: i32) -> (i32, i32) {
    %c0_i32 = arith.constant 0 : i32
    return %arg0, %arg1 : i32, i32
  }
}

module attributes {stable_mosaic.version = 11 : i64} {
  func.func @_dense_kernel(%arg0: i32, %arg1: i32, %arg2: i32, %arg3: memref<16x32xf32, #tpu.memory_space<vmem>>, %arg4: memref<128x32xbf16, #tpu.memory_space<vmem>>, %arg5: memref<1x128xf32, #tpu.memory_space<vmem>>, %arg6: memref<16x128xf32, #tpu.memory_space<vmem>>, %arg7: memref<16x128xf32, #tpu.memory_space<vmem>>) attributes {dimension_semantics = [#tpu.dimension_semantics<parallel>, #tpu.dimension_semantics<parallel>, #tpu.dimension_semantics<arbitrary>], iteration_bounds = array<i64: 1, 1, 1>, scalar_prefetch = 0 : i64, scratch_operands = 1 : i64, tpu.core_type = #tpu.core_type<tc>, window_params = [{transform_indices = @transform_0, window_bounds = array<i64: 16, 32>}, {transform_indices = @transform_1, window_bounds = array<i64: 128, 32>}, {transform_indices = @transform_2, window_bounds = array<i64: 1, 128>}, {transform_indices = @transform_3, window_bounds = array<i64: 16, 128>}]} {
    %c0_i32 = arith.constant 0 : i32
    %0 = arith.cmpi eq, %arg2, %c0_i32 : i32
    %1 = arith.extui %0 : i1 to i32
    %c0_i32_0 = arith.constant 0 : i32
    %2 = arith.cmpi ne, %1, %c0_i32_0 : i32
    scf.if %2 {
      %cst_10 = arith.constant 0.000000e+00 : f32
      %13 = vector.broadcast %cst_10 : f32 to vector<16x128xf32>
      %c0_11 = arith.constant 0 : index
      %c0_12 = arith.constant 0 : index
      %14 = vector.load %arg7[%c0_11, %c0_12] : memref<16x128xf32, #tpu.memory_space<vmem>>, vector<16x128xf32>
      tpu.vector_store %arg7[%c0_11, %c0_12], %13 {strides = array<i32>} : memref<16x128xf32, #tpu.memory_space<vmem>>, vector<16x128xf32>,
    } else {
    }
    %c0 = arith.constant 0 : index
    %c0_1 = arith.constant 0 : index
    %3 = vector.load %arg3[%c0, %c0_1] : memref<16x32xf32, #tpu.memory_space<vmem>>, vector<16x32xf32>
    %4 = arith.truncf %3 : vector<16x32xf32> to vector<16x32xbf16>
    %c0_2 = arith.constant 0 : index
    %c0_3 = arith.constant 0 : index
    %5 = vector.load %arg4[%c0_2, %c0_3] : memref<128x32xbf16, #tpu.memory_space<vmem>>, vector<128x32xbf16>
    %c0_4 = arith.constant 0 : index
    %c0_5 = arith.constant 0 : index
    %6 = vector.load %arg7[%c0_4, %c0_5] : memref<16x128xf32, #tpu.memory_space<vmem>>, vector<16x128xf32>
    %cst = arith.constant dense<0.000000e+00> : vector<16x128xf32>
    %7 = tpu.matmul %4, %5, %cst {dimension_numbers = #tpu.dot_dimension_numbers<[1], [1], [0], [0], [0, 0, 1, 0], [], []>} : vector<16x32xbf16>, vector<128x32xbf16>, vector<16x128xf32> -> vector<16x128xf32>
    %8 = arith.addf %6, %7 : vector<16x128xf32>
    %c0_6 = arith.constant 0 : index
    %c0_7 = arith.constant 0 : index
    %9 = vector.load %arg7[%c0_6, %c0_7] : memref<16x128xf32, #tpu.memory_space<vmem>>, vector<16x128xf32>
    tpu.vector_store %arg7[%c0_6, %c0_7], %8 {strides = array<i32>} : memref<16x128xf32, #tpu.memory_space<vmem>>, vector<16x128xf32>,
    %c0_i32_8 = arith.constant 0 : i32
    %10 = arith.cmpi eq, %arg2, %c0_i32_8 : i32
    %11 = arith.extui %10 : i1 to i32
    %c0_i32_9 = arith.constant 0 : i32
    %12 = arith.cmpi ne, %11, %c0_i32_9 : i32
    scf.if %12 {
      %c0_10 = arith.constant 0 : index
      %c0_11 = arith.constant 0 : index
      %13 = vector.load %arg7[%c0_10, %c0_11] : memref<16x128xf32, #tpu.memory_space<vmem>>, vector<16x128xf32>
      %c0_12 = arith.constant 0 : index
      %c0_13 = arith.constant 0 : index
      %14 = vector.load %arg5[%c0_12, %c0_13] : memref<1x128xf32, #tpu.memory_space<vmem>>, vector<1x128xf32>
      %15 = vector.broadcast %14 : vector<1x128xf32> to vector<16x128xf32>
      %16 = arith.addf %13, %15 : vector<16x128xf32>
      %c0_14 = arith.constant 0 : index
      %c0_15 = arith.constant 0 : index
      %17 = vector.load %arg6[%c0_14, %c0_15] : memref<16x128xf32, #tpu.memory_space<vmem>>, vector<16x128xf32>
      tpu.vector_store %arg6[%c0_14, %c0_15], %16 {strides = array<i32>} : memref<16x128xf32, #tpu.memory_space<vmem>>, vector<16x128xf32>,
    } else {
    }
    return
  }
  func.func @transform_0(%arg0: i32, %arg1: i32, %arg2: i32) -> (i32, i32) {
    %c0_i32 = arith.constant 0 : i32
    return %arg0, %arg2 : i32, i32
  }
  func.func @transform_1(%arg0: i32, %arg1: i32, %arg2: i32) -> (i32, i32) {
    %c0_i32 = arith.constant 0 : i32
    return %arg1, %arg2 : i32, i32
  }
  func.func @transform_2(%arg0: i32, %arg1: i32, %arg2: i32) -> (i32, i32) {
    %c0_i32 = arith.constant 0 : i32
    %c0_i32_0 = arith.constant 0 : i32
    return %c0_i32, %arg1 : i32, i32
  }
  func.func @transform_3(%arg0: i32, %arg1: i32, %arg2: i32) -> (i32, i32) {
    %c0_i32 = arith.constant 0 : i32
    return %arg0, %arg1 : i32, i32
  }
}

module attributes {stable_mosaic.version = 11 : i64} {
  func.func @_mlm_loss_kernel(%arg0: i32, %arg1: memref<16x128xf32, #tpu.memory_space<vmem>>, %arg2: memref<16x1xi32, #tpu.memory_space<vmem>>, %arg3: memref<1x1xf32, #tpu.memory_space<vmem>>, %arg4: memref<1x1xf32, #tpu.memory_space<vmem>>, %arg5: memref<1x1xf32, #tpu.memory_space<vmem>>) attributes {dimension_semantics = [#tpu.dimension_semantics<arbitrary>], iteration_bounds = array<i64: 1>, scalar_prefetch = 0 : i64, scratch_operands = 2 : i64, tpu.core_type = #tpu.core_type<tc>, window_params = [{transform_indices = @transform_0, window_bounds = array<i64: 16, 128>}, {transform_indices = @transform_1, window_bounds = array<i64: 16, 1>}, {pipeline_mode = #tpu.pipeline_mode<synchronous>, transform_indices = @transform_2, window_bounds = array<i64: 1, 1>}]} {
    %c0_i32 = arith.constant 0 : i32
    %0 = arith.cmpi eq, %arg0, %c0_i32 : i32
    %1 = arith.extui %0 : i1 to i32
    %c0_i32_0 = arith.constant 0 : i32
    %2 = arith.cmpi ne, %1, %c0_i32_0 : i32
    scf.if %2 {
      %cst_20 = arith.constant 0.000000e+00 : f32
      %46 = vector.broadcast %cst_20 : f32 to vector<1x1xf32>
      %c0_21 = arith.constant 0 : index
      %c0_22 = arith.constant 0 : index
      %47 = vector.load %arg4[%c0_21, %c0_22] : memref<1x1xf32, #tpu.memory_space<vmem>>, vector<1x1xf32>
      tpu.vector_store %arg4[%c0_21, %c0_22], %46 {strides = array<i32>} : memref<1x1xf32, #tpu.memory_space<vmem>>, vector<1x1xf32>,
      %cst_23 = arith.constant 0.000000e+00 : f32
      %48 = vector.broadcast %cst_23 : f32 to vector<1x1xf32>
      %c0_24 = arith.constant 0 : index
      %c0_25 = arith.constant 0 : index
      %49 = vector.load %arg5[%c0_24, %c0_25] : memref<1x1xf32, #tpu.memory_space<vmem>>, vector<1x1xf32>
      tpu.vector_store %arg5[%c0_24, %c0_25], %48 {strides = array<i32>} : memref<1x1xf32, #tpu.memory_space<vmem>>, vector<1x1xf32>,
    } else {
    }
    %c0 = arith.constant 0 : index
    %c0_1 = arith.constant 0 : index
    %3 = vector.load %arg1[%c0, %c0_1] : memref<16x128xf32, #tpu.memory_space<vmem>>, vector<16x128xf32>
    %c0_2 = arith.constant 0 : index
    %c0_3 = arith.constant 0 : index
    %4 = vector.load %arg2[%c0_2, %c0_3] : memref<16x1xi32, #tpu.memory_space<vmem>>, vector<16x1xi32>
    %cst = arith.constant dense<0xFF800000> : vector<16xf32>
    %5 = vector.multi_reduction <maximumf>, %3, %cst [1] : vector<16x128xf32> to vector<16xf32>
    %6 = vector.shape_cast %5 : vector<16xf32> to vector<16x1xf32>
    %7 = vector.broadcast %6 : vector<16x1xf32> to vector<16x128xf32>
    %8 = arith.subf %3, %7 : vector<16x128xf32>
    %9 = math.exp %8 : vector<16x128xf32>
    %cst_4 = arith.constant dense<0.000000e+00> : vector<16xf32>
    %10 = vector.multi_reduction <add>, %9, %cst_4 [1] : vector<16x128xf32> to vector<16xf32>
    %11 = vector.shape_cast %10 : vector<16xf32> to vector<16x1xf32>
    %12 = math.log %11 : vector<16x1xf32>
    %13 = arith.addf %12, %6 : vector<16x1xf32>
    %14 = tpu.iota {dimensions = array<i32: 1>} : vector<16x128xi32>
    %15 = vector.broadcast %4 : vector<16x1xi32> to vector<16x128xi32>
    %16 = arith.cmpi eq, %14, %15 : vector<16x128xi32>
    %cst_5 = arith.constant 0.000000e+00 : f32
    %17 = vector.broadcast %cst_5 : f32 to vector<16x128xf32>
    %18 = arith.select %16, %3, %17 : vector<16x128xi1>, vector<16x128xf32>
    %cst_6 = arith.constant dense<0.000000e+00> : vector<16xf32>
    %19 = vector.multi_reduction <add>, %18, %cst_6 [1] : vector<16x128xf32> to vector<16xf32>
    %20 = vector.shape_cast %19 : vector<16xf32> to vector<16x1xf32>
    %c0_i32_7 = arith.constant 0 : i32
    %21 = vector.broadcast %c0_i32_7 : i32 to vector<16x1xi32>
    %22 = arith.cmpi sge, %4, %21 : vector<16x1xi32>
    %23 = arith.extui %22 : vector<16x1xi1> to vector<16x1xi32>
    %24 = arith.sitofp %23 : vector<16x1xi32> to vector<16x1xf32>
    %c0_8 = arith.constant 0 : index
    %c0_9 = arith.constant 0 : index
    %25 = vector.load %arg4[%c0_8, %c0_9] : memref<1x1xf32, #tpu.memory_space<vmem>>, vector<1x1xf32>
    %26 = arith.subf %13, %20 : vector<16x1xf32>
    %27 = arith.mulf %26, %24 : vector<16x1xf32>
    %28 = vector.shape_cast %27 : vector<16x1xf32> to vector<1x16x1xf32>
    %cst_10 = arith.constant dense<0.000000e+00> : vector<1xf32>
    %29 = vector.multi_reduction <add>, %28, %cst_10 [1, 2] : vector<1x16x1xf32> to vector<1xf32>
    %30 = vector.shape_cast %29 : vector<1xf32> to vector<1x1x1xf32>
    %31 = vector.extract %30[0, 0, 0] : f32 from vector<1x1x1xf32>
    %32 = vector.broadcast %31 : f32 to vector<1x1xf32>
    %33 = arith.addf %25, %32 : vector<1x1xf32>
    %c0_11 = arith.constant 0 : index
    %c0_12 = arith.constant 0 : index
    %34 = vector.load %arg4[%c0_11, %c0_12] : memref<1x1xf32, #tpu.memory_space<vmem>>, vector<1x1xf32>
    tpu.vector_store %arg4[%c0_11, %c0_12], %33 {strides = array<i32>} : memref<1x1xf32, #tpu.memory_space<vmem>>, vector<1x1xf32>,
    %c0_13 = arith.constant 0 : index
    %c0_14 = arith.constant 0 : index
    %35 = vector.load %arg5[%c0_13, %c0_14] : memref<1x1xf32, #tpu.memory_space<vmem>>, vector<1x1xf32>
    %36 = vector.shape_cast %24 : vector<16x1xf32> to vector<1x16x1xf32>
    %cst_15 = arith.constant dense<0.000000e+00> : vector<1xf32>
    %37 = vector.multi_reduction <add>, %36, %cst_15 [1, 2] : vector<1x16x1xf32> to vector<1xf32>
    %38 = vector.shape_cast %37 : vector<1xf32> to vector<1x1x1xf32>
    %39 = vector.extract %38[0, 0, 0] : f32 from vector<1x1x1xf32>
    %40 = vector.broadcast %39 : f32 to vector<1x1xf32>
    %41 = arith.addf %35, %40 : vector<1x1xf32>
    %c0_16 = arith.constant 0 : index
    %c0_17 = arith.constant 0 : index
    %42 = vector.load %arg5[%c0_16, %c0_17] : memref<1x1xf32, #tpu.memory_space<vmem>>, vector<1x1xf32>
    tpu.vector_store %arg5[%c0_16, %c0_17], %41 {strides = array<i32>} : memref<1x1xf32, #tpu.memory_space<vmem>>, vector<1x1xf32>,
    %c0_i32_18 = arith.constant 0 : i32
    %43 = arith.cmpi eq, %arg0, %c0_i32_18 : i32
    %44 = arith.extui %43 : i1 to i32
    %c0_i32_19 = arith.constant 0 : i32
    %45 = arith.cmpi ne, %44, %c0_i32_19 : i32
    scf.if %45 {
      %c0_20 = arith.constant 0 : index
      %c0_21 = arith.constant 0 : index
      %46 = vector.load %arg4[%c0_20, %c0_21] : memref<1x1xf32, #tpu.memory_space<vmem>>, vector<1x1xf32>
      %c0_22 = arith.constant 0 : index
      %c0_23 = arith.constant 0 : index
      %47 = vector.load %arg5[%c0_22, %c0_23] : memref<1x1xf32, #tpu.memory_space<vmem>>, vector<1x1xf32>
      %cst_24 = arith.constant 1.000000e+00 : f32
      %48 = vector.broadcast %cst_24 : f32 to vector<1x1xf32>
      %49 = arith.maximumf %47, %48 : vector<1x1xf32>
      %50 = arith.divf %46, %49 : vector<1x1xf32>
      %c0_25 = arith.constant 0 : index
      %c0_26 = arith.constant 0 : index
      %51 = vector.load %arg3[%c0_25, %c0_26] : memref<1x1xf32, #tpu.memory_space<vmem>>, vector<1x1xf32>
      tpu.vector_store %arg3[%c0_25, %c0_26], %50 {strides = array<i32>} : memref<1x1xf32, #tpu.memory_space<vmem>>, vector<1x1xf32>,
    } else {
    }
    return
  }
  func.func @transform_0(%arg0: i32) -> (i32, i32) {
    %c0_i32 = arith.constant 0 : i32
    %c0_i32_0 = arith.constant 0 : i32
    return %arg0, %c0_i32 : i32, i32
  }
  func.func @transform_1(%arg0: i32) -> (i32, i32) {
    %c0_i32 = arith.constant 0 : i32
    %c0_i32_0 = arith.constant 0 : i32
    return %arg0, %c0_i32 : i32, i32
  }
  func.func @transform_2(%arg0: i32) -> (i32, i32) {
    %c0_i32 = arith.constant 0 : i32
    %c0_i32_0 = arith.constant 0 : i32
    %c0_i32_1 = arith.constant 0 : i32
    return %c0_i32, %c0_i32_0 : i32, i32
  }
}

</mosaic_0001>

<llo_original>
// kernel: bert_mlm_forward.29
$region0: #{bert_mlm_forward.29}
  #allocation0 [shape = 'u32[]', space=smem, size = 0x4, offset = 0x4, fixed_abs, tag = 'smem constant byte address 0x4 - core index']
  #allocation1 [shape = 'u32[144,128]{1,0:T(1,128)}', space=vmem, size = 0x12000, scoped, tag = 'internal scratch']
  %s0 = inlined_call_operand.vmem [shape: f32[16,32], index: 0, kind: input, shape index: {}]
  %s1 = inlined_call_operand.vmem [shape: f32[1,32], index: 1, kind: input, shape index: {}]
  %s2 = inlined_call_operand.vmem [shape: f32[1,32], index: 2, kind: input, shape index: {}]
  %s3 = inlined_call_operand.vmem [shape: f32[16,32], index: 3, kind: output, shape index: {}]
  %s4 = sld [smem:[#allocation0]]
  $region22: #{bert_mlm_forward.29} parent=0
    _
  %s6 = ssub.s32 1, %s4
  %s7 = scalar_select 0, %s6, %s4
  // Predicated region
  $region2: #{bert_mlm_forward.29} parent=0 // pred_check
    _
  $region3: #{bert_mlm_forward.29} parent=0 // pred_check_branch
    %9 = sbr.rel (0) target = $region5
  $region4: #{bert_mlm_forward.29} parent=0 // pred_region
    _
  $region5: #{bert_mlm_forward.29} parent=0 // pred_fallthru
    _
  // Predicated region
  $region6: #{bert_mlm_forward.29} parent=0 // pred_check
    _
  $region7: #{bert_mlm_forward.29} parent=0 // pred_check_branch
    %11 = sbr.rel (0) target = $region9
  $region8: #{bert_mlm_forward.29} parent=0 // pred_region
    _
  $region9: #{bert_mlm_forward.29} parent=0 // pred_fallthru
    _
  // Predicated region
  $region10: #{bert_mlm_forward.29} parent=0 // pred_check
    _
  $region11: #{bert_mlm_forward.29} parent=0 // pred_check_branch
    %13 = sbr.rel (0) target = $region13
  $region12: #{bert_mlm_forward.29} parent=0 // pred_region
    _
  $region13: #{bert_mlm_forward.29} parent=0 // pred_fallthru
    _
  %v14 = vld [vmem:[%s0] sm:$0xff]
  %v15 = vld [vmem:[%s0 + $0x8] sm:$0xff]
  %vm16 = vcmask 261120
  %v17 = vsel %vm16, %v14, 0.0
  %18 = vadd.xlane.f32.xlu0 %v17
  %v19 = vpop.xlane.xlu0 %18
  %v20 = vsel %vm16, %v15, 0.0
  %21 = vadd.xlane.f32.xlu0 %v20
  %v22 = vpop.xlane.xlu0 %21
  %v23 = vrcp.pop 32.0
  %v24 = vmul.f32 %v19, %v23
  %v25 = vmul.f32 %v22, %v23
  %v26 = vsub.f32 %v14, %v24
  %v27 = vsub.f32 %v15, %v25
  %v28 = vmul.f32 %v26, %v26
  %v29 = vmul.f32 %v27, %v27
  %v30 = vsel %vm16, %v28, 0.0
  %31 = vadd.xlane.f32.xlu0 %v30
  %v32 = vpop.xlane.xlu0 %31
  %v33 = vsel %vm16, %v29, 0.0
  %34 = vadd.xlane.f32.xlu0 %v33
  %v35 = vpop.xlane.xlu0 %34
  %v36 = vmul.f32 %v32, %v23
  %v37 = vmul.f32 %v35, %v23
  %v38 = vadd.f32 %v36, 1e-12
  %v39 = vadd.f32 %v37, 1e-12
  %v40 = vrsqrt.pop %v38
  %v41 = vrsqrt.pop %v39
  %v42 = vmul.f32 %v26, %v40
  %v43 = vmul.f32 %v27, %v41
  %v44 = vld [vmem:[%s1] sm:$0x1]
  %v46 = vlaneseq
  %v47 = vshrl.u32 %v46, 7
  %v48 = vsub.s32 0, %v47
  %v49 = vrot.slane %v44, %v48
  %v51 = vmul.f32 %v42, %v49
  %v52 = vmul.f32 %v43, %v49
  %v53 = vld [vmem:[%s2] sm:$0x1]
  %v55 = vlaneseq
  %v56 = vshrl.u32 %v55, 7
  %v57 = vsub.s32 0, %v56
  %v58 = vrot.slane %v53, %v57
  %v60 = vadd.f32 %v51, %v58
  %v61 = vadd.f32 %v52, %v58
  %62 = vst.msk [vmem:[%s3] sm:$0xff] %vm16, %v60
  %63 = vst.msk [vmem:[%s3 + $0x8] sm:$0xff] %vm16, %v61
  // Predicated region
  $region14: #{bert_mlm_forward.29} parent=0 // pred_check
    _
  $region15: #{bert_mlm_forward.29} parent=0 // pred_check_branch
    %65 = sbr.rel (0) target = $region17
  $region16: #{bert_mlm_forward.29} parent=0 // pred_region
    _
  $region17: #{bert_mlm_forward.29} parent=0 // pred_fallthru
    _
  // Predicated region
  $region18: #{bert_mlm_forward.29} parent=0 // pred_check
    _
  $region19: #{bert_mlm_forward.29} parent=0 // pred_check_branch
    %67 = sbr.rel (0) target = $region21
  $region20: #{bert_mlm_forward.29} parent=0 // pred_region
    _
  $region21: #{bert_mlm_forward.29} parent=0 // pred_fallthru
    _

// kernel: bert_mlm_forward.32
$region0: #{bert_mlm_forward.32}
  #allocation0 [shape = 'u32[]', space=smem, size = 0x4, offset = 0x4, fixed_abs, tag = 'smem constant byte address 0x4 - core index']
  #allocation1 [shape = 'u32[144,128]{1,0:T(1,128)}', space=vmem, size = 0x12000, scoped, tag = 'internal scratch']
  #allocation2 [shape = 'f32[8,32]{1,0:T(8,128)}', space=vmem, size = 0x1000, scoped, tag = 'scratch operand']
  %s0 = inlined_call_operand.vmem [shape: f32[2,4,8,8], index: 0, kind: input, shape index: {}]
  %s1 = inlined_call_operand.vmem [shape: bf16[4,8,32], index: 1, kind: input, shape index: {}]
  %s2 = inlined_call_operand.vmem [shape: f32[1,32], index: 2, kind: input, shape index: {}, may-alias: {2,5}]
  %s3 = inlined_call_operand.vmem [shape: f32[2,8,32], index: 3, kind: input, shape index: {}]
  %s4 = inlined_call_operand.vmem [shape: f32[1,32], index: 4, kind: input, shape index: {}]
  %s5 = inlined_call_operand.vmem [shape: f32[1,32], index: 5, kind: input, shape index: {}, may-alias: {2,5}]
  %s6 = inlined_call_operand.vmem [shape: f32[2,8,32], index: 6, kind: output, shape index: {}]
  %s7 = sld [smem:[#allocation0]]
  $region65: #{bert_mlm_forward.32} parent=0
    _
  %s9 = ssub.s32 1, %s7
  %s10 = scalar_select 0, %s9, %s7
  loop: start=0, step=1, limit=10
  $region2: #{bert_mlm_forward.32} parent=0 // loop_pre_header
    _
  $region3: #{bert_mlm_forward.32} parent=0 // loop_header
    %s12 = sphi 0, %s16
    %p13 = scmp.ge.s32.totalorder %s12, 10
    %s19 = sphi 0, %s31
    %s20 = sphi 0, %s27
    %s21 = sphi 0, %s19
    %s22 = sphi 0, %s20
    %s23 = sphi 0, %s21
    %s24 = sphi 0, %s22
    %s36 = sphi 0, %s38
    %s39 = sphi 0, %s36
    %s40 = sphi 0, %s39
    %s56 = sphi 0, %s40
    %s62 = sphi 0, %s64
    %s65 = sphi 0, %s62
    %s66 = sphi 0, %s65
    %s82 = sphi 0, %s66
    %s86 = sphi 0, %s86
    %s88 = sphi 0, %s86
    %s89 = sphi 0, %s88
    %s103 = sphi 0, %s89
    %s109 = sphi 0, %s111
    %s112 = sphi 0, %s109
    %s113 = sphi 0, %s112
    %s129 = sphi 0, %s113
    %s133 = sphi 0, %s133
    %s135 = sphi 0, %s133
    %s136 = sphi 0, %s135
    %s150 = sphi 0, %s136
    %s154 = sphi 0, %s154
    %s156 = sphi 0, %s154
    %s157 = sphi 0, %s156
    %s171 = sphi 0, %s157
    %s177 = sphi 0, %s179
    %s180 = sphi 0, %s177
    %s181 = sphi 0, %s180
    %s197 = sphi 0, %s181
  $region4: #{bert_mlm_forward.32} parent=0 // loop_header_branch
    %15 = sbr.rel (%p13) target = $region8
  $region5: #{bert_mlm_forward.32} parent=0 // loop_body
    %s17 = ssub.s32 %s12, 1
    %s18 = ssub.s32 %s12, 2
    %s25 = sadd.s32 1, %s20
    %p26 = scmp.ge.s32.totalorder %s25, 4
    %s27 = scalar_select %p26, 0, %s25
    %s28 = sadd.s32 1, %s19
    %s29 = scalar_select %p26, %s28, %s19
    %p30 = scmp.ge.s32.totalorder %s29, 2
    %s31 = scalar_select %p30, 0, %s29
    %s32 = ssub.s32 %s19, %s31
    %s33 = ssub.s32 %s20, %s27
    %s34 = sor.u32 %s32, %s33
    %p35 = scmp.eq.s32.totalorder %s34, 0
    %s37 = sadd.s32 %s36, 1
    %s38 = scalar_select %p35, %s36, %s37
    %p41 = pneg %p35
    %p42 = scmp.eq.s32.totalorder %s12, 7
    %p43 = por %p41, %p42
    %p44 = scmp.ne.s32.totalorder %s36, %s39
    %p45 = scmp.eq.s32.totalorder %s12, 0
    %p46 = por %p44, %p45
    %p47 = scmp.ne.s32.totalorder %s36, %s39
    %p48 = scmp.eq.s32.totalorder %s17, 7
    %p49 = por %p47, %p48
    %p50 = scmp.ne.s32.totalorder %s39, %s40
    %p51 = scmp.eq.s32.totalorder %s17, 0
    %p52 = por %p50, %p51
    %p53 = scmp.ne.s32.totalorder %s39, %s40
    %p54 = scmp.eq.s32.totalorder %s18, 7
    %p55 = por %p53, %p54
    %p57 = scmp.ne.s32.totalorder %s40, %s56
    %p58 = scmp.eq.s32.totalorder %s18, 0
    %p59 = por %p57, %p58
    %s60 = ssub.s32 %s20, %s27
    %p61 = scmp.eq.s32.totalorder %s60, 0
    %s63 = sadd.s32 %s62, 1
    %s64 = scalar_select %p61, %s62, %s63
    %p67 = pneg %p61
    %p68 = scmp.eq.s32.totalorder %s12, 7
    %p69 = por %p67, %p68
    %p70 = scmp.ne.s32.totalorder %s62, %s65
    %p71 = scmp.eq.s32.totalorder %s12, 0
    %p72 = por %p70, %p71
    %p73 = scmp.ne.s32.totalorder %s62, %s65
    %p74 = scmp.eq.s32.totalorder %s17, 7
    %p75 = por %p73, %p74
    %p76 = scmp.ne.s32.totalorder %s65, %s66
    %p77 = scmp.eq.s32.totalorder %s17, 0
    %p78 = por %p76, %p77
    %p79 = scmp.ne.s32.totalorder %s65, %s66
    %p80 = scmp.eq.s32.totalorder %s18, 7
    %p81 = por %p79, %p80
    %p83 = scmp.ne.s32.totalorder %s66, %s82
    %p84 = scmp.eq.s32.totalorder %s18, 0
    %p85 = por %p83, %p84
    %s87 = sadd.s32 %s86, 1
    %p90 = scmp.eq.s32.totalorder %s12, 7
    %p91 = scmp.ne.s32.totalorder %s86, %s88
    %p92 = scmp.eq.s32.totalorder %s12, 0
    %p93 = por %p91, %p92
    %p94 = scmp.ne.s32.totalorder %s86, %s88
    %p95 = scmp.eq.s32.totalorder %s17, 7
    %p96 = por %p94, %p95
    %p97 = scmp.ne.s32.totalorder %s88, %s89
    %p98 = scmp.eq.s32.totalorder %s17, 0
    %p99 = por %p97, %p98
    %p100 = scmp.ne.s32.totalorder %s88, %s89
    %p101 = scmp.eq.s32.totalorder %s18, 7
    %p102 = por %p100, %p101
    %p104 = scmp.ne.s32.totalorder %s89, %s103
    %p105 = scmp.eq.s32.totalorder %s18, 0
    %p106 = por %p104, %p105
    %s107 = ssub.s32 %s19, %s31
    %p108 = scmp.eq.s32.totalorder %s107, 0
    %s110 = sadd.s32 %s109, 1
    %s111 = scalar_select %p108, %s109, %s110
    %p114 = pneg %p108
    %p115 = scmp.eq.s32.totalorder %s12, 7
    %p116 = por %p114, %p115
    %p117 = scmp.ne.s32.totalorder %s109, %s112
    %p118 = scmp.eq.s32.totalorder %s12, 0
    %p119 = por %p117, %p118
    %p120 = scmp.ne.s32.totalorder %s109, %s112
    %p121 = scmp.eq.s32.totalorder %s17, 7
    %p122 = por %p120, %p121
    %p123 = scmp.ne.s32.totalorder %s112, %s113
    %p124 = scmp.eq.s32.totalorder %s17, 0
    %p125 = por %p123, %p124
    %p126 = scmp.ne.s32.totalorder %s112, %s113
    %p127 = scmp.eq.s32.totalorder %s18, 7
    %p128 = por %p126, %p127
    %p130 = scmp.ne.s32.totalorder %s113, %s129
    %p131 = scmp.eq.s32.totalorder %s18, 0
    %p132 = por %p130, %p131
    %s134 = sadd.s32 %s133, 1
    %p137 = scmp.eq.s32.totalorder %s12, 7
    %p138 = scmp.ne.s32.totalorder %s133, %s135
    %p139 = scmp.eq.s32.totalorder %s12, 0
    %p140 = por %p138, %p139
    %p141 = scmp.ne.s32.totalorder %s133, %s135
    %p142 = scmp.eq.s32.totalorder %s17, 7
    %p143 = por %p141, %p142
    %p144 = scmp.ne.s32.totalorder %s135, %s136
    %p145 = scmp.eq.s32.totalorder %s17, 0
    %p146 = por %p144, %p145
    %p147 = scmp.ne.s32.totalorder %s135, %s136
    %p148 = scmp.eq.s32.totalorder %s18, 7
    %p149 = por %p147, %p148
    %p151 = scmp.ne.s32.totalorder %s136, %s150
    %p152 = scmp.eq.s32.totalorder %s18, 0
    %p153 = por %p151, %p152
    %s155 = sadd.s32 %s154, 1
    %p158 = scmp.eq.s32.totalorder %s12, 7
    %p159 = scmp.ne.s32.totalorder %s154, %s156
    %p160 = scmp.eq.s32.totalorder %s12, 0
    %p161 = por %p159, %p160
    %p162 = scmp.ne.s32.totalorder %s154, %s156
    %p163 = scmp.eq.s32.totalorder %s17, 7
    %p164 = por %p162, %p163
    %p165 = scmp.ne.s32.totalorder %s156, %s157
    %p166 = scmp.eq.s32.totalorder %s17, 0
    %p167 = por %p165, %p166
    %p168 = scmp.ne.s32.totalorder %s156, %s157
    %p169 = scmp.eq.s32.totalorder %s18, 7
    %p170 = por %p168, %p169
    %p172 = scmp.ne.s32.totalorder %s157, %s171
    %p173 = scmp.eq.s32.totalorder %s18, 0
    %p174 = por %p172, %p173
    %s175 = ssub.s32 %s19, %s31
    %p176 = scmp.eq.s32.totalorder %s175, 0
    %s178 = sadd.s32 %s177, 1
    %s179 = scalar_select %p176, %s177, %s178
    %p182 = pneg %p176
    %p183 = scmp.eq.s32.totalorder %s12, 7
    %p184 = por %p182, %p183
    %p185 = scmp.ne.s32.totalorder %s177, %s180
    %p186 = scmp.eq.s32.totalorder %s12, 0
    %p187 = por %p185, %p186
    %p188 = scmp.ne.s32.totalorder %s177, %s180
    %p189 = scmp.eq.s32.totalorder %s17, 7
    %p190 = por %p188, %p189
    %p191 = scmp.ne.s32.totalorder %s180, %s181
    %p192 = scmp.eq.s32.totalorder %s17, 0
    %p193 = por %p191, %p192
    %p194 = scmp.ne.s32.totalorder %s180, %s181
    %p195 = scmp.eq.s32.totalorder %s18, 7
    %p196 = por %p194, %p195
    %p198 = scmp.ne.s32.totalorder %s181, %s197
    %p199 = scmp.eq.s32.totalorder %s18, 0
    %p200 = por %p198, %p199
    %p201 = scmp.le.s32.totalorder 1, %s12
    %p202 = scmp.lt.s32.totalorder %s12, 9
    %p203 = pnand %p201, %p202
    %p204 = pneg %p203
    // Predicated region
    $region9: #{bert_mlm_forward.32} parent=5 // pred_check
      _
    $region10: #{bert_mlm_forward.32} parent=5 // pred_check_branch
      %206 = sbr.rel (%p203) target = $region12
    $region11: #{bert_mlm_forward.32} parent=5 // pred_region
      %s207 = ssub.s32 %s12, 1
      // Predicated region
      $region13: #{bert_mlm_forward.32} parent=11 // pred_check
        %p208 = pneg %p99
      $region14: #{bert_mlm_forward.32} parent=11 // pred_check_branch
        %210 = sbr.rel (%p208) target = $region16
      $region15: #{bert_mlm_forward.32} parent=11 // pred_region
        _
      $region16: #{bert_mlm_forward.32} parent=11 // pred_fallthru
        _
      // Predicated region
      $region17: #{bert_mlm_forward.32} parent=11 // pred_check
        %p211 = pneg %p146
      $region18: #{bert_mlm_forward.32} parent=11 // pred_check_branch
        %213 = sbr.rel (%p211) target = $region20
      $region19: #{bert_mlm_forward.32} parent=11 // pred_region
        _
      $region20: #{bert_mlm_forward.32} parent=11 // pred_fallthru
        _
      // Predicated region
      $region21: #{bert_mlm_forward.32} parent=11 // pred_check
        %p214 = pneg %p167
      $region22: #{bert_mlm_forward.32} parent=11 // pred_check_branch
        %216 = sbr.rel (%p214) target = $region24
      $region23: #{bert_mlm_forward.32} parent=11 // pred_region
        _
      $region24: #{bert_mlm_forward.32} parent=11 // pred_fallthru
        _
    $region12: #{bert_mlm_forward.32} parent=5 // pred_fallthru
      _
    %p217 = scmp.lt.s32.totalorder %s12, 8
    // Predicated region
    $region25: #{bert_mlm_forward.32} parent=5 // pred_check
      %p218 = pneg %p217
    $region26: #{bert_mlm_forward.32} parent=5 // pred_check_branch
      %220 = sbr.rel (%p218) target = $region28
    $region27: #{bert_mlm_forward.32} parent=5 // pred_region
      // Predicated region
      $region29: #{bert_mlm_forward.32} parent=27 // pred_check
        %p221 = pneg %p46
      $region30: #{bert_mlm_forward.32} parent=27 // pred_check_branch
        %223 = sbr.rel (%p221) target = $region32
      $region31: #{bert_mlm_forward.32} parent=27 // pred_region
        %p224 = scmp.lt.s32.totalorder %s19, 1
        %s225 = scalar_select %p224, %s19, 1
        %p226 = scmp.lt.s32.totalorder %s20, 3
        %s227 = scalar_select %p226, %s20, 3
        %s228 = smul.addr %s225, 4
        %s229 = sadd.s32 %s227, %s228
        %s230 = smul.addr %s229, 8
        %s231 = scalar_lea.vmem %s0, %s230
      $region32: #{bert_mlm_forward.32} parent=27 // pred_fallthru
        _
      // Predicated region
      $region33: #{bert_mlm_forward.32} parent=27 // pred_check
        %p232 = pneg %p72
      $region34: #{bert_mlm_forward.32} parent=27 // pred_check_branch
        %234 = sbr.rel (%p232) target = $region36
      $region35: #{bert_mlm_forward.32} parent=27 // pred_region
        %p235 = scmp.lt.s32.totalorder %s20, 3
        %s236 = scalar_select %p235, %s20, 3
        %s237 = smul.addr %s236, 4
        %s238 = scalar_lea.vmem %s1, %s237
      $region36: #{bert_mlm_forward.32} parent=27 // pred_fallthru
        _
      // Predicated region
      $region37: #{bert_mlm_forward.32} parent=27 // pred_check
        %p239 = pneg %p119
      $region38: #{bert_mlm_forward.32} parent=27 // pred_check_branch
        %241 = sbr.rel (%p239) target = $region40
      $region39: #{bert_mlm_forward.32} parent=27 // pred_region
        %p242 = scmp.lt.s32.totalorder %s19, 1
        %s243 = scalar_select %p242, %s19, 1
        %s244 = smul.addr %s243, 8
        %s245 = scalar_lea.vmem %s3, %s244
      $region40: #{bert_mlm_forward.32} parent=27 // pred_fallthru
        _
    $region28: #{bert_mlm_forward.32} parent=5 // pred_fallthru
      _
    %p246 = scmp.le.s32.totalorder 1, %s12
    %p247 = scmp.lt.s32.totalorder %s12, 9
    %p248 = pnand %p246, %p247
    %p249 = pneg %p248
    // Predicated region
    $region41: #{bert_mlm_forward.32} parent=5 // pred_check
      _
    $region42: #{bert_mlm_forward.32} parent=5 // pred_check_branch
      %251 = sbr.rel (%p248) target = $region44
    $region43: #{bert_mlm_forward.32} parent=5 // pred_region
      %s252 = ssub.s32 %s12, 1
      %p253 = scmp.lt.s32.totalorder %s21, 1
      %s254 = scalar_select %p253, %s21, 1
      %p255 = scmp.lt.s32.totalorder %s22, 3
      %s256 = scalar_select %p255, %s22, 3
      %s257 = smul.addr %s254, 4
      %s258 = sadd.s32 %s256, %s257
      %s259 = smul.addr %s258, 8
      %s260 = scalar_lea.vmem %s0, %s259
      %p261 = pneg %p52
      %p262 = pneg %p49
      %p263 = scmp.lt.s32.totalorder %s22, 3
      %s264 = scalar_select %p263, %s22, 3
      %s265 = smul.addr %s264, 4
      %s266 = scalar_lea.vmem %s1, %s265
      %p267 = pneg %p78
      %p268 = pneg %p75
      %p269 = pneg %p99
      %p270 = pneg %p96
      %p271 = scmp.lt.s32.totalorder %s21, 1
      %s272 = scalar_select %p271, %s21, 1
      %s273 = smul.addr %s272, 8
      %s274 = scalar_lea.vmem %s3, %s273
      %p275 = pneg %p125
      %p276 = pneg %p122
      %p277 = pneg %p146
      %p278 = pneg %p143
      %p279 = pneg %p167
      %p280 = pneg %p164
      %p281 = pneg %p193
      %p282 = pneg %p190
      %p283 = scmp.lt.s32.totalorder %s21, 1
      %s284 = scalar_select %p283, %s21, 1
      %s285 = smul.addr %s284, 8
      %s286 = scalar_lea.vmem %s6, %s285
      %p287 = scmp.lt.s32.totalorder %s21, 1
      %s288 = scalar_select %p287, %s21, 1
      %p289 = scmp.lt.s32.totalorder %s22, 3
      %s290 = scalar_select %p289, %s22, 3
      %s291 = smul.addr %s288, 4
      %s292 = sadd.s32 %s290, %s291
      %s293 = smul.addr %s292, 8
      %s294 = scalar_lea.vmem %s0, %s293
      %p295 = scmp.lt.s32.totalorder %s22, 3
      %s296 = scalar_select %p295, %s22, 3
      %s297 = smul.addr %s296, 4
      %s298 = scalar_lea.vmem %s1, %s297
      %p299 = scmp.lt.s32.totalorder %s21, 1
      %s300 = scalar_select %p299, %s21, 1
      %s301 = smul.addr %s300, 8
      %s302 = scalar_lea.vmem %s3, %s301
      %p303 = scmp.lt.s32.totalorder %s21, 1
      %s304 = scalar_select %p303, %s21, 1
      %s305 = smul.addr %s304, 8
      %s306 = scalar_lea.vmem %s6, %s305
      %p308 = scmp.eq.s32.totalorder %s22, 0
      // Predicated region
      $region45: #{bert_mlm_forward.32} parent=43 // pred_check
        %p309 = pneg %p308
      $region46: #{bert_mlm_forward.32} parent=43 // pred_check_branch
        %311 = sbr.rel (%p309) target = $region48
      $region47: #{bert_mlm_forward.32} parent=43 // pred_region
        %vm312 = vcmask 261120
        %313 = vst.msk [vmem:[#allocation2] sm:$0xff] %vm312, 0.0
      $region48: #{bert_mlm_forward.32} parent=43 // pred_fallthru
        _
      %v314 = vld [vmem:[#allocation2] sm:$0xff]
      %v315 = vld [vmem:[%s294] sm:$0xff]
      %v316 = vpack.c.bf16 %v315, %v315
      %v317 = vld [vmem:[%s298] sm:$0xf]
      %vm318 = vcmask 64512
      %v320 = vsel %vm318, %v316, 0
      %vm322 = vcmask 1043456
      %v324 = vsel %vm322, %v317, 0
      %326 = vmatprep.subr.bf16.mxu0 0
      %327 = vmatpush1.bf16.msra.mxu0 %v324
      %328 = vmatprep.subr.bf16.mxu0 0
      %329 = vmatpush1.bf16.msra.mxu0 0
      %330 = vmatprep.subr.bf16.mxu0 0
      %331 = vmatpush1.bf16.msra.mxu0 0
      %332 = vmatprep.subr.bf16.mxu0 0
      %333 = vmatpush1.bf16.msra.mxu0 0
      %334 = vmatprep.subr.bf16.mxu0 0
      %335 = vmatpush1.bf16.msra.mxu0 0
      %336 = vmatprep.subr.bf16.mxu0 0
      %337 = vmatpush1.bf16.msra.mxu0 0
      %338 = vmatprep.subr.bf16.mxu0 0
      %339 = vmatpush1.bf16.msra.mxu0 0
      %340 = vmatprep.subr.bf16.mxu0 0
      %341 = vmatpush1.bf16.msra.mxu0 0
      %342 = vmatprep.subr.bf16.mxu0 0
      %343 = vmatpush1.bf16.msra.mxu0 0
      %344 = vmatprep.subr.bf16.mxu0 0
      %345 = vmatpush1.bf16.msra.mxu0 0
      %346 = vmatprep.subr.bf16.mxu0 0
      %347 = vmatpush1.bf16.msra.mxu0 0
      %348 = vmatprep.subr.bf16.mxu0 0
      %349 = vmatpush1.bf16.msra.mxu0 0
      %350 = vmatprep.subr.bf16.mxu0 0
      %351 = vmatpush1.bf16.msra.mxu0 0
      %352 = vmatprep.subr.bf16.mxu0 0
      %353 = vmatpush1.bf16.msra.mxu0 0
      %354 = vmatprep.subr.bf16.mxu0 0
      %355 = vmatpush1.bf16.msra.mxu0 0
      %356 = vmatprep.subr.bf16.mxu0 0
      %357 = vmatpush1.bf16.msra.mxu0 0
      %358 = vmatprep.mubr.bf16.mxu0 0
      %359 = vmatmul.mubr.bf16.gmra.mrb[0].mxu0 %v320
      %v360 = vpop.f32.mrb[0].mxu0
      %v361 = vadd.f32 0.0, %v360
      %v362 = vpop.f32.mrb[0].mxu0
      %v363 = vpop.f32.mrb[0].mxu0
      %v364 = vpop.f32.mrb[0].mxu0
      %365 = vdwg.mxu0
      %v366 = vadd.f32 %v314, %v361
      %vm367 = vcmask 261120
      %368 = vst.msk [vmem:[#allocation2] sm:$0xff] %vm367, %v366
      %p369 = scmp.eq.s32.totalorder %s22, 3
      // Predicated region
      $region49: #{bert_mlm_forward.32} parent=43 // pred_check
        %p370 = pneg %p369
      $region50: #{bert_mlm_forward.32} parent=43 // pred_check_branch
        %372 = sbr.rel (%p370) target = $region52
      $region51: #{bert_mlm_forward.32} parent=43 // pred_region
        %v373 = vld [vmem:[#allocation2] sm:$0xff]
        %v374 = vld [vmem:[%s2] sm:$0x1]
        %v376 = vlaneseq
        %v377 = vshrl.u32 %v376, 7
        %v378 = vsub.s32 0, %v377
        %v379 = vrot.slane %v374, %v378
        %v381 = vadd.f32 %v373, %v379
        %v382 = vld [vmem:[%s302] sm:$0xff]
        %v383 = vadd.f32 %v381, %v382
        %v384 = vsel %vm367, %v383, 0.0
        %385 = vadd.xlane.f32.xlu0 %v384
        %v386 = vpop.xlane.xlu0 %385
        %v387 = vrcp.pop 32.0
        %v388 = vmul.f32 %v386, %v387
        %v389 = vsub.f32 %v383, %v388
        %v390 = vmul.f32 %v389, %v389
        %v391 = vsel %vm367, %v390, 0.0
        %392 = vadd.xlane.f32.xlu0 %v391
        %v393 = vpop.xlane.xlu0 %392
        %v394 = vmul.f32 %v393, %v387
        %v395 = vadd.f32 %v394, 1e-12
        %v396 = vrsqrt.pop %v395
        %v397 = vmul.f32 %v389, %v396
        %v398 = vld [vmem:[%s4] sm:$0x1]
        %v400 = vlaneseq
        %v401 = vshrl.u32 %v400, 7
        %v402 = vsub.s32 0, %v401
        %v403 = vrot.slane %v398, %v402
        %v405 = vmul.f32 %v397, %v403
        %v406 = vld [vmem:[%s5] sm:$0x1]
        %v408 = vlaneseq
        %v409 = vshrl.u32 %v408, 7
        %v410 = vsub.s32 0, %v409
        %v411 = vrot.slane %v406, %v410
        %v413 = vadd.f32 %v405, %v411
        %414 = vst.msk [vmem:[%s306] sm:$0xff] %vm367, %v413
      $region52: #{bert_mlm_forward.32} parent=43 // pred_fallthru
        _
      %p415 = scmp.lt.s32.totalorder %s21, 1
      %s416 = scalar_select %p415, %s21, 1
      %s417 = smul.addr %s416, 8
      %s418 = scalar_lea.vmem %s6, %s417
      // Predicated region
      $region53: #{bert_mlm_forward.32} parent=43 // pred_check
        %p419 = pneg %p190
      $region54: #{bert_mlm_forward.32} parent=43 // pred_check_branch
        %421 = sbr.rel (%p419) target = $region56
      $region55: #{bert_mlm_forward.32} parent=43 // pred_region
        _
      $region56: #{bert_mlm_forward.32} parent=43 // pred_fallthru
        _
    $region44: #{bert_mlm_forward.32} parent=5 // pred_fallthru
      _
    %p422 = scmp.le.s32.totalorder 2, %s12
    // Predicated region
    $region57: #{bert_mlm_forward.32} parent=5 // pred_check
      %p423 = pneg %p422
    $region58: #{bert_mlm_forward.32} parent=5 // pred_check_branch
      %425 = sbr.rel (%p423) target = $region60
    $region59: #{bert_mlm_forward.32} parent=5 // pred_region
      %s426 = ssub.s32 %s12, 2
      // Predicated region
      $region61: #{bert_mlm_forward.32} parent=59 // pred_check
        %p427 = pneg %p196
      $region62: #{bert_mlm_forward.32} parent=59 // pred_check_branch
        %429 = sbr.rel (%p427) target = $region64
      $region63: #{bert_mlm_forward.32} parent=59 // pred_region
        %p430 = scmp.lt.s32.totalorder %s23, 1
        %s431 = scalar_select %p430, %s23, 1
        %s432 = smul.addr %s431, 8
        %s433 = scalar_lea.vmem %s6, %s432
      $region64: #{bert_mlm_forward.32} parent=59 // pred_fallthru
        _
    $region60: #{bert_mlm_forward.32} parent=5 // pred_fallthru
      _
  $region6: #{bert_mlm_forward.32} parent=0 // loop_footer
    %s16 = sadd.s32 1, %s12
  $region7: #{bert_mlm_forward.32} parent=0 // loop_footer_branch
    %11 = sbr.rel target = $region3
  $region8: #{bert_mlm_forward.32} parent=0 // loop_exit
    _

// kernel: bert_mlm_forward.30
$region0: #{bert_mlm_forward.30}
  #allocation0 [shape = 'u32[]', space=smem, size = 0x4, offset = 0x4, fixed_abs, tag = 'smem constant byte address 0x4 - core index']
  #allocation1 [shape = 'u32[144,128]{1,0:T(1,128)}', space=vmem, size = 0x12000, scoped, tag = 'internal scratch']
  %s0 = inlined_call_operand.vmem [shape: f32[2,8,32], index: 0, kind: input, shape index: {}]
  %s1 = inlined_call_operand.vmem [shape: bf16[3,4,32,8], index: 1, kind: input, shape index: {}]
  %s2 = inlined_call_operand.vmem [shape: f32[3,4,1,8], index: 2, kind: input, shape index: {}]
  %s3 = inlined_call_operand.vmem [shape: f32[3,2,4,8,8], index: 3, kind: output, shape index: {}]
  %s4 = sld [smem:[#allocation0]]
  $region45: #{bert_mlm_forward.30} parent=0
    _
  %s6 = ssub.s32 1, %s4
  %s7 = scalar_select 0, %s6, %s4
  loop: start=0, step=1, limit=26
  $region2: #{bert_mlm_forward.30} parent=0 // loop_pre_header
    _
  $region3: #{bert_mlm_forward.30} parent=0 // loop_header
    %s9 = sphi 0, %s13
    %p10 = scmp.ge.s32.totalorder %s9, 26
    %s16 = sphi 0, %s35
    %s17 = sphi 0, %s31
    %s18 = sphi 0, %s27
    %s19 = sphi 0, %s16
    %s20 = sphi 0, %s17
    %s21 = sphi 0, %s18
    %s22 = sphi 0, %s19
    %s23 = sphi 0, %s20
    %s24 = sphi 0, %s21
    %s38 = sphi 0, %s40
    %s41 = sphi 0, %s38
    %s42 = sphi 0, %s41
    %s58 = sphi 0, %s42
    %s66 = sphi 0, %s68
    %s69 = sphi 0, %s66
    %s70 = sphi 0, %s69
    %s86 = sphi 0, %s70
    %s94 = sphi 0, %s96
    %s97 = sphi 0, %s94
    %s98 = sphi 0, %s97
    %s114 = sphi 0, %s98
    %s124 = sphi 0, %s126
    %s127 = sphi 0, %s124
    %s128 = sphi 0, %s127
    %s144 = sphi 0, %s128
  $region4: #{bert_mlm_forward.30} parent=0 // loop_header_branch
    %12 = sbr.rel (%p10) target = $region8
  $region5: #{bert_mlm_forward.30} parent=0 // loop_body
    %s14 = ssub.s32 %s9, 1
    %s15 = ssub.s32 %s9, 2
    %s25 = sadd.s32 1, %s18
    %p26 = scmp.ge.s32.totalorder %s25, 4
    %s27 = scalar_select %p26, 0, %s25
    %s28 = sadd.s32 1, %s17
    %s29 = scalar_select %p26, %s28, %s17
    %p30 = scmp.ge.s32.totalorder %s29, 3
    %s31 = scalar_select %p30, 0, %s29
    %s32 = sadd.s32 1, %s16
    %s33 = scalar_select %p30, %s32, %s16
    %p34 = scmp.ge.s32.totalorder %s33, 2
    %s35 = scalar_select %p34, 0, %s33
    %s36 = ssub.s32 %s16, %s35
    %p37 = scmp.eq.s32.totalorder %s36, 0
    %s39 = sadd.s32 %s38, 1
    %s40 = scalar_select %p37, %s38, %s39
    %p43 = pneg %p37
    %p44 = scmp.eq.s32.totalorder %s9, 23
    %p45 = por %p43, %p44
    %p46 = scmp.ne.s32.totalorder %s38, %s41
    %p47 = scmp.eq.s32.totalorder %s9, 0
    %p48 = por %p46, %p47
    %p49 = scmp.ne.s32.totalorder %s38, %s41
    %p50 = scmp.eq.s32.totalorder %s14, 23
    %p51 = por %p49, %p50
    %p52 = scmp.ne.s32.totalorder %s41, %s42
    %p53 = scmp.eq.s32.totalorder %s14, 0
    %p54 = por %p52, %p53
    %p55 = scmp.ne.s32.totalorder %s41, %s42
    %p56 = scmp.eq.s32.totalorder %s15, 23
    %p57 = por %p55, %p56
    %p59 = scmp.ne.s32.totalorder %s42, %s58
    %p60 = scmp.eq.s32.totalorder %s15, 0
    %p61 = por %p59, %p60
    %s62 = ssub.s32 %s17, %s31
    %s63 = ssub.s32 %s18, %s27
    %s64 = sor.u32 %s62, %s63
    %p65 = scmp.eq.s32.totalorder %s64, 0
    %s67 = sadd.s32 %s66, 1
    %s68 = scalar_select %p65, %s66, %s67
    %p71 = pneg %p65
    %p72 = scmp.eq.s32.totalorder %s9, 23
    %p73 = por %p71, %p72
    %p74 = scmp.ne.s32.totalorder %s66, %s69
    %p75 = scmp.eq.s32.totalorder %s9, 0
    %p76 = por %p74, %p75
    %p77 = scmp.ne.s32.totalorder %s66, %s69
    %p78 = scmp.eq.s32.totalorder %s14, 23
    %p79 = por %p77, %p78
    %p80 = scmp.ne.s32.totalorder %s69, %s70
    %p81 = scmp.eq.s32.totalorder %s14, 0
    %p82 = por %p80, %p81
    %p83 = scmp.ne.s32.totalorder %s69, %s70
    %p84 = scmp.eq.s32.totalorder %s15, 23
    %p85 = por %p83, %p84
    %p87 = scmp.ne.s32.totalorder %s70, %s86
    %p88 = scmp.eq.s32.totalorder %s15, 0
    %p89 = por %p87, %p88
    %s90 = ssub.s32 %s17, %s31
    %s91 = ssub.s32 %s18, %s27
    %s92 = sor.u32 %s90, %s91
    %p93 = scmp.eq.s32.totalorder %s92, 0
    %s95 = sadd.s32 %s94, 1
    %s96 = scalar_select %p93, %s94, %s95
    %p99 = pneg %p93
    %p100 = scmp.eq.s32.totalorder %s9, 23
    %p101 = por %p99, %p100
    %p102 = scmp.ne.s32.totalorder %s94, %s97
    %p103 = scmp.eq.s32.totalorder %s9, 0
    %p104 = por %p102, %p103
    %p105 = scmp.ne.s32.totalorder %s94, %s97
    %p106 = scmp.eq.s32.totalorder %s14, 23
    %p107 = por %p105, %p106
    %p108 = scmp.ne.s32.totalorder %s97, %s98
    %p109 = scmp.eq.s32.totalorder %s14, 0
    %p110 = por %p108, %p109
    %p111 = scmp.ne.s32.totalorder %s97, %s98
    %p112 = scmp.eq.s32.totalorder %s15, 23
    %p113 = por %p111, %p112
    %p115 = scmp.ne.s32.totalorder %s98, %s114
    %p116 = scmp.eq.s32.totalorder %s15, 0
    %p117 = por %p115, %p116
    %s118 = ssub.s32 %s17, %s31
    %s119 = ssub.s32 %s16, %s35
    %s120 = sor.u32 %s118, %s119
    %s121 = ssub.s32 %s18, %s27
    %s122 = sor.u32 %s120, %s121
    %p123 = scmp.eq.s32.totalorder %s122, 0
    %s125 = sadd.s32 %s124, 1
    %s126 = scalar_select %p123, %s124, %s125
    %p129 = pneg %p123
    %p130 = scmp.eq.s32.totalorder %s9, 23
    %p131 = por %p129, %p130
    %p132 = scmp.ne.s32.totalorder %s124, %s127
    %p133 = scmp.eq.s32.totalorder %s9, 0
    %p134 = por %p132, %p133
    %p135 = scmp.ne.s32.totalorder %s124, %s127
    %p136 = scmp.eq.s32.totalorder %s14, 23
    %p137 = por %p135, %p136
    %p138 = scmp.ne.s32.totalorder %s127, %s128
    %p139 = scmp.eq.s32.totalorder %s14, 0
    %p140 = por %p138, %p139
    %p141 = scmp.ne.s32.totalorder %s127, %s128
    %p142 = scmp.eq.s32.totalorder %s15, 23
    %p143 = por %p141, %p142
    %p145 = scmp.ne.s32.totalorder %s128, %s144
    %p146 = scmp.eq.s32.totalorder %s15, 0
    %p147 = por %p145, %p146
    %p148 = scmp.le.s32.totalorder 1, %s9
    %p149 = scmp.lt.s32.totalorder %s9, 25
    %p150 = pnand %p148, %p149
    %p151 = pneg %p150
    // Predicated region
    $region9: #{bert_mlm_forward.30} parent=5 // pred_check
      _
    $region10: #{bert_mlm_forward.30} parent=5 // pred_check_branch
      %153 = sbr.rel (%p150) target = $region12
    $region11: #{bert_mlm_forward.30} parent=5 // pred_region
      %s154 = ssub.s32 %s9, 1
    $region12: #{bert_mlm_forward.30} parent=5 // pred_fallthru
      _
    %p155 = scmp.lt.s32.totalorder %s9, 24
    // Predicated region
    $region13: #{bert_mlm_forward.30} parent=5 // pred_check
      %p156 = pneg %p155
    $region14: #{bert_mlm_forward.30} parent=5 // pred_check_branch
      %158 = sbr.rel (%p156) target = $region16
    $region15: #{bert_mlm_forward.30} parent=5 // pred_region
      // Predicated region
      $region17: #{bert_mlm_forward.30} parent=15 // pred_check
        %p159 = pneg %p48
      $region18: #{bert_mlm_forward.30} parent=15 // pred_check_branch
        %161 = sbr.rel (%p159) target = $region20
      $region19: #{bert_mlm_forward.30} parent=15 // pred_region
        %p162 = scmp.lt.s32.totalorder %s16, 1
        %s163 = scalar_select %p162, %s16, 1
        %s164 = smul.addr %s163, 8
        %s165 = scalar_lea.vmem %s0, %s164
      $region20: #{bert_mlm_forward.30} parent=15 // pred_fallthru
        _
      // Predicated region
      $region21: #{bert_mlm_forward.30} parent=15 // pred_check
        %p166 = pneg %p76
      $region22: #{bert_mlm_forward.30} parent=15 // pred_check_branch
        %168 = sbr.rel (%p166) target = $region24
      $region23: #{bert_mlm_forward.30} parent=15 // pred_region
        %p169 = scmp.lt.s32.totalorder %s17, 2
        %s170 = scalar_select %p169, %s17, 2
        %p171 = scmp.lt.s32.totalorder %s18, 3
        %s172 = scalar_select %p171, %s18, 3
        %s173 = smul.addr %s172, 4
        %s174 = smul.addr %s170, 16
        %s175 = sadd.s32 %s173, %s174
        %s176 = smul.addr %s175, 4
        %s177 = scalar_lea.vmem %s1, %s176
      $region24: #{bert_mlm_forward.30} parent=15 // pred_fallthru
        _
      // Predicated region
      $region25: #{bert_mlm_forward.30} parent=15 // pred_check
        %p178 = pneg %p104
      $region26: #{bert_mlm_forward.30} parent=15 // pred_check_branch
        %180 = sbr.rel (%p178) target = $region28
      $region27: #{bert_mlm_forward.30} parent=15 // pred_region
        %p181 = scmp.lt.s32.totalorder %s17, 2
        %s182 = scalar_select %p181, %s17, 2
        %p183 = scmp.lt.s32.totalorder %s18, 3
        %s184 = scalar_select %p183, %s18, 3
        %s185 = smul.addr %s182, 4
        %s186 = sadd.s32 %s184, %s185
        %s187 = scalar_lea.vmem %s2, %s186
      $region28: #{bert_mlm_forward.30} parent=15 // pred_fallthru
        _
    $region16: #{bert_mlm_forward.30} parent=5 // pred_fallthru
      _
    %p188 = scmp.le.s32.totalorder 1, %s9
    %p189 = scmp.lt.s32.totalorder %s9, 25
    %p190 = pnand %p188, %p189
    %p191 = pneg %p190
    // Predicated region
    $region29: #{bert_mlm_forward.30} parent=5 // pred_check
      _
    $region30: #{bert_mlm_forward.30} parent=5 // pred_check_branch
      %193 = sbr.rel (%p190) target = $region32
    $region31: #{bert_mlm_forward.30} parent=5 // pred_region
      %s194 = ssub.s32 %s9, 1
      %p195 = scmp.lt.s32.totalorder %s19, 1
      %s196 = scalar_select %p195, %s19, 1
      %s197 = smul.addr %s196, 8
      %s198 = scalar_lea.vmem %s0, %s197
      %p199 = pneg %p54
      %p200 = pneg %p51
      %p201 = scmp.lt.s32.totalorder %s20, 2
      %s202 = scalar_select %p201, %s20, 2
      %p203 = scmp.lt.s32.totalorder %s21, 3
      %s204 = scalar_select %p203, %s21, 3
      %s205 = smul.addr %s204, 4
      %s206 = smul.addr %s202, 16
      %s207 = sadd.s32 %s205, %s206
      %s208 = smul.addr %s207, 4
      %s209 = scalar_lea.vmem %s1, %s208
      %p210 = pneg %p82
      %p211 = pneg %p79
      %p212 = scmp.lt.s32.totalorder %s20, 2
      %s213 = scalar_select %p212, %s20, 2
      %p214 = scmp.lt.s32.totalorder %s21, 3
      %s215 = scalar_select %p214, %s21, 3
      %s216 = smul.addr %s213, 4
      %s217 = sadd.s32 %s215, %s216
      %s218 = scalar_lea.vmem %s2, %s217
      %p219 = pneg %p110
      %p220 = pneg %p107
      %p221 = pneg %p140
      %p222 = pneg %p137
      %p223 = scmp.lt.s32.totalorder %s20, 2
      %s224 = scalar_select %p223, %s20, 2
      %p225 = scmp.lt.s32.totalorder %s19, 1
      %s226 = scalar_select %p225, %s19, 1
      %p227 = scmp.lt.s32.totalorder %s21, 3
      %s228 = scalar_select %p227, %s21, 3
      %s229 = smul.addr %s226, 4
      %s230 = sadd.s32 %s228, %s229
      %s231 = smul.addr %s224, 8
      %s232 = sadd.s32 %s230, %s231
      %s233 = smul.addr %s232, 8
      %s234 = scalar_lea.vmem %s3, %s233
      %p235 = scmp.lt.s32.totalorder %s19, 1
      %s236 = scalar_select %p235, %s19, 1
      %s237 = smul.addr %s236, 8
      %s238 = scalar_lea.vmem %s0, %s237
      %p239 = scmp.lt.s32.totalorder %s20, 2
      %s240 = scalar_select %p239, %s20, 2
      %p241 = scmp.lt.s32.totalorder %s21, 3
      %s242 = scalar_select %p241, %s21, 3
      %s243 = smul.addr %s242, 4
      %s244 = smul.addr %s240, 16
      %s245 = sadd.s32 %s243, %s244
      %s246 = smul.addr %s245, 4
      %s247 = scalar_lea.vmem %s1, %s246
      %p248 = scmp.lt.s32.totalorder %s20, 2
      %s249 = scalar_select %p248, %s20, 2
      %p250 = scmp.lt.s32.totalorder %s21, 3
      %s251 = scalar_select %p250, %s21, 3
      %s252 = smul.addr %s249, 4
      %s253 = sadd.s32 %s251, %s252
      %s254 = scalar_lea.vmem %s2, %s253
      %p255 = scmp.lt.s32.totalorder %s20, 2
      %s256 = scalar_select %p255, %s20, 2
      %p257 = scmp.lt.s32.totalorder %s19, 1
      %s258 = scalar_select %p257, %s19, 1
      %p259 = scmp.lt.s32.totalorder %s21, 3
      %s260 = scalar_select %p259, %s21, 3
      %s261 = smul.addr %s258, 4
      %s262 = sadd.s32 %s260, %s261
      %s263 = smul.addr %s256, 8
      %s264 = sadd.s32 %s262, %s263
      %s265 = smul.addr %s264, 8
      %s266 = scalar_lea.vmem %s3, %s265
      %v268 = vld [vmem:[%s238] sm:$0xff]
      %v269 = vpack.c.bf16 %v268, %v268
      %v270 = vld [vmem:[%s247] sm:$0xf]
      %v271 = vld [vmem:[%s247 + $0x4] sm:$0xf]
      %v272 = vld [vmem:[%s247 + $0x8] sm:$0xf]
      %v273 = vld [vmem:[%s247 + $0xc] sm:$0xf]
      %v274 = vld [vmem:[%s254] sm:$0x1]
      %v276 = vlaneseq
      %v277 = vshrl.u32 %v276, 7
      %v278 = vsub.s32 0, %v277
      %v279 = vrot.slane %v274, %v278
      %v285 = vunpack.c.l.b16 %v270
      %v286 = vunpack.c.l.b16 %v271
      %v287 = vunpack.c.l.b16 %v272
      %v288 = vunpack.c.l.b16 %v273
      %v289 = vpack.c.b16 %v286, %v285
      %v290 = vpack.c.b16 %v288, %v287
      %vm293 = vcmask 261120
      %v295 = vsel %vm293, %v269, 0
      %297 = vmatprep.subr.bf16.mxu0 0
      %298 = vmatpush1.bf16.msra.mxu0 %v289
      %299 = vmatprep.subr.bf16.mxu0 0
      %300 = vmatpush1.bf16.msra.mxu0 %v290
      %301 = vmatprep.subr.bf16.mxu0 0
      %302 = vmatpush1.bf16.msra.mxu0 0
      %303 = vmatprep.subr.bf16.mxu0 0
      %304 = vmatpush1.bf16.msra.mxu0 0
      %305 = vmatprep.subr.bf16.mxu0 0
      %306 = vmatpush1.bf16.msra.mxu0 0
      %307 = vmatprep.subr.bf16.mxu0 0
      %308 = vmatpush1.bf16.msra.mxu0 0
      %309 = vmatprep.subr.bf16.mxu0 0
      %310 = vmatpush1.bf16.msra.mxu0 0
      %311 = vmatprep.subr.bf16.mxu0 0
      %312 = vmatpush1.bf16.msra.mxu0 0
      %313 = vmatprep.subr.bf16.mxu0 0
      %314 = vmatpush1.bf16.msra.mxu0 0
      %315 = vmatprep.subr.bf16.mxu0 0
      %316 = vmatpush1.bf16.msra.mxu0 0
      %317 = vmatprep.subr.bf16.mxu0 0
      %318 = vmatpush1.bf16.msra.mxu0 0
      %319 = vmatprep.subr.bf16.mxu0 0
      %320 = vmatpush1.bf16.msra.mxu0 0
      %321 = vmatprep.subr.bf16.mxu0 0
      %322 = vmatpush1.bf16.msra.mxu0 0
      %323 = vmatprep.subr.bf16.mxu0 0
      %324 = vmatpush1.bf16.msra.mxu0 0
      %325 = vmatprep.subr.bf16.mxu0 0
      %326 = vmatpush1.bf16.msra.mxu0 0
      %327 = vmatprep.subr.bf16.mxu0 0
      %328 = vmatpush1.bf16.msra.mxu0 0
      %329 = vmatprep.mubr.bf16.mxu0 0
      %330 = vmatmul.mubr.bf16.gmra.mrb[0].mxu0 %v295
      %v331 = vpop.f32.mrb[0].mxu0
      %v332 = vadd.f32 %v279, %v331
      %v333 = vpop.f32.mrb[0].mxu0
      %v334 = vpop.f32.mrb[0].mxu0
      %v335 = vpop.f32.mrb[0].mxu0
      %336 = vdwg.mxu0
      %vm337 = vcmask 64512
      %338 = vst.msk [vmem:[%s266] sm:$0xff] %vm337, %v332
      %p339 = scmp.lt.s32.totalorder %s20, 2
      %s340 = scalar_select %p339, %s20, 2
      %p341 = scmp.lt.s32.totalorder %s19, 1
      %s342 = scalar_select %p341, %s19, 1
      %p343 = scmp.lt.s32.totalorder %s21, 3
      %s344 = scalar_select %p343, %s21, 3
      %s345 = smul.addr %s342, 4
      %s346 = sadd.s32 %s344, %s345
      %s347 = smul.addr %s340, 8
      %s348 = sadd.s32 %s346, %s347
      %s349 = smul.addr %s348, 8
      %s350 = scalar_lea.vmem %s3, %s349
      // Predicated region
      $region33: #{bert_mlm_forward.30} parent=31 // pred_check
        %p351 = pneg %p137
      $region34: #{bert_mlm_forward.30} parent=31 // pred_check_branch
        %353 = sbr.rel (%p351) target = $region36
      $region35: #{bert_mlm_forward.30} parent=31 // pred_region
        _
      $region36: #{bert_mlm_forward.30} parent=31 // pred_fallthru
        _
    $region32: #{bert_mlm_forward.30} parent=5 // pred_fallthru
      _
    %p354 = scmp.le.s32.totalorder 2, %s9
    // Predicated region
    $region37: #{bert_mlm_forward.30} parent=5 // pred_check
      %p355 = pneg %p354
    $region38: #{bert_mlm_forward.30} parent=5 // pred_check_branch
      %357 = sbr.rel (%p355) target = $region40
    $region39: #{bert_mlm_forward.30} parent=5 // pred_region
      %s358 = ssub.s32 %s9, 2
      // Predicated region
      $region41: #{bert_mlm_forward.30} parent=39 // pred_check
        %p359 = pneg %p143
      $region42: #{bert_mlm_forward.30} parent=39 // pred_check_branch
        %361 = sbr.rel (%p359) target = $region44
      $region43: #{bert_mlm_forward.30} parent=39 // pred_region
        %p362 = scmp.lt.s32.totalorder %s23, 2
        %s363 = scalar_select %p362, %s23, 2
        %p364 = scmp.lt.s32.totalorder %s22, 1
        %s365 = scalar_select %p364, %s22, 1
        %p366 = scmp.lt.s32.totalorder %s24, 3
        %s367 = scalar_select %p366, %s24, 3
        %s368 = smul.addr %s365, 4
        %s369 = sadd.s32 %s367, %s368
        %s370 = smul.addr %s363, 8
        %s371 = sadd.s32 %s369, %s370
        %s372 = smul.addr %s371, 8
        %s373 = scalar_lea.vmem %s3, %s372
      $region44: #{bert_mlm_forward.30} parent=39 // pred_fallthru
        _
    $region40: #{bert_mlm_forward.30} parent=5 // pred_fallthru
      _
  $region6: #{bert_mlm_forward.30} parent=0 // loop_footer
    %s13 = sadd.s32 1, %s9
  $region7: #{bert_mlm_forward.30} parent=0 // loop_footer_branch
    %8 = sbr.rel target = $region3
  $region8: #{bert_mlm_forward.30} parent=0 // loop_exit
    _

// kernel: bert_mlm_forward.31
$region0: #{bert_mlm_forward.31}
  #allocation0 [shape = 'u32[]', space=smem, size = 0x4, offset = 0x4, fixed_abs, tag = 'smem constant byte address 0x4 - core index']
  #allocation1 [shape = 'u32[144,128]{1,0:T(1,128)}', space=vmem, size = 0x12000, scoped, tag = 'internal scratch']
  #allocation2 [shape = 'f32[8,1]{1,0:T(8,128)}', space=vmem, size = 0x1000, scoped, tag = 'scratch operand']
  #allocation3 [shape = 'f32[8,1]{1,0:T(8,128)}', space=vmem, size = 0x1000, scoped, tag = 'scratch operand']
  #allocation4 [shape = 'f32[8,8]{1,0:T(8,128)}', space=vmem, size = 0x1000, scoped, tag = 'scratch operand']
  %s0 = inlined_call_operand.vmem [shape: f32[3,2,4,8,8], index: 0, kind: input, shape index: {}, may-alias: {0,1,2}]
  %s1 = inlined_call_operand.vmem [shape: f32[3,2,4,8,8], index: 1, kind: input, shape index: {}, may-alias: {0,1,2}]
  %s2 = inlined_call_operand.vmem [shape: f32[3,2,4,8,8], index: 2, kind: input, shape index: {}, may-alias: {0,1,2}]
  %s3 = inlined_call_operand.vmem [shape: f32[2,1,8], index: 3, kind: input, shape index: {}]
  %s4 = inlined_call_operand.vmem [shape: f32[2,4,8,8], index: 4, kind: output, shape index: {}]
  %s5 = sld [smem:[#allocation0]]
  $region57: #{bert_mlm_forward.31} parent=0
    _
  %s7 = ssub.s32 1, %s5
  %s8 = scalar_select 0, %s7, %s5
  loop: start=0, step=1, limit=10
  $region2: #{bert_mlm_forward.31} parent=0 // loop_pre_header
    _
  $region3: #{bert_mlm_forward.31} parent=0 // loop_header
    %s10 = sphi 0, %s14
    %p11 = scmp.ge.s32.totalorder %s10, 10
    %s17 = sphi 0, %s43
    %s18 = sphi 0, %s39
    %s19 = sphi 0, %s35
    %s20 = sphi 0, %s31
    %s21 = sphi 0, %s17
    %s22 = sphi 0, %s18
    %s23 = sphi 0, %s19
    %s24 = sphi 0, %s20
    %s25 = sphi 0, %s21
    %s26 = sphi 0, %s22
    %s27 = sphi 0, %s23
    %s28 = sphi 0, %s24
    %s50 = sphi 0, %s52
    %s53 = sphi 0, %s50
    %s54 = sphi 0, %s53
    %s70 = sphi 0, %s54
    %s80 = sphi 0, %s82
    %s83 = sphi 0, %s80
    %s84 = sphi 0, %s83
    %s100 = sphi 0, %s84
    %s110 = sphi 0, %s112
    %s113 = sphi 0, %s110
    %s114 = sphi 0, %s113
    %s130 = sphi 0, %s114
    %s138 = sphi 0, %s140
    %s141 = sphi 0, %s138
    %s142 = sphi 0, %s141
    %s158 = sphi 0, %s142
    %s168 = sphi 0, %s170
    %s171 = sphi 0, %s168
    %s172 = sphi 0, %s171
    %s188 = sphi 0, %s172
  $region4: #{bert_mlm_forward.31} parent=0 // loop_header_branch
    %13 = sbr.rel (%p11) target = $region8
  $region5: #{bert_mlm_forward.31} parent=0 // loop_body
    %s15 = ssub.s32 %s10, 1
    %s16 = ssub.s32 %s10, 2
    %s29 = sadd.s32 1, %s20
    %p30 = scmp.ge.s32.totalorder %s29, 1
    %s31 = scalar_select %p30, 0, %s29
    %s32 = sadd.s32 1, %s19
    %s33 = scalar_select %p30, %s32, %s19
    %p34 = scmp.ge.s32.totalorder %s33, 1
    %s35 = scalar_select %p34, 0, %s33
    %s36 = sadd.s32 1, %s18
    %s37 = scalar_select %p34, %s36, %s18
    %p38 = scmp.ge.s32.totalorder %s37, 4
    %s39 = scalar_select %p38, 0, %s37
    %s40 = sadd.s32 1, %s17
    %s41 = scalar_select %p38, %s40, %s17
    %p42 = scmp.ge.s32.totalorder %s41, 2
    %s43 = scalar_select %p42, 0, %s41
    %s44 = ssub.s32 %s17, %s43
    %s45 = ssub.s32 %s18, %s39
    %s46 = sor.u32 %s44, %s45
    %s47 = ssub.s32 %s19, %s35
    %s48 = sor.u32 %s46, %s47
    %p49 = scmp.eq.s32.totalorder %s48, 0
    %s51 = sadd.s32 %s50, 1
    %s52 = scalar_select %p49, %s50, %s51
    %p55 = pneg %p49
    %p56 = scmp.eq.s32.totalorder %s10, 7
    %p57 = por %p55, %p56
    %p58 = scmp.ne.s32.totalorder %s50, %s53
    %p59 = scmp.eq.s32.totalorder %s10, 0
    %p60 = por %p58, %p59
    %p61 = scmp.ne.s32.totalorder %s50, %s53
    %p62 = scmp.eq.s32.totalorder %s15, 7
    %p63 = por %p61, %p62
    %p64 = scmp.ne.s32.totalorder %s53, %s54
    %p65 = scmp.eq.s32.totalorder %s15, 0
    %p66 = por %p64, %p65
    %p67 = scmp.ne.s32.totalorder %s53, %s54
    %p68 = scmp.eq.s32.totalorder %s16, 7
    %p69 = por %p67, %p68
    %p71 = scmp.ne.s32.totalorder %s54, %s70
    %p72 = scmp.eq.s32.totalorder %s16, 0
    %p73 = por %p71, %p72
    %s74 = ssub.s32 %s17, %s43
    %s75 = ssub.s32 %s18, %s39
    %s76 = sor.u32 %s74, %s75
    %s77 = ssub.s32 %s20, %s31
    %s78 = sor.u32 %s76, %s77
    %p79 = scmp.eq.s32.totalorder %s78, 0
    %s81 = sadd.s32 %s80, 1
    %s82 = scalar_select %p79, %s80, %s81
    %p85 = pneg %p79
    %p86 = scmp.eq.s32.totalorder %s10, 7
    %p87 = por %p85, %p86
    %p88 = scmp.ne.s32.totalorder %s80, %s83
    %p89 = scmp.eq.s32.totalorder %s10, 0
    %p90 = por %p88, %p89
    %p91 = scmp.ne.s32.totalorder %s80, %s83
    %p92 = scmp.eq.s32.totalorder %s15, 7
    %p93 = por %p91, %p92
    %p94 = scmp.ne.s32.totalorder %s83, %s84
    %p95 = scmp.eq.s32.totalorder %s15, 0
    %p96 = por %p94, %p95
    %p97 = scmp.ne.s32.totalorder %s83, %s84
    %p98 = scmp.eq.s32.totalorder %s16, 7
    %p99 = por %p97, %p98
    %p101 = scmp.ne.s32.totalorder %s84, %s100
    %p102 = scmp.eq.s32.totalorder %s16, 0
    %p103 = por %p101, %p102
    %s104 = ssub.s32 %s17, %s43
    %s105 = ssub.s32 %s18, %s39
    %s106 = sor.u32 %s104, %s105
    %s107 = ssub.s32 %s20, %s31
    %s108 = sor.u32 %s106, %s107
    %p109 = scmp.eq.s32.totalorder %s108, 0
    %s111 = sadd.s32 %s110, 1
    %s112 = scalar_select %p109, %s110, %s111
    %p115 = pneg %p109
    %p116 = scmp.eq.s32.totalorder %s10, 7
    %p117 = por %p115, %p116
    %p118 = scmp.ne.s32.totalorder %s110, %s113
    %p119 = scmp.eq.s32.totalorder %s10, 0
    %p120 = por %p118, %p119
    %p121 = scmp.ne.s32.totalorder %s110, %s113
    %p122 = scmp.eq.s32.totalorder %s15, 7
    %p123 = por %p121, %p122
    %p124 = scmp.ne.s32.totalorder %s113, %s114
    %p125 = scmp.eq.s32.totalorder %s15, 0
    %p126 = por %p124, %p125
    %p127 = scmp.ne.s32.totalorder %s113, %s114
    %p128 = scmp.eq.s32.totalorder %s16, 7
    %p129 = por %p127, %p128
    %p131 = scmp.ne.s32.totalorder %s114, %s130
    %p132 = scmp.eq.s32.totalorder %s16, 0
    %p133 = por %p131, %p132
    %s134 = ssub.s32 %s17, %s43
    %s135 = ssub.s32 %s20, %s31
    %s136 = sor.u32 %s134, %s135
    %p137 = scmp.eq.s32.totalorder %s136, 0
    %s139 = sadd.s32 %s138, 1
    %s140 = scalar_select %p137, %s138, %s139
    %p143 = pneg %p137
    %p144 = scmp.eq.s32.totalorder %s10, 7
    %p145 = por %p143, %p144
    %p146 = scmp.ne.s32.totalorder %s138, %s141
    %p147 = scmp.eq.s32.totalorder %s10, 0
    %p148 = por %p146, %p147
    %p149 = scmp.ne.s32.totalorder %s138, %s141
    %p150 = scmp.eq.s32.totalorder %s15, 7
    %p151 = por %p149, %p150
    %p152 = scmp.ne.s32.totalorder %s141, %s142
    %p153 = scmp.eq.s32.totalorder %s15, 0
    %p154 = por %p152, %p153
    %p155 = scmp.ne.s32.totalorder %s141, %s142
    %p156 = scmp.eq.s32.totalorder %s16, 7
    %p157 = por %p155, %p156
    %p159 = scmp.ne.s32.totalorder %s142, %s158
    %p160 = scmp.eq.s32.totalorder %s16, 0
    %p161 = por %p159, %p160
    %s162 = ssub.s32 %s17, %s43
    %s163 = ssub.s32 %s18, %s39
    %s164 = sor.u32 %s162, %s163
    %s165 = ssub.s32 %s19, %s35
    %s166 = sor.u32 %s164, %s165
    %p167 = scmp.eq.s32.totalorder %s166, 0
    %s169 = sadd.s32 %s168, 1
    %s170 = scalar_select %p167, %s168, %s169
    %p173 = pneg %p167
    %p174 = scmp.eq.s32.totalorder %s10, 7
    %p175 = por %p173, %p174
    %p176 = scmp.ne.s32.totalorder %s168, %s171
    %p177 = scmp.eq.s32.totalorder %s10, 0
    %p178 = por %p176, %p177
    %p179 = scmp.ne.s32.totalorder %s168, %s171
    %p180 = scmp.eq.s32.totalorder %s15, 7
    %p181 = por %p179, %p180
    %p182 = scmp.ne.s32.totalorder %s171, %s172
    %p183 = scmp.eq.s32.totalorder %s15, 0
    %p184 = por %p182, %p183
    %p185 = scmp.ne.s32.totalorder %s171, %s172
    %p186 = scmp.eq.s32.totalorder %s16, 7
    %p187 = por %p185, %p186
    %p189 = scmp.ne.s32.totalorder %s172, %s188
    %p190 = scmp.eq.s32.totalorder %s16, 0
    %p191 = por %p189, %p190
    %p192 = scmp.le.s32.totalorder 1, %s10
    %p193 = scmp.lt.s32.totalorder %s10, 9
    %p194 = pnand %p192, %p193
    %p195 = pneg %p194
    // Predicated region
    $region9: #{bert_mlm_forward.31} parent=5 // pred_check
      _
    $region10: #{bert_mlm_forward.31} parent=5 // pred_check_branch
      %197 = sbr.rel (%p194) target = $region12
    $region11: #{bert_mlm_forward.31} parent=5 // pred_region
      %s198 = ssub.s32 %s10, 1
    $region12: #{bert_mlm_forward.31} parent=5 // pred_fallthru
      _
    %p199 = scmp.lt.s32.totalorder %s10, 8
    // Predicated region
    $region13: #{bert_mlm_forward.31} parent=5 // pred_check
      %p200 = pneg %p199
    $region14: #{bert_mlm_forward.31} parent=5 // pred_check_branch
      %202 = sbr.rel (%p200) target = $region16
    $region15: #{bert_mlm_forward.31} parent=5 // pred_region
      // Predicated region
      $region17: #{bert_mlm_forward.31} parent=15 // pred_check
        %p203 = pneg %p60
      $region18: #{bert_mlm_forward.31} parent=15 // pred_check_branch
        %205 = sbr.rel (%p203) target = $region20
      $region19: #{bert_mlm_forward.31} parent=15 // pred_region
        %p206 = scmp.lt.s32.totalorder %s17, 1
        %s207 = scalar_select %p206, %s17, 1
        %p208 = scmp.lt.s32.totalorder %s18, 3
        %s209 = scalar_select %p208, %s18, 3
        %p210 = scmp.lt.s32.totalorder %s19, 0
        %s211 = scalar_select %p210, %s19, 0
        %s212 = sadd.s32 %s211, %s209
        %s213 = smul.addr %s207, 4
        %s214 = sadd.s32 %s212, %s213
        %s215 = smul.addr %s214, 8
        %s216 = scalar_lea.vmem %s0, %s215
      $region20: #{bert_mlm_forward.31} parent=15 // pred_fallthru
        _
      // Predicated region
      $region21: #{bert_mlm_forward.31} parent=15 // pred_check
        %p217 = pneg %p90
      $region22: #{bert_mlm_forward.31} parent=15 // pred_check_branch
        %219 = sbr.rel (%p217) target = $region24
      $region23: #{bert_mlm_forward.31} parent=15 // pred_region
        %p220 = scmp.lt.s32.totalorder %s17, 1
        %s221 = scalar_select %p220, %s17, 1
        %p222 = scmp.lt.s32.totalorder %s18, 3
        %s223 = scalar_select %p222, %s18, 3
        %p224 = scmp.lt.s32.totalorder %s20, 0
        %s225 = scalar_select %p224, %s20, 0
        %s226 = sadd.s32 %s225, %s223
        %s227 = smul.addr %s221, 4
        %s228 = sadd.s32 %s226, %s227
        %s229 = sadd.s32 %s228, 8
        %s230 = smul.addr %s229, 8
        %s231 = scalar_lea.vmem %s1, %s230
      $region24: #{bert_mlm_forward.31} parent=15 // pred_fallthru
        _
      // Predicated region
      $region25: #{bert_mlm_forward.31} parent=15 // pred_check
        %p232 = pneg %p120
      $region26: #{bert_mlm_forward.31} parent=15 // pred_check_branch
        %234 = sbr.rel (%p232) target = $region28
      $region27: #{bert_mlm_forward.31} parent=15 // pred_region
        %p235 = scmp.lt.s32.totalorder %s17, 1
        %s236 = scalar_select %p235, %s17, 1
        %p237 = scmp.lt.s32.totalorder %s18, 3
        %s238 = scalar_select %p237, %s18, 3
        %p239 = scmp.lt.s32.totalorder %s20, 0
        %s240 = scalar_select %p239, %s20, 0
        %s241 = sadd.s32 %s240, %s238
        %s242 = smul.addr %s236, 4
        %s243 = sadd.s32 %s241, %s242
        %s244 = sadd.s32 %s243, 16
        %s245 = smul.addr %s244, 8
        %s246 = scalar_lea.vmem %s2, %s245
      $region28: #{bert_mlm_forward.31} parent=15 // pred_fallthru
        _
      // Predicated region
      $region29: #{bert_mlm_forward.31} parent=15 // pred_check
        %p247 = pneg %p148
      $region30: #{bert_mlm_forward.31} parent=15 // pred_check_branch
        %249 = sbr.rel (%p247) target = $region32
      $region31: #{bert_mlm_forward.31} parent=15 // pred_region
        %p250 = scmp.lt.s32.totalorder %s17, 1
        %s251 = scalar_select %p250, %s17, 1
        %p252 = scmp.lt.s32.totalorder %s20, 0
        %s253 = scalar_select %p252, %s20, 0
        %s254 = sadd.s32 %s253, %s251
        %s255 = scalar_lea.vmem %s3, %s254
      $region32: #{bert_mlm_forward.31} parent=15 // pred_fallthru
        _
    $region16: #{bert_mlm_forward.31} parent=5 // pred_fallthru
      _
    %p256 = scmp.le.s32.totalorder 1, %s10
    %p257 = scmp.lt.s32.totalorder %s10, 9
    %p258 = pnand %p256, %p257
    %p259 = pneg %p258
    // Predicated region
    $region33: #{bert_mlm_forward.31} parent=5 // pred_check
      _
    $region34: #{bert_mlm_forward.31} parent=5 // pred_check_branch
      %261 = sbr.rel (%p258) target = $region36
    $region35: #{bert_mlm_forward.31} parent=5 // pred_region
      %s262 = ssub.s32 %s10, 1
      %p263 = scmp.lt.s32.totalorder %s21, 1
      %s264 = scalar_select %p263, %s21, 1
      %p265 = scmp.lt.s32.totalorder %s22, 3
      %s266 = scalar_select %p265, %s22, 3
      %p267 = scmp.lt.s32.totalorder %s23, 0
      %s268 = scalar_select %p267, %s23, 0
      %s269 = sadd.s32 %s268, %s266
      %s270 = smul.addr %s264, 4
      %s271 = sadd.s32 %s269, %s270
      %s272 = smul.addr %s271, 8
      %s273 = scalar_lea.vmem %s0, %s272
      %p274 = pneg %p66
      %p275 = pneg %p63
      %p276 = scmp.lt.s32.totalorder %s21, 1
      %s277 = scalar_select %p276, %s21, 1
      %p278 = scmp.lt.s32.totalorder %s22, 3
      %s279 = scalar_select %p278, %s22, 3
      %p280 = scmp.lt.s32.totalorder %s24, 0
      %s281 = scalar_select %p280, %s24, 0
      %s282 = sadd.s32 %s281, %s279
      %s283 = smul.addr %s277, 4
      %s284 = sadd.s32 %s282, %s283
      %s285 = sadd.s32 %s284, 8
      %s286 = smul.addr %s285, 8
      %s287 = scalar_lea.vmem %s1, %s286
      %p288 = pneg %p96
      %p289 = pneg %p93
      %p290 = scmp.lt.s32.totalorder %s21, 1
      %s291 = scalar_select %p290, %s21, 1
      %p292 = scmp.lt.s32.totalorder %s22, 3
      %s293 = scalar_select %p292, %s22, 3
      %p294 = scmp.lt.s32.totalorder %s24, 0
      %s295 = scalar_select %p294, %s24, 0
      %s296 = sadd.s32 %s295, %s293
      %s297 = smul.addr %s291, 4
      %s298 = sadd.s32 %s296, %s297
      %s299 = sadd.s32 %s298, 16
      %s300 = smul.addr %s299, 8
      %s301 = scalar_lea.vmem %s2, %s300
      %p302 = pneg %p126
      %p303 = pneg %p123
      %p304 = scmp.lt.s32.totalorder %s21, 1
      %s305 = scalar_select %p304, %s21, 1
      %p306 = scmp.lt.s32.totalorder %s24, 0
      %s307 = scalar_select %p306, %s24, 0
      %s308 = sadd.s32 %s307, %s305
      %s309 = scalar_lea.vmem %s3, %s308
      %p310 = pneg %p154
      %p311 = pneg %p151
      %p312 = pneg %p184
      %p313 = pneg %p181
      %p314 = scmp.lt.s32.totalorder %s21, 1
      %s315 = scalar_select %p314, %s21, 1
      %p316 = scmp.lt.s32.totalorder %s22, 3
      %s317 = scalar_select %p316, %s22, 3
      %p318 = scmp.lt.s32.totalorder %s23, 0
      %s319 = scalar_select %p318, %s23, 0
      %s320 = sadd.s32 %s319, %s317
      %s321 = smul.addr %s315, 4
      %s322 = sadd.s32 %s320, %s321
      %s323 = smul.addr %s322, 8
      %s324 = scalar_lea.vmem %s4, %s323
      %p325 = scmp.lt.s32.totalorder %s21, 1
      %s326 = scalar_select %p325, %s21, 1
      %p327 = scmp.lt.s32.totalorder %s22, 3
      %s328 = scalar_select %p327, %s22, 3
      %p329 = scmp.lt.s32.totalorder %s23, 0
      %s330 = scalar_select %p329, %s23, 0
      %s331 = sadd.s32 %s330, %s328
      %s332 = smul.addr %s326, 4
      %s333 = sadd.s32 %s331, %s332
      %s334 = smul.addr %s333, 8
      %s335 = scalar_lea.vmem %s0, %s334
      %p336 = scmp.lt.s32.totalorder %s21, 1
      %s337 = scalar_select %p336, %s21, 1
      %p338 = scmp.lt.s32.totalorder %s22, 3
      %s339 = scalar_select %p338, %s22, 3
      %p340 = scmp.lt.s32.totalorder %s24, 0
      %s341 = scalar_select %p340, %s24, 0
      %s342 = sadd.s32 %s341, %s339
      %s343 = smul.addr %s337, 4
      %s344 = sadd.s32 %s342, %s343
      %s345 = sadd.s32 %s344, 8
      %s346 = smul.addr %s345, 8
      %s347 = scalar_lea.vmem %s1, %s346
      %p348 = scmp.lt.s32.totalorder %s21, 1
      %s349 = scalar_select %p348, %s21, 1
      %p350 = scmp.lt.s32.totalorder %s22, 3
      %s351 = scalar_select %p350, %s22, 3
      %p352 = scmp.lt.s32.totalorder %s24, 0
      %s353 = scalar_select %p352, %s24, 0
      %s354 = sadd.s32 %s353, %s351
      %s355 = smul.addr %s349, 4
      %s356 = sadd.s32 %s354, %s355
      %s357 = sadd.s32 %s356, 16
      %s358 = smul.addr %s357, 8
      %s359 = scalar_lea.vmem %s2, %s358
      %p360 = scmp.lt.s32.totalorder %s21, 1
      %s361 = scalar_select %p360, %s21, 1
      %p362 = scmp.lt.s32.totalorder %s24, 0
      %s363 = scalar_select %p362, %s24, 0
      %s364 = sadd.s32 %s363, %s361
      %s365 = scalar_lea.vmem %s3, %s364
      %p366 = scmp.lt.s32.totalorder %s21, 1
      %s367 = scalar_select %p366, %s21, 1
      %p368 = scmp.lt.s32.totalorder %s22, 3
      %s369 = scalar_select %p368, %s22, 3
      %p370 = scmp.lt.s32.totalorder %s23, 0
      %s371 = scalar_select %p370, %s23, 0
      %s372 = sadd.s32 %s371, %s369
      %s373 = smul.addr %s367, 4
      %s374 = sadd.s32 %s372, %s373
      %s375 = smul.addr %s374, 8
      %s376 = scalar_lea.vmem %s4, %s375
      %p378 = scmp.eq.s32.totalorder %s24, 0
      // Predicated region
      $region37: #{bert_mlm_forward.31} parent=35 // pred_check
        %p379 = pneg %p378
      $region38: #{bert_mlm_forward.31} parent=35 // pred_check_branch
        %381 = sbr.rel (%p379) target = $region40
      $region39: #{bert_mlm_forward.31} parent=35 // pred_region
        %vm382 = vcmask 7168
        %383 = vst.msk [vmem:[#allocation2] sm:$0xff] %vm382, -1e+30
        %384 = vst.msk [vmem:[#allocation3] sm:$0xff] %vm382, 0.0
        %vm385 = vcmask 64512
        %386 = vst.msk [vmem:[#allocation4] sm:$0xff] %vm385, 0.0
      $region40: #{bert_mlm_forward.31} parent=35 // pred_fallthru
        _
      %v387 = vld [vmem:[%s335] sm:$0xff]
      %v388 = vpack.c.bf16 %v387, %v387
      %v389 = vld [vmem:[%s347] sm:$0xff]
      %v390 = vpack.c.bf16 %v389, %v389
      %v391 = vld [vmem:[%s359] sm:$0xff]
      %v392 = vpack.c.bf16 %v391, %v391
      %vm393 = vcmask 64512
      %v395 = vsel %vm393, %v388, 0
      %v398 = vsel %vm393, %v390, 0
      %400 = vmatprep.subr.bf16.mxu0 0
      %401 = vmatpush1.bf16.xpose.msra.mxu0 %v398
      %402 = vmatprep.subr.bf16.mxu0 0
      %403 = vmatpush1.bf16.xpose.msra.mxu0 0
      %404 = vmatprep.subr.bf16.mxu0 0
      %405 = vmatpush1.bf16.xpose.msra.mxu0 0
      %406 = vmatprep.subr.bf16.mxu0 0
      %407 = vmatpush1.bf16.xpose.msra.mxu0 0
      %408 = vmatprep.subr.bf16.mxu0 0
      %409 = vmatpush1.bf16.xpose.msra.mxu0 0
      %410 = vmatprep.subr.bf16.mxu0 0
      %411 = vmatpush1.bf16.xpose.msra.mxu0 0
      %412 = vmatprep.subr.bf16.mxu0 0
      %413 = vmatpush1.bf16.xpose.msra.mxu0 0
      %414 = vmatprep.subr.bf16.mxu0 0
      %415 = vmatpush1.bf16.xpose.msra.mxu0 0
      %416 = vmatprep.subr.bf16.mxu0 0
      %417 = vmatpush1.bf16.xpose.msra.mxu0 0
      %418 = vmatprep.subr.bf16.mxu0 0
      %419 = vmatpush1.bf16.xpose.msra.mxu0 0
      %420 = vmatprep.subr.bf16.mxu0 0
      %421 = vmatpush1.bf16.xpose.msra.mxu0 0
      %422 = vmatprep.subr.bf16.mxu0 0
      %423 = vmatpush1.bf16.xpose.msra.mxu0 0
      %424 = vmatprep.subr.bf16.mxu0 0
      %425 = vmatpush1.bf16.xpose.msra.mxu0 0
      %426 = vmatprep.subr.bf16.mxu0 0
      %427 = vmatpush1.bf16.xpose.msra.mxu0 0
      %428 = vmatprep.subr.bf16.mxu0 0
      %429 = vmatpush1.bf16.xpose.msra.mxu0 0
      %430 = vmatprep.subr.bf16.mxu0 0
      %431 = vmatpush1.bf16.xpose.msra.mxu0 0
      %432 = vmatprep.mubr.bf16.mxu0 0
      %433 = vmatmul.mubr.bf16.gmra.mrb[0].mxu0 %v395
      %v434 = vpop.f32.mrb[0].mxu0
      %v435 = vadd.f32 0.0, %v434
      %v436 = vpop.f32.mrb[0].mxu0
      %v437 = vpop.f32.mrb[0].mxu0
      %v438 = vpop.f32.mrb[0].mxu0
      %439 = vdwg.mxu0
      %v440 = vmul.f32 %v435, 0.35355338
      %v441 = vld [vmem:[%s365] sm:$0x1]
      %v443 = vlaneseq
      %v444 = vshrl.u32 %v443, 7
      %v445 = vsub.s32 0, %v444
      %v446 = vrot.slane %v441, %v445
      %v448 = vadd.f32 %v440, %v446
      %v449 = vld [vmem:[#allocation2] sm:$0xff]
      %v450 = vsel %vm393, %v448, -inf
      %451 = vmax.xlane.f32.xlu0 %v450
      %v452 = vpop.xlane.xlu0 %451
      %v453 = vmax.f32 %v449, %v452
      %v454 = vsub.f32 %v449, %v453
      %v455 = vmul.f32 %v454, 1.442695
      %v456 = vpow.pop %v455
      %458 = vset.pattern.permute.xlu0 0
      %459 = vperm.xlu0 %458, %v453
      %v460 = vpop.permute.xlu0 %459
      %v462 = vsub.f32 %v448, %v460
      %v463 = vmul.f32 %v462, 1.442695
      %v464 = vpow.pop %v463
      %v465 = vld [vmem:[#allocation3] sm:$0xff]
      %v466 = vmul.f32 %v456, %v465
      %v467 = vsel %vm393, %v464, 0.0
      %468 = vadd.xlane.f32.xlu0 %v467
      %v469 = vpop.xlane.xlu0 %468
      %v470 = vadd.f32 %v466, %v469
      %vm471 = vcmask 7168
      %472 = vst.msk [vmem:[#allocation3] sm:$0xff] %vm471, %v470
      %v473 = vld [vmem:[#allocation4] sm:$0xff]
      %475 = vset.pattern.permute.xlu0 0
      %476 = vperm.xlu0 %475, %v456
      %v477 = vpop.permute.xlu0 %476
      %v479 = vmul.f32 %v477, %v473
      %v480 = vpack.c.bf16 %v464, %v464
      %v482 = vsel %vm393, %v480, 0
      %vm484 = vcmask 1043456
      %v486 = vsel %vm484, %v392, 0
      %488 = vmatprep.subr.bf16.mxu0 0
      %489 = vmatpush1.bf16.msra.mxu0 %v486
      %490 = vmatprep.subr.bf16.mxu0 0
      %491 = vmatpush1.bf16.msra.mxu0 0
      %492 = vmatprep.subr.bf16.mxu0 0
      %493 = vmatpush1.bf16.msra.mxu0 0
      %494 = vmatprep.subr.bf16.mxu0 0
      %495 = vmatpush1.bf16.msra.mxu0 0
      %496 = vmatprep.subr.bf16.mxu0 0
      %497 = vmatpush1.bf16.msra.mxu0 0
      %498 = vmatprep.subr.bf16.mxu0 0
      %499 = vmatpush1.bf16.msra.mxu0 0
      %500 = vmatprep.subr.bf16.mxu0 0
      %501 = vmatpush1.bf16.msra.mxu0 0
      %502 = vmatprep.subr.bf16.mxu0 0
      %503 = vmatpush1.bf16.msra.mxu0 0
      %504 = vmatprep.subr.bf16.mxu0 0
      %505 = vmatpush1.bf16.msra.mxu0 0
      %506 = vmatprep.subr.bf16.mxu0 0
      %507 = vmatpush1.bf16.msra.mxu0 0
      %508 = vmatprep.subr.bf16.mxu0 0
      %509 = vmatpush1.bf16.msra.mxu0 0
      %510 = vmatprep.subr.bf16.mxu0 0
      %511 = vmatpush1.bf16.msra.mxu0 0
      %512 = vmatprep.subr.bf16.mxu0 0
      %513 = vmatpush1.bf16.msra.mxu0 0
      %514 = vmatprep.subr.bf16.mxu0 0
      %515 = vmatpush1.bf16.msra.mxu0 0
      %516 = vmatprep.subr.bf16.mxu0 0
      %517 = vmatpush1.bf16.msra.mxu0 0
      %518 = vmatprep.subr.bf16.mxu0 0
      %519 = vmatpush1.bf16.msra.mxu0 0
      %520 = vmatprep.mubr.bf16.mxu0 0
      %521 = vmatmul.mubr.bf16.gmra.mrb[0].mxu0 %v482
      %v522 = vpop.f32.mrb[0].mxu0
      %v523 = vadd.f32 0.0, %v522
      %v524 = vpop.f32.mrb[0].mxu0
      %v525 = vpop.f32.mrb[0].mxu0
      %v526 = vpop.f32.mrb[0].mxu0
      %527 = vdwg.mxu0
      %v528 = vadd.f32 %v479, %v523
      %529 = vst.msk [vmem:[#allocation4] sm:$0xff] %vm393, %v528
      %530 = vst.msk [vmem:[#allocation2] sm:$0xff] %vm471, %v453
      // Predicated region
      $region41: #{bert_mlm_forward.31} parent=35 // pred_check
        %p531 = pneg %p378
      $region42: #{bert_mlm_forward.31} parent=35 // pred_check_branch
        %533 = sbr.rel (%p531) target = $region44
      $region43: #{bert_mlm_forward.31} parent=35 // pred_region
        %v534 = vld [vmem:[#allocation4] sm:$0xff]
        %v535 = vld [vmem:[#allocation3] sm:$0xff]
        %v536 = vrcp.pop %v535
        %538 = vset.pattern.permute.xlu0 0
        %539 = vperm.xlu0 %538, %v536
        %v540 = vpop.permute.xlu0 %539
        %v542 = vmul.f32 %v534, %v540
        %543 = vst.msk [vmem:[%s376] sm:$0xff] %vm393, %v542
      $region44: #{bert_mlm_forward.31} parent=35 // pred_fallthru
        _
      %p544 = scmp.lt.s32.totalorder %s21, 1
      %s545 = scalar_select %p544, %s21, 1
      %p546 = scmp.lt.s32.totalorder %s22, 3
      %s547 = scalar_select %p546, %s22, 3
      %p548 = scmp.lt.s32.totalorder %s23, 0
      %s549 = scalar_select %p548, %s23, 0
      %s550 = sadd.s32 %s549, %s547
      %s551 = smul.addr %s545, 4
      %s552 = sadd.s32 %s550, %s551
      %s553 = smul.addr %s552, 8
      %s554 = scalar_lea.vmem %s4, %s553
      // Predicated region
      $region45: #{bert_mlm_forward.31} parent=35 // pred_check
        %p555 = pneg %p181
      $region46: #{bert_mlm_forward.31} parent=35 // pred_check_branch
        %557 = sbr.rel (%p555) target = $region48
      $region47: #{bert_mlm_forward.31} parent=35 // pred_region
        _
      $region48: #{bert_mlm_forward.31} parent=35 // pred_fallthru
        _
    $region36: #{bert_mlm_forward.31} parent=5 // pred_fallthru
      _
    %p558 = scmp.le.s32.totalorder 2, %s10
    // Predicated region
    $region49: #{bert_mlm_forward.31} parent=5 // pred_check
      %p559 = pneg %p558
    $region50: #{bert_mlm_forward.31} parent=5 // pred_check_branch
      %561 = sbr.rel (%p559) target = $region52
    $region51: #{bert_mlm_forward.31} parent=5 // pred_region
      %s562 = ssub.s32 %s10, 2
      // Predicated region
      $region53: #{bert_mlm_forward.31} parent=51 // pred_check
        %p563 = pneg %p187
      $region54: #{bert_mlm_forward.31} parent=51 // pred_check_branch
        %565 = sbr.rel (%p563) target = $region56
      $region55: #{bert_mlm_forward.31} parent=51 // pred_region
        %p566 = scmp.lt.s32.totalorder %s25, 1
        %s567 = scalar_select %p566, %s25, 1
        %p568 = scmp.lt.s32.totalorder %s26, 3
        %s569 = scalar_select %p568, %s26, 3
        %p570 = scmp.lt.s32.totalorder %s27, 0
        %s571 = scalar_select %p570, %s27, 0
        %s572 = sadd.s32 %s571, %s569
        %s573 = smul.addr %s567, 4
        %s574 = sadd.s32 %s572, %s573
        %s575 = smul.addr %s574, 8
        %s576 = scalar_lea.vmem %s4, %s575
      $region56: #{bert_mlm_forward.31} parent=51 // pred_fallthru
        _
    $region52: #{bert_mlm_forward.31} parent=5 // pred_fallthru
      _
  $region6: #{bert_mlm_forward.31} parent=0 // loop_footer
    %s14 = sadd.s32 1, %s10
  $region7: #{bert_mlm_forward.31} parent=0 // loop_footer_branch
    %9 = sbr.rel target = $region3
  $region8: #{bert_mlm_forward.31} parent=0 // loop_exit
    _

// kernel: bert_mlm_forward.33
$region0: #{bert_mlm_forward.33}
  #allocation0 [shape = 'u32[]', space=smem, size = 0x4, offset = 0x4, fixed_abs, tag = 'smem constant byte address 0x4 - core index']
  #allocation1 [shape = 'u32[144,128]{1,0:T(1,128)}', space=vmem, size = 0x12000, scoped, tag = 'internal scratch']
  %s0 = inlined_call_operand.vmem [shape: f32[16,32], index: 0, kind: input, shape index: {}]
  %s1 = inlined_call_operand.vmem [shape: bf16[32,64], index: 1, kind: input, shape index: {}]
  %s2 = inlined_call_operand.vmem [shape: f32[1,64], index: 2, kind: input, shape index: {}]
  %s3 = inlined_call_operand.vmem [shape: bf16[64,32], index: 3, kind: input, shape index: {}]
  %s4 = inlined_call_operand.vmem [shape: f32[1,32], index: 4, kind: input, shape index: {}, may-alias: {4,6}]
  %s5 = inlined_call_operand.vmem [shape: f32[1,32], index: 5, kind: input, shape index: {}]
  %s6 = inlined_call_operand.vmem [shape: f32[1,32], index: 6, kind: input, shape index: {}, may-alias: {4,6}]
  %s7 = inlined_call_operand.vmem [shape: f32[16,32], index: 7, kind: output, shape index: {}]
  %s8 = sld [smem:[#allocation0]]
  $region38: #{bert_mlm_forward.33} parent=0
    _
  %s10 = ssub.s32 1, %s8
  %s11 = scalar_select 0, %s10, %s8
  // Predicated region
  $region2: #{bert_mlm_forward.33} parent=0 // pred_check
    _
  $region3: #{bert_mlm_forward.33} parent=0 // pred_check_branch
    %13 = sbr.rel (0) target = $region5
  $region4: #{bert_mlm_forward.33} parent=0 // pred_region
    _
  $region5: #{bert_mlm_forward.33} parent=0 // pred_fallthru
    _
  // Predicated region
  $region6: #{bert_mlm_forward.33} parent=0 // pred_check
    _
  $region7: #{bert_mlm_forward.33} parent=0 // pred_check_branch
    %15 = sbr.rel (0) target = $region9
  $region8: #{bert_mlm_forward.33} parent=0 // pred_region
    _
  $region9: #{bert_mlm_forward.33} parent=0 // pred_fallthru
    _
  // Predicated region
  $region10: #{bert_mlm_forward.33} parent=0 // pred_check
    _
  $region11: #{bert_mlm_forward.33} parent=0 // pred_check_branch
    %17 = sbr.rel (0) target = $region13
  $region12: #{bert_mlm_forward.33} parent=0 // pred_region
    _
  $region13: #{bert_mlm_forward.33} parent=0 // pred_fallthru
    _
  // Predicated region
  $region14: #{bert_mlm_forward.33} parent=0 // pred_check
    _
  $region15: #{bert_mlm_forward.33} parent=0 // pred_check_branch
    %19 = sbr.rel (0) target = $region17
  $region16: #{bert_mlm_forward.33} parent=0 // pred_region
    _
  $region17: #{bert_mlm_forward.33} parent=0 // pred_fallthru
    _
  // Predicated region
  $region18: #{bert_mlm_forward.33} parent=0 // pred_check
    _
  $region19: #{bert_mlm_forward.33} parent=0 // pred_check_branch
    %21 = sbr.rel (0) target = $region21
  $region20: #{bert_mlm_forward.33} parent=0 // pred_region
    _
  $region21: #{bert_mlm_forward.33} parent=0 // pred_fallthru
    _
  // Predicated region
  $region22: #{bert_mlm_forward.33} parent=0 // pred_check
    _
  $region23: #{bert_mlm_forward.33} parent=0 // pred_check_branch
    %23 = sbr.rel (0) target = $region25
  $region24: #{bert_mlm_forward.33} parent=0 // pred_region
    _
  $region25: #{bert_mlm_forward.33} parent=0 // pred_fallthru
    _
  // Predicated region
  $region26: #{bert_mlm_forward.33} parent=0 // pred_check
    _
  $region27: #{bert_mlm_forward.33} parent=0 // pred_check_branch
    %25 = sbr.rel (0) target = $region29
  $region28: #{bert_mlm_forward.33} parent=0 // pred_region
    _
  $region29: #{bert_mlm_forward.33} parent=0 // pred_fallthru
    _
  %v27 = vld [vmem:[%s0] sm:$0xff]
  %v28 = vld [vmem:[%s0 + $0x8] sm:$0xff]
  %v29 = vpack.c.bf16 %v28, %v27
  %v30 = vld [vmem:[%s1] sm:$0xf]
  %v31 = vld [vmem:[%s1 + $0x4] sm:$0xf]
  %v32 = vld [vmem:[%s1 + $0x8] sm:$0xf]
  %v33 = vld [vmem:[%s1 + $0xc] sm:$0xf]
  %v34 = vld [vmem:[%s2] sm:$0x1]
  %v36 = vlaneseq
  %v37 = vshrl.u32 %v36, 7
  %v38 = vsub.s32 0, %v37
  %v39 = vrot.slane %v34, %v38
  %v45 = vunpack.c.l.b16 %v30
  %v46 = vunpack.c.l.b16 %v31
  %v47 = vunpack.c.l.b16 %v32
  %v48 = vunpack.c.l.b16 %v33
  %v49 = vpack.c.b16 %v46, %v45
  %v50 = vpack.c.b16 %v48, %v47
  %vm53 = vcmask 261120
  %v55 = vsel %vm53, %v29, 0
  %57 = vmatprep.subr.bf16.mxu0 0
  %58 = vmatpush1.bf16.msra.mxu0 %v49
  %59 = vmatprep.subr.bf16.mxu0 0
  %60 = vmatpush1.bf16.msra.mxu0 %v50
  %61 = vmatprep.subr.bf16.mxu0 0
  %62 = vmatpush1.bf16.msra.mxu0 0
  %63 = vmatprep.subr.bf16.mxu0 0
  %64 = vmatpush1.bf16.msra.mxu0 0
  %65 = vmatprep.subr.bf16.mxu0 0
  %66 = vmatpush1.bf16.msra.mxu0 0
  %67 = vmatprep.subr.bf16.mxu0 0
  %68 = vmatpush1.bf16.msra.mxu0 0
  %69 = vmatprep.subr.bf16.mxu0 0
  %70 = vmatpush1.bf16.msra.mxu0 0
  %71 = vmatprep.subr.bf16.mxu0 0
  %72 = vmatpush1.bf16.msra.mxu0 0
  %73 = vmatprep.subr.bf16.mxu0 0
  %74 = vmatpush1.bf16.msra.mxu0 0
  %75 = vmatprep.subr.bf16.mxu0 0
  %76 = vmatpush1.bf16.msra.mxu0 0
  %77 = vmatprep.subr.bf16.mxu0 0
  %78 = vmatpush1.bf16.msra.mxu0 0
  %79 = vmatprep.subr.bf16.mxu0 0
  %80 = vmatpush1.bf16.msra.mxu0 0
  %81 = vmatprep.subr.bf16.mxu0 0
  %82 = vmatpush1.bf16.msra.mxu0 0
  %83 = vmatprep.subr.bf16.mxu0 0
  %84 = vmatpush1.bf16.msra.mxu0 0
  %85 = vmatprep.subr.bf16.mxu0 0
  %86 = vmatpush1.bf16.msra.mxu0 0
  %87 = vmatprep.subr.bf16.mxu0 0
  %88 = vmatpush1.bf16.msra.mxu0 0
  %89 = vmatprep.mubr.bf16.mxu0 0
  %90 = vmatmul.mubr.bf16.gmra.mrb[0].mxu0 %v55
  %v91 = vpop.f32.mrb[0].mxu0
  %v92 = vadd.f32 %v39, %v91
  %v93 = vpop.f32.mrb[0].mxu0
  %v94 = vpop.f32.mrb[0].mxu0
  %v95 = vadd.f32 %v39, %v94
  %v96 = vpop.f32.mrb[0].mxu0
  %97 = vdwg.mxu0
  %v98 = vmul.f32 %v92, %v92
  %v99 = vmul.f32 %v95, %v95
  %v100 = vmul.f32 %v92, %v98
  %v101 = vmul.f32 %v95, %v99
  %v102 = vmul.f32 %v100, 0.044715
  %v103 = vmul.f32 %v101, 0.044715
  %v104 = vadd.f32 %v92, %v102
  %v105 = vadd.f32 %v95, %v103
  %v106 = vmul.f32 %v104, 0.7978846
  %v107 = vmul.f32 %v105, 0.7978846
  %v108 = vtanh.pop %v106
  %v109 = vtanh.pop %v107
  %v110 = vadd.f32 %v108, 1.0
  %v111 = vadd.f32 %v109, 1.0
  %v112 = vmul.f32 %v110, 0.5
  %v113 = vmul.f32 %v111, 0.5
  %v114 = vmul.f32 %v92, %v112
  %v115 = vmul.f32 %v95, %v113
  %v116 = vpack.c.bf16 %v115, %v114
  %v117 = vld [vmem:[%s3] sm:$0xf]
  %v118 = vld [vmem:[%s3 + $0x4] sm:$0xf]
  %v119 = vld [vmem:[%s3 + $0x8] sm:$0xf]
  %v120 = vld [vmem:[%s3 + $0xc] sm:$0xf]
  %v121 = vld [vmem:[%s3 + $0x10] sm:$0xf]
  %v122 = vld [vmem:[%s3 + $0x14] sm:$0xf]
  %v123 = vld [vmem:[%s3 + $0x18] sm:$0xf]
  %v124 = vld [vmem:[%s3 + $0x1c] sm:$0xf]
  %v125 = vld [vmem:[%s4] sm:$0x1]
  %v127 = vlaneseq
  %v128 = vshrl.u32 %v127, 7
  %v129 = vsub.s32 0, %v128
  %v130 = vrot.slane %v125, %v129
  %v140 = vunpack.c.l.b16 %v117
  %v141 = vunpack.c.l.b16 %v118
  %v142 = vunpack.c.l.b16 %v119
  %v143 = vunpack.c.l.b16 %v120
  %v144 = vunpack.c.l.b16 %v121
  %v145 = vunpack.c.l.b16 %v122
  %v146 = vunpack.c.l.b16 %v123
  %v147 = vunpack.c.l.b16 %v124
  %v148 = vpack.c.b16 %v141, %v140
  %v149 = vpack.c.b16 %v143, %v142
  %v150 = vpack.c.b16 %v145, %v144
  %v151 = vpack.c.b16 %v147, %v146
  %vm156 = vcmask 523264
  %v158 = vsel %vm156, %v116, 0
  %160 = vmatprep.subr.bf16.mxu0 0
  %161 = vmatpush1.bf16.msra.mxu0 %v148
  %162 = vmatprep.subr.bf16.mxu0 0
  %163 = vmatpush1.bf16.msra.mxu0 %v149
  %164 = vmatprep.subr.bf16.mxu0 0
  %165 = vmatpush1.bf16.msra.mxu0 %v150
  %166 = vmatprep.subr.bf16.mxu0 0
  %167 = vmatpush1.bf16.msra.mxu0 %v151
  %168 = vmatprep.subr.bf16.mxu0 0
  %169 = vmatpush1.bf16.msra.mxu0 0
  %170 = vmatprep.subr.bf16.mxu0 0
  %171 = vmatpush1.bf16.msra.mxu0 0
  %172 = vmatprep.subr.bf16.mxu0 0
  %173 = vmatpush1.bf16.msra.mxu0 0
  %174 = vmatprep.subr.bf16.mxu0 0
  %175 = vmatpush1.bf16.msra.mxu0 0
  %176 = vmatprep.subr.bf16.mxu0 0
  %177 = vmatpush1.bf16.msra.mxu0 0
  %178 = vmatprep.subr.bf16.mxu0 0
  %179 = vmatpush1.bf16.msra.mxu0 0
  %180 = vmatprep.subr.bf16.mxu0 0
  %181 = vmatpush1.bf16.msra.mxu0 0
  %182 = vmatprep.subr.bf16.mxu0 0
  %183 = vmatpush1.bf16.msra.mxu0 0
  %184 = vmatprep.subr.bf16.mxu0 0
  %185 = vmatpush1.bf16.msra.mxu0 0
  %186 = vmatprep.subr.bf16.mxu0 0
  %187 = vmatpush1.bf16.msra.mxu0 0
  %188 = vmatprep.subr.bf16.mxu0 0
  %189 = vmatpush1.bf16.msra.mxu0 0
  %190 = vmatprep.subr.bf16.mxu0 0
  %191 = vmatpush1.bf16.msra.mxu0 0
  %192 = vmatprep.mubr.bf16.mxu0 0
  %193 = vmatmul.mubr.bf16.gmra.mrb[0].mxu0 %v158
  %v194 = vpop.f32.mrb[0].mxu0
  %v195 = vadd.f32 %v130, %v194
  %v196 = vpop.f32.mrb[0].mxu0
  %v197 = vpop.f32.mrb[0].mxu0
  %v198 = vadd.f32 %v130, %v197
  %v199 = vpop.f32.mrb[0].mxu0
  %200 = vdwg.mxu0
  %v201 = vadd.f32 %v195, %v27
  %v202 = vadd.f32 %v198, %v28
  %v203 = vsel %vm53, %v201, 0.0
  %204 = vadd.xlane.f32.xlu0 %v203
  %v205 = vpop.xlane.xlu0 %204
  %v206 = vsel %vm53, %v202, 0.0
  %207 = vadd.xlane.f32.xlu0 %v206
  %v208 = vpop.xlane.xlu0 %207
  %v209 = vrcp.pop 32.0
  %v210 = vmul.f32 %v205, %v209
  %v211 = vmul.f32 %v208, %v209
  %v212 = vsub.f32 %v201, %v210
  %v213 = vsub.f32 %v202, %v211
  %v214 = vmul.f32 %v212, %v212
  %v215 = vmul.f32 %v213, %v213
  %v216 = vsel %vm53, %v214, 0.0
  %217 = vadd.xlane.f32.xlu0 %v216
  %v218 = vpop.xlane.xlu0 %217
  %v219 = vsel %vm53, %v215, 0.0
  %220 = vadd.xlane.f32.xlu0 %v219
  %v221 = vpop.xlane.xlu0 %220
  %v222 = vmul.f32 %v218, %v209
  %v223 = vmul.f32 %v221, %v209
  %v224 = vadd.f32 %v222, 1e-12
  %v225 = vadd.f32 %v223, 1e-12
  %v226 = vrsqrt.pop %v224
  %v227 = vrsqrt.pop %v225
  %v228 = vmul.f32 %v212, %v226
  %v229 = vmul.f32 %v213, %v227
  %v230 = vld [vmem:[%s5] sm:$0x1]
  %v232 = vlaneseq
  %v233 = vshrl.u32 %v232, 7
  %v234 = vsub.s32 0, %v233
  %v235 = vrot.slane %v230, %v234
  %v237 = vmul.f32 %v228, %v235
  %v238 = vmul.f32 %v229, %v235
  %v239 = vld [vmem:[%s6] sm:$0x1]
  %v241 = vlaneseq
  %v242 = vshrl.u32 %v241, 7
  %v243 = vsub.s32 0, %v242
  %v244 = vrot.slane %v239, %v243
  %v246 = vadd.f32 %v237, %v244
  %v247 = vadd.f32 %v238, %v244
  %248 = vst.msk [vmem:[%s7] sm:$0xff] %vm53, %v246
  %249 = vst.msk [vmem:[%s7 + $0x8] sm:$0xff] %vm53, %v247
  // Predicated region
  $region30: #{bert_mlm_forward.33} parent=0 // pred_check
    _
  $region31: #{bert_mlm_forward.33} parent=0 // pred_check_branch
    %251 = sbr.rel (0) target = $region33
  $region32: #{bert_mlm_forward.33} parent=0 // pred_region
    _
  $region33: #{bert_mlm_forward.33} parent=0 // pred_fallthru
    _
  // Predicated region
  $region34: #{bert_mlm_forward.33} parent=0 // pred_check
    _
  $region35: #{bert_mlm_forward.33} parent=0 // pred_check_branch
    %253 = sbr.rel (0) target = $region37
  $region36: #{bert_mlm_forward.33} parent=0 // pred_region
    _
  $region37: #{bert_mlm_forward.33} parent=0 // pred_fallthru
    _

// kernel: bert_mlm_forward.56
$region0: #{bert_mlm_forward.56}
  #allocation0 [shape = 'u32[]', space=smem, size = 0x4, offset = 0x4, fixed_abs, tag = 'smem constant byte address 0x4 - core index']
  #allocation1 [shape = 'u32[144,128]{1,0:T(1,128)}', space=vmem, size = 0x12000, scoped, tag = 'internal scratch']
  #allocation2 [shape = 'f32[16,128]{1,0:T(8,128)}', space=vmem, size = 0x2000, scoped, tag = 'scratch operand']
  %s0 = inlined_call_operand.vmem [shape: f32[16,32], index: 0, kind: input, shape index: {}]
  %s1 = inlined_call_operand.vmem [shape: bf16[128,32], index: 1, kind: input, shape index: {}]
  %s2 = inlined_call_operand.vmem [shape: f32[1,128], index: 2, kind: input, shape index: {}]
  %s3 = inlined_call_operand.vmem [shape: f32[16,128], index: 3, kind: output, shape index: {}]
  %s4 = sld [smem:[#allocation0]]
  $region30: #{bert_mlm_forward.56} parent=0
    _
  %s6 = ssub.s32 1, %s4
  %s7 = scalar_select 0, %s6, %s4
  // Predicated region
  $region2: #{bert_mlm_forward.56} parent=0 // pred_check
    _
  $region3: #{bert_mlm_forward.56} parent=0 // pred_check_branch
    %9 = sbr.rel (0) target = $region5
  $region4: #{bert_mlm_forward.56} parent=0 // pred_region
    _
  $region5: #{bert_mlm_forward.56} parent=0 // pred_fallthru
    _
  // Predicated region
  $region6: #{bert_mlm_forward.56} parent=0 // pred_check
    _
  $region7: #{bert_mlm_forward.56} parent=0 // pred_check_branch
    %11 = sbr.rel (0) target = $region9
  $region8: #{bert_mlm_forward.56} parent=0 // pred_region
    _
  $region9: #{bert_mlm_forward.56} parent=0 // pred_fallthru
    _
  // Predicated region
  $region10: #{bert_mlm_forward.56} parent=0 // pred_check
    _
  $region11: #{bert_mlm_forward.56} parent=0 // pred_check_branch
    %13 = sbr.rel (0) target = $region13
  $region12: #{bert_mlm_forward.56} parent=0 // pred_region
    _
  $region13: #{bert_mlm_forward.56} parent=0 // pred_fallthru
    _
  %p15 = scmp.eq.s32.totalorder 0, 0
  // Predicated region
  $region14: #{bert_mlm_forward.56} parent=0 // pred_check
    %p16 = pneg %p15
  $region15: #{bert_mlm_forward.56} parent=0 // pred_check_branch
    %18 = sbr.rel (%p16) target = $region17
  $region16: #{bert_mlm_forward.56} parent=0 // pred_region
    %19 = vst [vmem:[#allocation2] sm:$0xff] 0.0
    %20 = vst [vmem:[#allocation2 + $0x8] sm:$0xff] 0.0
  $region17: #{bert_mlm_forward.56} parent=0 // pred_fallthru
    _
  %v21 = vld [vmem:[%s0] sm:$0xff]
  %v22 = vld [vmem:[%s0 + $0x8] sm:$0xff]
  %v23 = vpack.c.bf16 %v22, %v21
  %v24 = vld [vmem:[%s1] sm:$0xf]
  %v25 = vld [vmem:[%s1 + $0x4] sm:$0xf]
  %v26 = vld [vmem:[%s1 + $0x8] sm:$0xf]
  %v27 = vld [vmem:[%s1 + $0xc] sm:$0xf]
  %v28 = vld [vmem:[%s1 + $0x10] sm:$0xf]
  %v29 = vld [vmem:[%s1 + $0x14] sm:$0xf]
  %v30 = vld [vmem:[%s1 + $0x18] sm:$0xf]
  %v31 = vld [vmem:[%s1 + $0x1c] sm:$0xf]
  %v32 = vld [vmem:[%s1 + $0x20] sm:$0xf]
  %v33 = vld [vmem:[%s1 + $0x24] sm:$0xf]
  %v34 = vld [vmem:[%s1 + $0x28] sm:$0xf]
  %v35 = vld [vmem:[%s1 + $0x2c] sm:$0xf]
  %v36 = vld [vmem:[%s1 + $0x30] sm:$0xf]
  %v37 = vld [vmem:[%s1 + $0x34] sm:$0xf]
  %v38 = vld [vmem:[%s1 + $0x38] sm:$0xf]
  %v39 = vld [vmem:[%s1 + $0x3c] sm:$0xf]
  %v40 = vld [vmem:[#allocation2] sm:$0xff]
  %v41 = vld [vmem:[#allocation2 + $0x8] sm:$0xff]
  %v58 = vunpack.c.l.b16 %v24
  %v59 = vunpack.c.l.b16 %v25
  %v60 = vunpack.c.l.b16 %v26
  %v61 = vunpack.c.l.b16 %v27
  %v62 = vunpack.c.l.b16 %v28
  %v63 = vunpack.c.l.b16 %v29
  %v64 = vunpack.c.l.b16 %v30
  %v65 = vunpack.c.l.b16 %v31
  %v66 = vunpack.c.l.b16 %v32
  %v67 = vunpack.c.l.b16 %v33
  %v68 = vunpack.c.l.b16 %v34
  %v69 = vunpack.c.l.b16 %v35
  %v70 = vunpack.c.l.b16 %v36
  %v71 = vunpack.c.l.b16 %v37
  %v72 = vunpack.c.l.b16 %v38
  %v73 = vunpack.c.l.b16 %v39
  %v74 = vpack.c.b16 %v59, %v58
  %v75 = vpack.c.b16 %v61, %v60
  %v76 = vpack.c.b16 %v63, %v62
  %v77 = vpack.c.b16 %v65, %v64
  %v78 = vpack.c.b16 %v67, %v66
  %v79 = vpack.c.b16 %v69, %v68
  %v80 = vpack.c.b16 %v71, %v70
  %v81 = vpack.c.b16 %v73, %v72
  %vm82 = vcmask 261120
  %v84 = vsel %vm82, %v23, 0
  %v87 = vsel %vm82, %v74, 0
  %v90 = vsel %vm82, %v75, 0
  %v93 = vsel %vm82, %v76, 0
  %v96 = vsel %vm82, %v77, 0
  %v99 = vsel %vm82, %v78, 0
  %v102 = vsel %vm82, %v79, 0
  %v105 = vsel %vm82, %v80, 0
  %v108 = vsel %vm82, %v81, 0
  %110 = vmatprep.subr.bf16.mxu0 0
  %111 = vmatpush1.bf16.xpose.msra.mxu0 %v87
  %112 = vmatprep.subr.bf16.mxu0 0
  %113 = vmatpush1.bf16.xpose.msra.mxu0 %v90
  %114 = vmatprep.subr.bf16.mxu0 0
  %115 = vmatpush1.bf16.xpose.msra.mxu0 %v93
  %116 = vmatprep.subr.bf16.mxu0 0
  %117 = vmatpush1.bf16.xpose.msra.mxu0 %v96
  %118 = vmatprep.subr.bf16.mxu0 0
  %119 = vmatpush1.bf16.xpose.msra.mxu0 %v99
  %120 = vmatprep.subr.bf16.mxu0 0
  %121 = vmatpush1.bf16.xpose.msra.mxu0 %v102
  %122 = vmatprep.subr.bf16.mxu0 0
  %123 = vmatpush1.bf16.xpose.msra.mxu0 %v105
  %124 = vmatprep.subr.bf16.mxu0 0
  %125 = vmatpush1.bf16.xpose.msra.mxu0 %v108
  %126 = vmatprep.subr.bf16.mxu0 0
  %127 = vmatpush1.bf16.xpose.msra.mxu0 0
  %128 = vmatprep.subr.bf16.mxu0 0
  %129 = vmatpush1.bf16.xpose.msra.mxu0 0
  %130 = vmatprep.subr.bf16.mxu0 0
  %131 = vmatpush1.bf16.xpose.msra.mxu0 0
  %132 = vmatprep.subr.bf16.mxu0 0
  %133 = vmatpush1.bf16.xpose.msra.mxu0 0
  %134 = vmatprep.subr.bf16.mxu0 0
  %135 = vmatpush1.bf16.xpose.msra.mxu0 0
  %136 = vmatprep.subr.bf16.mxu0 0
  %137 = vmatpush1.bf16.xpose.msra.mxu0 0
  %138 = vmatprep.subr.bf16.mxu0 0
  %139 = vmatpush1.bf16.xpose.msra.mxu0 0
  %140 = vmatprep.subr.bf16.mxu0 0
  %141 = vmatpush1.bf16.xpose.msra.mxu0 0
  %142 = vmatprep.mubr.bf16.mxu0 0
  %143 = vmatmul.mubr.bf16.gmra.mrb[0].mxu0 %v84
  %v144 = vpop.f32.mrb[0].mxu0
  %v145 = vadd.f32 0.0, %v144
  %v146 = vpop.f32.mrb[0].mxu0
  %v147 = vpop.f32.mrb[0].mxu0
  %v148 = vadd.f32 0.0, %v147
  %v149 = vpop.f32.mrb[0].mxu0
  %150 = vdwg.mxu0
  %v151 = vadd.f32 %v40, %v145
  %v152 = vadd.f32 %v41, %v148
  %153 = vst [vmem:[#allocation2] sm:$0xff] %v151
  %154 = vst [vmem:[#allocation2 + $0x8] sm:$0xff] %v152
  // Predicated region
  $region18: #{bert_mlm_forward.56} parent=0 // pred_check
    %p155 = pneg %p15
  $region19: #{bert_mlm_forward.56} parent=0 // pred_check_branch
    %157 = sbr.rel (%p155) target = $region21
  $region20: #{bert_mlm_forward.56} parent=0 // pred_region
    %v158 = vld [vmem:[#allocation2] sm:$0xff]
    %v159 = vld [vmem:[#allocation2 + $0x8] sm:$0xff]
    %v160 = vld [vmem:[%s2] sm:$0x1]
    %v162 = vlaneseq
    %v163 = vshrl.u32 %v162, 7
    %v164 = vsub.s32 0, %v163
    %v165 = vrot.slane %v160, %v164
    %v167 = vadd.f32 %v158, %v165
    %v168 = vadd.f32 %v159, %v165
    %169 = vst [vmem:[%s3] sm:$0xff] %v167
    %170 = vst [vmem:[%s3 + $0x8] sm:$0xff] %v168
  $region21: #{bert_mlm_forward.56} parent=0 // pred_fallthru
    _
  // Predicated region
  $region22: #{bert_mlm_forward.56} parent=0 // pred_check
    _
  $region23: #{bert_mlm_forward.56} parent=0 // pred_check_branch
    %172 = sbr.rel (0) target = $region25
  $region24: #{bert_mlm_forward.56} parent=0 // pred_region
    _
  $region25: #{bert_mlm_forward.56} parent=0 // pred_fallthru
    _
  // Predicated region
  $region26: #{bert_mlm_forward.56} parent=0 // pred_check
    _
  $region27: #{bert_mlm_forward.56} parent=0 // pred_check_branch
    %174 = sbr.rel (0) target = $region29
  $region28: #{bert_mlm_forward.56} parent=0 // pred_region
    _
  $region29: #{bert_mlm_forward.56} parent=0 // pred_fallthru
    _

// kernel: bert_mlm_forward.54
$region0: #{bert_mlm_forward.54}
  #allocation0 [shape = 'u32[]', space=smem, size = 0x4, offset = 0x4, fixed_abs, tag = 'smem constant byte address 0x4 - core index']
  #allocation1 [shape = 'u32[144,128]{1,0:T(1,128)}', space=vmem, size = 0x12000, scoped, tag = 'internal scratch']
  #allocation2 [shape = 'f32[16,32]{1,0:T(8,128)}', space=vmem, size = 0x2000, scoped, tag = 'scratch operand']
  %s0 = inlined_call_operand.vmem [shape: f32[16,32], index: 0, kind: input, shape index: {}]
  %s1 = inlined_call_operand.vmem [shape: bf16[32,32], index: 1, kind: input, shape index: {}]
  %s2 = inlined_call_operand.vmem [shape: f32[1,32], index: 2, kind: input, shape index: {}]
  %s3 = inlined_call_operand.vmem [shape: f32[16,32], index: 3, kind: output, shape index: {}]
  %s4 = sld [smem:[#allocation0]]
  $region30: #{bert_mlm_forward.54} parent=0
    _
  %s6 = ssub.s32 1, %s4
  %s7 = scalar_select 0, %s6, %s4
  // Predicated region
  $region2: #{bert_mlm_forward.54} parent=0 // pred_check
    _
  $region3: #{bert_mlm_forward.54} parent=0 // pred_check_branch
    %9 = sbr.rel (0) target = $region5
  $region4: #{bert_mlm_forward.54} parent=0 // pred_region
    _
  $region5: #{bert_mlm_forward.54} parent=0 // pred_fallthru
    _
  // Predicated region
  $region6: #{bert_mlm_forward.54} parent=0 // pred_check
    _
  $region7: #{bert_mlm_forward.54} parent=0 // pred_check_branch
    %11 = sbr.rel (0) target = $region9
  $region8: #{bert_mlm_forward.54} parent=0 // pred_region
    _
  $region9: #{bert_mlm_forward.54} parent=0 // pred_fallthru
    _
  // Predicated region
  $region10: #{bert_mlm_forward.54} parent=0 // pred_check
    _
  $region11: #{bert_mlm_forward.54} parent=0 // pred_check_branch
    %13 = sbr.rel (0) target = $region13
  $region12: #{bert_mlm_forward.54} parent=0 // pred_region
    _
  $region13: #{bert_mlm_forward.54} parent=0 // pred_fallthru
    _
  %p15 = scmp.eq.s32.totalorder 0, 0
  // Predicated region
  $region14: #{bert_mlm_forward.54} parent=0 // pred_check
    %p16 = pneg %p15
  $region15: #{bert_mlm_forward.54} parent=0 // pred_check_branch
    %18 = sbr.rel (%p16) target = $region17
  $region16: #{bert_mlm_forward.54} parent=0 // pred_region
    %vm19 = vcmask 261120
    %20 = vst.msk [vmem:[#allocation2] sm:$0xff] %vm19, 0.0
    %21 = vst.msk [vmem:[#allocation2 + $0x8] sm:$0xff] %vm19, 0.0
  $region17: #{bert_mlm_forward.54} parent=0 // pred_fallthru
    _
  %v22 = vld [vmem:[%s0] sm:$0xff]
  %v23 = vld [vmem:[%s0 + $0x8] sm:$0xff]
  %v24 = vpack.c.bf16 %v23, %v22
  %v25 = vld [vmem:[%s1] sm:$0xf]
  %v26 = vld [vmem:[%s1 + $0x4] sm:$0xf]
  %v27 = vld [vmem:[%s1 + $0x8] sm:$0xf]
  %v28 = vld [vmem:[%s1 + $0xc] sm:$0xf]
  %v29 = vld [vmem:[#allocation2] sm:$0xff]
  %v30 = vld [vmem:[#allocation2 + $0x8] sm:$0xff]
  %v35 = vunpack.c.l.b16 %v25
  %v36 = vunpack.c.l.b16 %v26
  %v37 = vunpack.c.l.b16 %v27
  %v38 = vunpack.c.l.b16 %v28
  %v39 = vpack.c.b16 %v36, %v35
  %v40 = vpack.c.b16 %v38, %v37
  %vm43 = vcmask 261120
  %v45 = vsel %vm43, %v24, 0
  %47 = vmatprep.subr.bf16.mxu0 0
  %48 = vmatpush1.bf16.msra.mxu0 %v39
  %49 = vmatprep.subr.bf16.mxu0 0
  %50 = vmatpush1.bf16.msra.mxu0 %v40
  %51 = vmatprep.subr.bf16.mxu0 0
  %52 = vmatpush1.bf16.msra.mxu0 0
  %53 = vmatprep.subr.bf16.mxu0 0
  %54 = vmatpush1.bf16.msra.mxu0 0
  %55 = vmatprep.subr.bf16.mxu0 0
  %56 = vmatpush1.bf16.msra.mxu0 0
  %57 = vmatprep.subr.bf16.mxu0 0
  %58 = vmatpush1.bf16.msra.mxu0 0
  %59 = vmatprep.subr.bf16.mxu0 0
  %60 = vmatpush1.bf16.msra.mxu0 0
  %61 = vmatprep.subr.bf16.mxu0 0
  %62 = vmatpush1.bf16.msra.mxu0 0
  %63 = vmatprep.subr.bf16.mxu0 0
  %64 = vmatpush1.bf16.msra.mxu0 0
  %65 = vmatprep.subr.bf16.mxu0 0
  %66 = vmatpush1.bf16.msra.mxu0 0
  %67 = vmatprep.subr.bf16.mxu0 0
  %68 = vmatpush1.bf16.msra.mxu0 0
  %69 = vmatprep.subr.bf16.mxu0 0
  %70 = vmatpush1.bf16.msra.mxu0 0
  %71 = vmatprep.subr.bf16.mxu0 0
  %72 = vmatpush1.bf16.msra.mxu0 0
  %73 = vmatprep.subr.bf16.mxu0 0
  %74 = vmatpush1.bf16.msra.mxu0 0
  %75 = vmatprep.subr.bf16.mxu0 0
  %76 = vmatpush1.bf16.msra.mxu0 0
  %77 = vmatprep.subr.bf16.mxu0 0
  %78 = vmatpush1.bf16.msra.mxu0 0
  %79 = vmatprep.mubr.bf16.mxu0 0
  %80 = vmatmul.mubr.bf16.gmra.mrb[0].mxu0 %v45
  %v81 = vpop.f32.mrb[0].mxu0
  %v82 = vadd.f32 0.0, %v81
  %v83 = vpop.f32.mrb[0].mxu0
  %v84 = vpop.f32.mrb[0].mxu0
  %v85 = vadd.f32 0.0, %v84
  %v86 = vpop.f32.mrb[0].mxu0
  %87 = vdwg.mxu0
  %v88 = vadd.f32 %v29, %v82
  %v89 = vadd.f32 %v30, %v85
  %90 = vst.msk [vmem:[#allocation2] sm:$0xff] %vm43, %v88
  %91 = vst.msk [vmem:[#allocation2 + $0x8] sm:$0xff] %vm43, %v89
  // Predicated region
  $region18: #{bert_mlm_forward.54} parent=0 // pred_check
    %p92 = pneg %p15
  $region19: #{bert_mlm_forward.54} parent=0 // pred_check_branch
    %94 = sbr.rel (%p92) target = $region21
  $region20: #{bert_mlm_forward.54} parent=0 // pred_region
    %v95 = vld [vmem:[#allocation2] sm:$0xff]
    %v96 = vld [vmem:[#allocation2 + $0x8] sm:$0xff]
    %v97 = vld [vmem:[%s2] sm:$0x1]
    %v99 = vlaneseq
    %v100 = vshrl.u32 %v99, 7
    %v101 = vsub.s32 0, %v100
    %v102 = vrot.slane %v97, %v101
    %v104 = vadd.f32 %v95, %v102
    %v105 = vadd.f32 %v96, %v102
    %v106 = vmul.f32 %v104, %v104
    %v107 = vmul.f32 %v105, %v105
    %v108 = vmul.f32 %v104, %v106
    %v109 = vmul.f32 %v105, %v107
    %v110 = vmul.f32 %v108, 0.044715
    %v111 = vmul.f32 %v109, 0.044715
    %v112 = vadd.f32 %v104, %v110
    %v113 = vadd.f32 %v105, %v111
    %v114 = vmul.f32 %v112, 0.7978846
    %v115 = vmul.f32 %v113, 0.7978846
    %v116 = vtanh.pop %v114
    %v117 = vtanh.pop %v115
    %v118 = vadd.f32 %v116, 1.0
    %v119 = vadd.f32 %v117, 1.0
    %v120 = vmul.f32 %v118, 0.5
    %v121 = vmul.f32 %v119, 0.5
    %v122 = vmul.f32 %v104, %v120
    %v123 = vmul.f32 %v105, %v121
    %124 = vst.msk [vmem:[%s3] sm:$0xff] %vm43, %v122
    %125 = vst.msk [vmem:[%s3 + $0x8] sm:$0xff] %vm43, %v123
  $region21: #{bert_mlm_forward.54} parent=0 // pred_fallthru
    _
  // Predicated region
  $region22: #{bert_mlm_forward.54} parent=0 // pred_check
    _
  $region23: #{bert_mlm_forward.54} parent=0 // pred_check_branch
    %127 = sbr.rel (0) target = $region25
  $region24: #{bert_mlm_forward.54} parent=0 // pred_region
    _
  $region25: #{bert_mlm_forward.54} parent=0 // pred_fallthru
    _
  // Predicated region
  $region26: #{bert_mlm_forward.54} parent=0 // pred_check
    _
  $region27: #{bert_mlm_forward.54} parent=0 // pred_check_branch
    %129 = sbr.rel (0) target = $region29
  $region28: #{bert_mlm_forward.54} parent=0 // pred_region
    _
  $region29: #{bert_mlm_forward.54} parent=0 // pred_fallthru
    _

// kernel: bert_mlm_forward.57
$region0: #{bert_mlm_forward.57}
  #allocation0 [shape = 'u32[]', space=smem, size = 0x4, offset = 0x4, fixed_abs, tag = 'smem constant byte address 0x4 - core index']
  #allocation1 [shape = 'u32[144,128]{1,0:T(1,128)}', space=vmem, size = 0x12000, scoped, tag = 'internal scratch']
  #allocation2 [shape = 'f32[1,1]{1,0:T(1,128)}', space=vmem, size = 0x200, scoped, tag = 'scratch operand']
  #allocation3 [shape = 'f32[1,1]{1,0:T(1,128)}', space=vmem, size = 0x200, scoped, tag = 'scratch operand']
  %s0 = inlined_call_operand.vmem [shape: f32[16,128], index: 0, kind: input, shape index: {}]
  %s1 = inlined_call_operand.vmem [shape: s32[16,1], index: 1, kind: input, shape index: {}]
  %s2 = inlined_call_operand.hbm [shape: f32[1,1], index: 2, kind: output, shape index: {}]
  %s3 = sld [smem:[#allocation0]]
  $region26: #{bert_mlm_forward.57} parent=0
    _
  %s5 = ssub.s32 1, %s3
  %s6 = scalar_select 0, %s5, %s3
  $region1: #{bert_mlm_forward.57} parent=0
    #allocation4 [shape = 'u8[512]{0}', space=vmem, size = 0x400, scoped, tag = 'output window, operand 0, single buffered']
    #allocation5 [shape = 's32[1]{0}', space=sflag, size = 0x4, scoped, tag = 'scoped memory for bert_mlm_forward.57']
    %7 = vsyncpa [#allocation5], 0
    // Predicated region
    $region2: #{bert_mlm_forward.57} parent=1 // pred_check
      _
    $region3: #{bert_mlm_forward.57} parent=1 // pred_check_branch
      %9 = sbr.rel (0) target = $region5
    $region4: #{bert_mlm_forward.57} parent=1 // pred_region
      _
    $region5: #{bert_mlm_forward.57} parent=1 // pred_fallthru
      _
    // Predicated region
    $region6: #{bert_mlm_forward.57} parent=1 // pred_check
      _
    $region7: #{bert_mlm_forward.57} parent=1 // pred_check_branch
      %11 = sbr.rel (0) target = $region9
    $region8: #{bert_mlm_forward.57} parent=1 // pred_region
      _
    $region9: #{bert_mlm_forward.57} parent=1 // pred_fallthru
      _
    %p12 = scmp.eq.s32.totalorder 0, 0
    // Predicated region
    $region10: #{bert_mlm_forward.57} parent=1 // pred_check
      %p13 = pneg %p12
    $region11: #{bert_mlm_forward.57} parent=1 // pred_check_branch
      %15 = sbr.rel (%p13) target = $region13
    $region12: #{bert_mlm_forward.57} parent=1 // pred_region
      %vm16 = vcmask 0
      %17 = vst.msk [vmem:[#allocation2] sm:$0x1] %vm16, 0.0
      %18 = vst.msk [vmem:[#allocation3] sm:$0x1] %vm16, 0.0
    $region13: #{bert_mlm_forward.57} parent=1 // pred_fallthru
      _
    %v19 = vld [vmem:[%s0] sm:$0xff]
    %v20 = vld [vmem:[%s0 + $0x8] sm:$0xff]
    %v21 = vld [vmem:[%s1] sm:$0xff]
    %v22 = vld [vmem:[%s1 + $0x8] sm:$0xff]
    %23 = vmax.xlane.f32.xlu0 %v19
    %v24 = vpop.xlane.xlu0 %23
    %25 = vmax.xlane.f32.xlu0 %v20
    %v26 = vpop.xlane.xlu0 %25
    %v27 = vsub.f32 %v19, %v24
    %v28 = vsub.f32 %v20, %v26
    %v29 = vmul.f32 %v27, 1.442695
    %v30 = vpow.pop %v29
    %v31 = vmul.f32 %v28, 1.442695
    %v32 = vpow.pop %v31
    %33 = vadd.xlane.f32.xlu0 %v30
    %v34 = vpop.xlane.xlu0 %33
    %35 = vadd.xlane.f32.xlu0 %v32
    %v36 = vpop.xlane.xlu0 %35
    %v37 = vlog2.pop %v34
    %v38 = vmul.f32 %v37, 0.6931472
    %v39 = vlog2.pop %v36
    %v40 = vmul.f32 %v39, 0.6931472
    %v41 = vadd.f32 %v38, %v24
    %v42 = vadd.f32 %v40, %v26
    %v43 = vlaneseq
    %v44 = vand.u32 %v43, 127
    %45 = vset.pattern.permute.xlu0 0
    %46 = vperm.xlu0 %45, %v21
    %v47 = vpop.permute.xlu0 %46
    %48 = vset.pattern.permute.xlu0 0
    %49 = vperm.xlu0 %48, %v22
    %v50 = vpop.permute.xlu0 %49
    %vm51 = vcmp.eq.s32.totalorder %v44, %v47
    %vm52 = vcmp.eq.s32.totalorder %v44, %v50
    %v53 = vsel %vm51, %v19, 0.0
    %v54 = vsel %vm52, %v20, 0.0
    %55 = vadd.xlane.f32.xlu0 %v53
    %v56 = vpop.xlane.xlu0 %55
    %57 = vadd.xlane.f32.xlu0 %v54
    %v58 = vpop.xlane.xlu0 %57
    %vm59 = vcmp.ge.s32.totalorder %v21, 0
    %vm60 = vcmp.ge.s32.totalorder %v22, 0
    %v61 = vsel %vm59, 1, 0
    %v62 = vsel %vm60, 1, 0
    %v63 = vcvt.s32.f32 %v61
    %v64 = vcvt.s32.f32 %v62
    %v65 = vld [vmem:[#allocation2] sm:$0x1]
    %v66 = vsub.f32 %v41, %v56
    %v67 = vsub.f32 %v42, %v58
    %v68 = vmul.f32 %v66, %v63
    %v69 = vmul.f32 %v67, %v64
    %vm70 = vcmask 7168
    %v71 = vsel %vm70, %v68, 0.0
    %v72 = vsel %vm70, %v69, 0.0
    %v73 = vadd.f32 %v71, %v72
    %74 = vadd.xlane.f32.xlu0 %v73
    %v75 = vpop.xlane.xlu0 %74
    %v76 = vrot.slane %v75, 4
    %v77 = vadd.f32 %v75, %v76
    %v78 = vrot.slane %v77, 2
    %v79 = vadd.f32 %v77, %v78
    %v80 = vrot.slane %v79, 1
    %v81 = vadd.f32 %v79, %v80
    %s82 = vtos %v81
    %v83 = vstv %s82
    %v84 = vadd.f32 %v65, %v83
    %vm85 = vcmask 0
    %86 = vst.msk [vmem:[#allocation2] sm:$0x1] %vm85, %v84
    %v87 = vld [vmem:[#allocation3] sm:$0x1]
    %v88 = vsel %vm70, %v63, 0.0
    %v89 = vsel %vm70, %v64, 0.0
    %v90 = vadd.f32 %v88, %v89
    %91 = vadd.xlane.f32.xlu0 %v90
    %v92 = vpop.xlane.xlu0 %91
    %v93 = vrot.slane %v92, 4
    %v94 = vadd.f32 %v92, %v93
    %v95 = vrot.slane %v94, 2
    %v96 = vadd.f32 %v94, %v95
    %v97 = vrot.slane %v96, 1
    %v98 = vadd.f32 %v96, %v97
    %s99 = vtos %v98
    %v100 = vstv %s99
    %v101 = vadd.f32 %v87, %v100
    %102 = vst.msk [vmem:[#allocation3] sm:$0x1] %vm85, %v101
    // Predicated region
    $region14: #{bert_mlm_forward.57} parent=1 // pred_check
      %p103 = pneg %p12
    $region15: #{bert_mlm_forward.57} parent=1 // pred_check_branch
      %105 = sbr.rel (%p103) target = $region17
    $region16: #{bert_mlm_forward.57} parent=1 // pred_region
      %v106 = vld [vmem:[#allocation2] sm:$0x1]
      %v107 = vld [vmem:[#allocation3] sm:$0x1]
      %v108 = vmax.f32 %v107, 1.0
      %v109 = vrcp.pop %v108
      %v110 = vmul.f32 %v106, %v109
      %111 = vst.msk [vmem:[#allocation4] sm:$0x1] %vm85, %v110
    $region17: #{bert_mlm_forward.57} parent=1 // pred_fallthru
      _
    // Predicated region
    $region18: #{bert_mlm_forward.57} parent=1 // pred_check
      _
    $region19: #{bert_mlm_forward.57} parent=1 // pred_check_branch
      %113 = sbr.rel (0) target = $region21
    $region20: #{bert_mlm_forward.57} parent=1 // pred_region
      %s115 = ssub.s32 16, 16
      %116 = vsyncadd [#allocation5], %s115
      %s118 = sshll.u32 [#allocation4], 4
      %s119 = int_to_ptr.vmem [resolvable:$true] %s118
      %121 = dma.vmem_to_hbm [thread:$0]  %s119, 16, %s2, [#allocation5]
    $region21: #{bert_mlm_forward.57} parent=1 // pred_fallthru
      _
    // Predicated region
    $region22: #{bert_mlm_forward.57} parent=1 // pred_check
      _
    $region23: #{bert_mlm_forward.57} parent=1 // pred_check_branch
      %123 = sbr.rel (0) target = $region25
    $region24: #{bert_mlm_forward.57} parent=1 // pred_region
      %124 = dma.done [#allocation5], 16
    $region25: #{bert_mlm_forward.57} parent=1 // pred_fallthru
      _
    %125 = vsyncpa [#allocation5], 1

</llo_original>
